<compile_context>
chip_gen: v6e
topology: v6e:2x2x1
jax: 0.10.0
libtpu: 0.0.40
codegen_flags: <defaults>
</compile_context>

<pallas_src>
import functools
import math

import jax
import jax.numpy as jnp
from jax.experimental import pallas as pl
from jax.experimental.pallas import tpu as pltpu

F32 = jnp.float32
BF16 = jnp.bfloat16
BN_EPS = 1e-5
_BN_SCALE = 1.0 / math.sqrt(1.0 + BN_EPS)  # inference-mode BN fold (gamma=1, beta=0)


# ----------------------------------------------------------------------------
# utilities from the PyTorch reference
# ----------------------------------------------------------------------------
def _make_divisible(v, divisor, min_value=None):
    if min_value is None:
        min_value = divisor
    new_v = max(min_value, int(v + divisor / 2) // divisor * divisor)
    if new_v < 0.9 * v:
        new_v += divisor
    return new_v


def _silu(x):
    return x * (1.0 / (1.0 + jnp.exp(-x)))


def _sigmoid(x):
    return 1.0 / (1.0 + jnp.exp(-x))


# ----------------------------------------------------------------------------
# fused MBConv kernel (use_se = True): expand 1x1 -> dw3x3 -> SE -> project 1x1
# ----------------------------------------------------------------------------
def _mbconv_se_kernel(x_ref, wexp_ref, wdw_ref, wfc1_ref, bfc1_ref,
                      wfc2_ref, bfc2_ref, wproj_ref, o_ref, pad_ref,
                      *, stride, identity):
    _, H, W, Cin = x_ref.shape
    _, Ho, Wo, Cout = o_ref.shape
    hidden = wdw_ref.shape[1]

    x = x_ref[0].astype(F32)                                  # (H, W, Cin)
    a = x.reshape(H * W, Cin)

    # 1x1 expand (+folded BN) + SiLU  -- MXU, bf16 in / f32 accumulate
    h = jnp.dot(a.astype(BF16), wexp_ref[...],
                preferred_element_type=F32)                   # (H*W, hidden)
    h = _silu(h)

    # zero-halo copy of the expanded activations for the 3x3 depthwise conv
    pad_ref[...] = jnp.zeros_like(pad_ref)
    pad_ref[1:H + 1, 1:W + 1, :] = h.reshape(H, W, hidden)

    # depthwise 3x3 (+folded BN) + SiLU : 9 tap-weighted VPU adds
    wdw = wdw_ref[...]                                        # (9, hidden)
    acc = jnp.zeros((Ho, Wo, hidden), F32)
    for di in range(3):
        for dj in range(3):
            if stride == 1:
                tap = pad_ref[di:di + Ho, dj:dj + Wo, :]
            else:
                tap = pad_ref[pl.ds(di, Ho, stride), pl.ds(dj, Wo, stride), :]
            acc = acc + tap * wdw[3 * di + dj][None, None, :]
    hdw = _silu(acc).reshape(Ho * Wo, hidden)

    # SE: global average pool + fc1/SiLU + fc2/sigmoid + excite (all in VMEM)
    pooled = jnp.mean(hdw, axis=0, keepdims=True)             # (1, hidden)
    se = _silu(jnp.dot(pooled, wfc1_ref[...],
                       preferred_element_type=F32) + bfc1_ref[...])
    gate = _sigmoid(jnp.dot(se, wfc2_ref[...],
                            preferred_element_type=F32) + bfc2_ref[...])
    hdw = hdw * gate                                          # broadcast over rows

    # 1x1 project (+folded BN), optional residual
    out = jnp.dot(hdw.astype(BF16), wproj_ref[...],
                  preferred_element_type=F32)                 # (Ho*Wo, Cout)
    if identity:
        out = out + a
    o_ref[0] = out.reshape(Ho, Wo, Cout).astype(o_ref.dtype)


@functools.lru_cache(maxsize=None)
def _build_mbconv_se(B, H, W, Cin, hidden, red, Cout, stride, identity):
    Ho = (H + 2 - 3) // stride + 1
    Wo = (W + 2 - 3) // stride + 1
    kern = functools.partial(_mbconv_se_kernel, stride=stride, identity=identity)
    call = pl.pallas_call(
        kern,
        grid=(B,),
        in_specs=[
            pl.BlockSpec((1, H, W, Cin), lambda b: (b, 0, 0, 0)),
            pl.BlockSpec((Cin, hidden), lambda b: (0, 0)),
            pl.BlockSpec((9, hidden), lambda b: (0, 0)),
            pl.BlockSpec((hidden, red), lambda b: (0, 0)),
            pl.BlockSpec((1, red), lambda b: (0, 0)),
            pl.BlockSpec((red, hidden), lambda b: (0, 0)),
            pl.BlockSpec((1, hidden), lambda b: (0, 0)),
            pl.BlockSpec((hidden, Cout), lambda b: (0, 0)),
        ],
        out_specs=pl.BlockSpec((1, Ho, Wo, Cout), lambda b: (b, 0, 0, 0)),
        out_shape=jax.ShapeDtypeStruct((B, Ho, Wo, Cout), F32),
        scratch_shapes=[pltpu.VMEM((H + 2, W + 2, hidden), F32)],
        compiler_params=pltpu.CompilerParams(
            dimension_semantics=("parallel",)),
    )
    return jax.jit(call)


# ----------------------------------------------------------------------------
# fused MBConv kernel (use_se = False): full 3x3 conv -> project 1x1
# ----------------------------------------------------------------------------
def _mbconv_plain_kernel(x_ref, wexp_ref, wproj_ref, o_ref, pad_ref,
                         *, stride, identity):
    _, H, W, Cin = x_ref.shape
    _, Ho, Wo, Cout = o_ref.shape
    hidden = wproj_ref.shape[0]

    x = x_ref[0].astype(F32)                                  # (H, W, Cin)
    pad_ref[...] = jnp.zeros_like(pad_ref)
    pad_ref[1:H + 1, 1:W + 1, :] = x

    # fused 3x3 conv (+folded BN) + SiLU : 9 accumulated MXU matmuls,
    # no HBM im2col -- taps are read straight from the VMEM halo scratch.
    acc = jnp.zeros((Ho * Wo, hidden), F32)
    for di in range(3):
        for dj in range(3):
            if stride == 1:
                tap = pad_ref[di:di + Ho, dj:dj + Wo, :]
            else:
                tap = pad_ref[pl.ds(di, Ho, stride), pl.ds(dj, Wo, stride), :]
            acc = acc + jnp.dot(tap.reshape(Ho * Wo, Cin).astype(BF16),
                                wexp_ref[3 * di + dj],
                                preferred_element_type=F32)
    h = _silu(acc)

    out = jnp.dot(h.astype(BF16), wproj_ref[...],
                  preferred_element_type=F32)                 # (Ho*Wo, Cout)
    if identity:
        out = out + x.reshape(H * W, Cin)
    o_ref[0] = out.reshape(Ho, Wo, Cout).astype(o_ref.dtype)


@functools.lru_cache(maxsize=None)
def _build_mbconv_plain(B, H, W, Cin, hidden, Cout, stride, identity):
    Ho = (H + 2 - 3) // stride + 1
    Wo = (W + 2 - 3) // stride + 1
    kern = functools.partial(_mbconv_plain_kernel, stride=stride, identity=identity)
    call = pl.pallas_call(
        kern,
        grid=(B,),
        in_specs=[
            pl.BlockSpec((1, H, W, Cin), lambda b: (b, 0, 0, 0)),
            pl.BlockSpec((9, Cin, hidden), lambda b: (0, 0, 0)),
            pl.BlockSpec((hidden, Cout), lambda b: (0, 0)),
        ],
        out_specs=pl.BlockSpec((1, Ho, Wo, Cout), lambda b: (b, 0, 0, 0)),
        out_shape=jax.ShapeDtypeStruct((B, Ho, Wo, Cout), F32),
        scratch_shapes=[pltpu.VMEM((H + 2, W + 2, Cin), F32)],
        compiler_params=pltpu.CompilerParams(
            dimension_semantics=("parallel",)),
    )
    return jax.jit(call)


# ----------------------------------------------------------------------------
# parameter construction (deterministic, BN folded in inference mode)
# ----------------------------------------------------------------------------
def make_mbconv_params(key, inp, oup, stride, expand_ratio, use_se):
    assert stride in (1, 2)
    hidden = int(round(inp * expand_ratio))
    p = {"inp": inp, "oup": oup, "stride": stride, "use_se": bool(use_se),
         "hidden": hidden, "identity": (stride == 1 and inp == oup)}
    keys = jax.random.split(key, 8)
    if use_se:
        red = _make_divisible(inp // 4, 8)
        p["red"] = red
        p["w_exp"] = (jax.random.normal(keys[0], (inp, hidden), F32)
                      * math.sqrt(2.0 / hidden) * _BN_SCALE)
        p["w_dw"] = (jax.random.normal(keys[1], (9, hidden), F32)
                     * math.sqrt(2.0 / 9.0) * _BN_SCALE)
        p["w_fc1"] = jax.random.normal(keys[2], (hidden, red), F32) / math.sqrt(hidden)
        p["b_fc1"] = jax.random.normal(keys[3], (1, red), F32) * 0.01
        p["w_fc2"] = jax.random.normal(keys[4], (red, hidden), F32) / math.sqrt(red)
        p["b_fc2"] = jax.random.normal(keys[5], (1, hidden), F32) * 0.01
        p["w_proj"] = (jax.random.normal(keys[6], (hidden, oup), F32)
                       * math.sqrt(2.0 / oup) * _BN_SCALE)
    else:
        p["w_exp"] = (jax.random.normal(keys[0], (9, inp, hidden), F32)
                      * math.sqrt(2.0 / (9.0 * hidden)) * _BN_SCALE)
        p["w_proj"] = (jax.random.normal(keys[6], (hidden, oup), F32)
                       * math.sqrt(2.0 / oup) * _BN_SCALE)
    # bf16 copies for the MXU (f32 originals kept for the reference check)
    p["w_exp_bf16"] = p["w_exp"].astype(BF16)
    p["w_proj_bf16"] = p["w_proj"].astype(BF16)
    return p


# ----------------------------------------------------------------------------
# forward pass (NCHW boundary, NHWC inside -- channels on the lane axis)
# ----------------------------------------------------------------------------
def mbconv_forward(x_nchw, p):
    x = jnp.transpose(x_nchw, (0, 2, 3, 1)).astype(F32)      # NCHW -> NHWC
    B, H, W, Cin = x.shape
    stride, identity = p["stride"], p["identity"]
    if p["use_se"]:
        fn = _build_mbconv_se(B, H, W, Cin, p["hidden"], p["red"], p["oup"],
                              stride, identity)
        y = fn(x, p["w_exp_bf16"], p["w_dw"],
               p["w_fc1"], p["b_fc1"], p["w_fc2"], p["b_fc2"],
               p["w_proj_bf16"])
    else:
        fn = _build_mbconv_plain(B, H, W, Cin, p["hidden"], p["oup"],
                                 stride, identity)
        y = fn(x, p["w_exp_bf16"], p["w_proj_bf16"])
    return jnp.transpose(y, (0, 3, 1, 2))                    # NHWC -> NCHW


# ----------------------------------------------------------------------------
# pure-JAX reference (f32) for a correctness check
# ----------------------------------------------------------------------------
def ref_mbconv(x_nchw, p):
    x = jnp.transpose(x_nchw, (0, 2, 3, 1)).astype(F32)
    s = p["stride"]
    if p["use_se"]:
        h = _silu(jnp.einsum("bhwc,cd->bhwd", x, p["w_exp"]))
        wdw = p["w_dw"].reshape(3, 3, 1, p["hidden"])
        h = jax.lax.conv_general_dilated(
            h, wdw, window_strides=(s, s), padding=((1, 1), (1, 1)),
            dimension_numbers=("NHWC", "HWIO", "NHWC"),
            feature_group_count=p["hidden"])
        h = _silu(h)
        y = jnp.mean(h, axis=(1, 2))
        y = _silu(y @ p["w_fc1"] + p["b_fc1"])
        y = _sigmoid(y @ p["w_fc2"] + p["b_fc2"])
        h = h * y[:, None, None, :]
        out = jnp.einsum("bhwc,cd->bhwd", h, p["w_proj"])
    else:
        wexp = p["w_exp"].reshape(3, 3, p["inp"], p["hidden"])
        h = jax.lax.conv_general_dilated(
            x, wexp, window_strides=(s, s), padding=((1, 1), (1, 1)),
            dimension_numbers=("NHWC", "HWIO", "NHWC"))
        h = _silu(h)
        out = jnp.einsum("bhwc,cd->bhwd", h, p["w_proj"])
    if p["identity"]:
        out = out + x
    return jnp.transpose(out, (0, 3, 1, 2))


# ----------------------------------------------------------------------------
if __name__ == "__main__":
    # TODO(synk): BatchNorm2d training-mode batch statistics are not modeled;
    # BN is folded in inference mode (gamma=1, beta=0, mean=0, var=1).
    key = jax.random.PRNGKey(0)
    k_x, k_p1, k_p2 = jax.random.split(key, 3)

    B, H, W = 2, 16, 16
    x = jax.random.normal(k_x, (B, 64, H, W), dtype=F32)     # NCHW input

    # MBConv with SE (stride 1, identity path): 64 -> hidden 256 -> 64
    p_se = make_mbconv_params(k_p1, inp=64, oup=64, stride=1,
                              expand_ratio=4, use_se=1)
    y_se = mbconv_forward(x, p_se)
    r_se = ref_mbconv(x, p_se)

    # MBConv without SE (stride 2, no identity): 64 -> hidden 256 -> 128
    p_pl = make_mbconv_params(k_p2, inp=64, oup=128, stride=2,
                              expand_ratio=4, use_se=0)
    y_pl = mbconv_forward(x, p_pl)
    r_pl = ref_mbconv(x, p_pl)

    jax.block_until_ready((y_se, y_pl))

    assert y_se.shape == (B, 64, H, W), y_se.shape
    assert y_pl.shape == (B, 128, H // 2, W // 2), y_pl.shape
    for y, r in ((y_se, r_se), (y_pl, r_pl)):
        assert bool(jnp.all(jnp.isfinite(y)))
        err = float(jnp.max(jnp.abs(y - r)) / (jnp.max(jnp.abs(r)) + 1e-6))
        assert err < 5e-2, f"mismatch vs reference: {err}"
    print("KERNEL_OK")
</pallas_src>

<mosaic_0001>
module attributes {stable_mosaic.version = 11 : i64} {
  func.func @_mbconv_se_kernel(%arg0: i32, %arg1: memref<1x16x16x64xf32, #tpu.memory_space<vmem>>, %arg2: memref<64x256xbf16, #tpu.memory_space<vmem>>, %arg3: memref<9x256xf32, #tpu.memory_space<vmem>>, %arg4: memref<256x16xf32, #tpu.memory_space<vmem>>, %arg5: memref<1x16xf32, #tpu.memory_space<vmem>>, %arg6: memref<16x256xf32, #tpu.memory_space<vmem>>, %arg7: memref<1x256xf32, #tpu.memory_space<vmem>>, %arg8: memref<256x64xbf16, #tpu.memory_space<vmem>>, %arg9: memref<1x16x16x64xf32, #tpu.memory_space<vmem>>, %arg10: memref<18x18x256xf32, #tpu.memory_space<vmem>>) attributes {dimension_semantics = [#tpu.dimension_semantics<parallel>], iteration_bounds = array<i64: 2>, scalar_prefetch = 0 : i64, scratch_operands = 1 : i64, tpu.core_type = #tpu.core_type<tc>, window_params = [{transform_indices = @transform_0, window_bounds = array<i64: 1, 16, 16, 64>}, {pipeline_mode = #tpu.pipeline_mode<synchronous>, transform_indices = @transform_1, window_bounds = array<i64: 64, 256>}, {pipeline_mode = #tpu.pipeline_mode<synchronous>, transform_indices = @transform_2, window_bounds = array<i64: 9, 256>}, {pipeline_mode = #tpu.pipeline_mode<synchronous>, transform_indices = @transform_3, window_bounds = array<i64: 256, 16>}, {pipeline_mode = #tpu.pipeline_mode<synchronous>, transform_indices = @transform_4, window_bounds = array<i64: 1, 16>}, {pipeline_mode = #tpu.pipeline_mode<synchronous>, transform_indices = @transform_5, window_bounds = array<i64: 16, 256>}, {pipeline_mode = #tpu.pipeline_mode<synchronous>, transform_indices = @transform_6, window_bounds = array<i64: 1, 256>}, {pipeline_mode = #tpu.pipeline_mode<synchronous>, transform_indices = @transform_7, window_bounds = array<i64: 256, 64>}, {transform_indices = @transform_8, window_bounds = array<i64: 1, 16, 16, 64>}]} {
    %c0 = arith.constant 0 : index
    %c0_0 = arith.constant 0 : index
    %c0_1 = arith.constant 0 : index
    %c0_2 = arith.constant 0 : index
    %0 = vector.load %arg1[%c0, %c0_0, %c0_1, %c0_2] : memref<1x16x16x64xf32, #tpu.memory_space<vmem>>, vector<1x16x16x64xf32>
    %1 = vector.shape_cast %0 : vector<1x16x16x64xf32> to vector<16x16x64xf32>
    %2 = vector.shape_cast %1 : vector<16x16x64xf32> to vector<256x64xf32>
    %3 = arith.truncf %2 : vector<256x64xf32> to vector<256x64xbf16>
    %c0_3 = arith.constant 0 : index
    %c0_4 = arith.constant 0 : index
    %4 = vector.load %arg2[%c0_3, %c0_4] : memref<64x256xbf16, #tpu.memory_space<vmem>>, vector<64x256xbf16>
    %cst = arith.constant dense<0.000000e+00> : vector<256x256xf32>
    %5 = tpu.matmul %3, %4, %cst {dimension_numbers = #tpu.dot_dimension_numbers<[1], [0], [0], [1], [0, 0, 1, 1], [], []>} : vector<256x64xbf16>, vector<64x256xbf16>, vector<256x256xf32> -> vector<256x256xf32>
    %cst_5 = arith.constant 0.000000e+00 : f32
    %6 = vector.broadcast %cst_5 : f32 to vector<256x256xf32>
    %7 = arith.subf %6, %5 : vector<256x256xf32>
    %8 = math.exp %7 : vector<256x256xf32>
    %cst_6 = arith.constant 1.000000e+00 : f32
    %9 = vector.broadcast %cst_6 : f32 to vector<256x256xf32>
    %10 = arith.addf %9, %8 : vector<256x256xf32>
    %cst_7 = arith.constant 1.000000e+00 : f32
    %11 = vector.broadcast %cst_7 : f32 to vector<256x256xf32>
    %12 = arith.divf %11, %10 : vector<256x256xf32>
    %13 = arith.mulf %5, %12 : vector<256x256xf32>
    %cst_8 = arith.constant 0.000000e+00 : f32
    %14 = vector.broadcast %cst_8 : f32 to vector<18x18x256xf32>
    %c0_9 = arith.constant 0 : index
    %c0_10 = arith.constant 0 : index
    %c0_11 = arith.constant 0 : index
    %15 = vector.load %arg10[%c0_9, %c0_10, %c0_11] : memref<18x18x256xf32, #tpu.memory_space<vmem>>, vector<18x18x256xf32>
    tpu.vector_store %arg10[%c0_9, %c0_10, %c0_11], %14 {strides = array<i32>} : memref<18x18x256xf32, #tpu.memory_space<vmem>>, vector<18x18x256xf32>,
    %16 = vector.shape_cast %13 : vector<256x256xf32> to vector<16x16x256xf32>
    %c1 = arith.constant 1 : index
    %c1_12 = arith.constant 1 : index
    %c0_13 = arith.constant 0 : index
    %17 = vector.load %arg10[%c1, %c1_12, %c0_13] : memref<18x18x256xf32, #tpu.memory_space<vmem>>, vector<16x16x256xf32>
    tpu.vector_store %arg10[%c1, %c1_12, %c0_13], %16 {strides = array<i32>} : memref<18x18x256xf32, #tpu.memory_space<vmem>>, vector<16x16x256xf32>,
    %c0_14 = arith.constant 0 : index
    %c0_15 = arith.constant 0 : index
    %18 = vector.load %arg3[%c0_14, %c0_15] : memref<9x256xf32, #tpu.memory_space<vmem>>, vector<9x256xf32>
    %cst_16 = arith.constant 0.000000e+00 : f32
    %19 = vector.broadcast %cst_16 : f32 to vector<16x16x256xf32>
    %c0_17 = arith.constant 0 : index
    %c0_18 = arith.constant 0 : index
    %c0_19 = arith.constant 0 : index
    %20 = vector.load %arg10[%c0_17, %c0_18, %c0_19] : memref<18x18x256xf32, #tpu.memory_space<vmem>>, vector<16x16x256xf32>
    %21 = vector.extract_strided_slice %18 {offsets = [0, 0], sizes = [1, 256], strides = [1, 1]} : vector<9x256xf32> to vector<1x256xf32>
    %22 = vector.shape_cast %21 : vector<1x256xf32> to vector<256xf32>
    %23 = vector.shape_cast %22 : vector<256xf32> to vector<1x1x256xf32>
    %24 = vector.broadcast %23 : vector<1x1x256xf32> to vector<16x16x256xf32>
    %25 = arith.mulf %20, %24 : vector<16x16x256xf32>
    %26 = arith.addf %19, %25 : vector<16x16x256xf32>
    %c0_20 = arith.constant 0 : index
    %c1_21 = arith.constant 1 : index
    %c0_22 = arith.constant 0 : index
    %27 = vector.load %arg10[%c0_20, %c1_21, %c0_22] : memref<18x18x256xf32, #tpu.memory_space<vmem>>, vector<16x16x256xf32>
    %28 = vector.extract_strided_slice %18 {offsets = [1, 0], sizes = [1, 256], strides = [1, 1]} : vector<9x256xf32> to vector<1x256xf32>
    %29 = vector.shape_cast %28 : vector<1x256xf32> to vector<256xf32>
    %30 = vector.shape_cast %29 : vector<256xf32> to vector<1x1x256xf32>
    %31 = vector.broadcast %30 : vector<1x1x256xf32> to vector<16x16x256xf32>
    %32 = arith.mulf %27, %31 : vector<16x16x256xf32>
    %33 = arith.addf %26, %32 : vector<16x16x256xf32>
    %c0_23 = arith.constant 0 : index
    %c2 = arith.constant 2 : index
    %c0_24 = arith.constant 0 : index
    %34 = vector.load %arg10[%c0_23, %c2, %c0_24] : memref<18x18x256xf32, #tpu.memory_space<vmem>>, vector<16x16x256xf32>
    %35 = vector.extract_strided_slice %18 {offsets = [2, 0], sizes = [1, 256], strides = [1, 1]} : vector<9x256xf32> to vector<1x256xf32>
    %36 = vector.shape_cast %35 : vector<1x256xf32> to vector<256xf32>
    %37 = vector.shape_cast %36 : vector<256xf32> to vector<1x1x256xf32>
    %38 = vector.broadcast %37 : vector<1x1x256xf32> to vector<16x16x256xf32>
    %39 = arith.mulf %34, %38 : vector<16x16x256xf32>
    %40 = arith.addf %33, %39 : vector<16x16x256xf32>
    %c1_25 = arith.constant 1 : index
    %c0_26 = arith.constant 0 : index
    %c0_27 = arith.constant 0 : index
    %41 = vector.load %arg10[%c1_25, %c0_26, %c0_27] : memref<18x18x256xf32, #tpu.memory_space<vmem>>, vector<16x16x256xf32>
    %42 = vector.extract_strided_slice %18 {offsets = [3, 0], sizes = [1, 256], strides = [1, 1]} : vector<9x256xf32> to vector<1x256xf32>
    %43 = vector.shape_cast %42 : vector<1x256xf32> to vector<256xf32>
    %44 = vector.shape_cast %43 : vector<256xf32> to vector<1x1x256xf32>
    %45 = vector.broadcast %44 : vector<1x1x256xf32> to vector<16x16x256xf32>
    %46 = arith.mulf %41, %45 : vector<16x16x256xf32>
    %47 = arith.addf %40, %46 : vector<16x16x256xf32>
    %c1_28 = arith.constant 1 : index
    %c1_29 = arith.constant 1 : index
    %c0_30 = arith.constant 0 : index
    %48 = vector.load %arg10[%c1_28, %c1_29, %c0_30] : memref<18x18x256xf32, #tpu.memory_space<vmem>>, vector<16x16x256xf32>
    %49 = vector.extract_strided_slice %18 {offsets = [4, 0], sizes = [1, 256], strides = [1, 1]} : vector<9x256xf32> to vector<1x256xf32>
    %50 = vector.shape_cast %49 : vector<1x256xf32> to vector<256xf32>
    %51 = vector.shape_cast %50 : vector<256xf32> to vector<1x1x256xf32>
    %52 = vector.broadcast %51 : vector<1x1x256xf32> to vector<16x16x256xf32>
    %53 = arith.mulf %48, %52 : vector<16x16x256xf32>
    %54 = arith.addf %47, %53 : vector<16x16x256xf32>
    %c1_31 = arith.constant 1 : index
    %c2_32 = arith.constant 2 : index
    %c0_33 = arith.constant 0 : index
    %55 = vector.load %arg10[%c1_31, %c2_32, %c0_33] : memref<18x18x256xf32, #tpu.memory_space<vmem>>, vector<16x16x256xf32>
    %56 = vector.extract_strided_slice %18 {offsets = [5, 0], sizes = [1, 256], strides = [1, 1]} : vector<9x256xf32> to vector<1x256xf32>
    %57 = vector.shape_cast %56 : vector<1x256xf32> to vector<256xf32>
    %58 = vector.shape_cast %57 : vector<256xf32> to vector<1x1x256xf32>
    %59 = vector.broadcast %58 : vector<1x1x256xf32> to vector<16x16x256xf32>
    %60 = arith.mulf %55, %59 : vector<16x16x256xf32>
    %61 = arith.addf %54, %60 : vector<16x16x256xf32>
    %c2_34 = arith.constant 2 : index
    %c0_35 = arith.constant 0 : index
    %c0_36 = arith.constant 0 : index
    %62 = vector.load %arg10[%c2_34, %c0_35, %c0_36] : memref<18x18x256xf32, #tpu.memory_space<vmem>>, vector<16x16x256xf32>
    %63 = vector.extract_strided_slice %18 {offsets = [6, 0], sizes = [1, 256], strides = [1, 1]} : vector<9x256xf32> to vector<1x256xf32>
    %64 = vector.shape_cast %63 : vector<1x256xf32> to vector<256xf32>
    %65 = vector.shape_cast %64 : vector<256xf32> to vector<1x1x256xf32>
    %66 = vector.broadcast %65 : vector<1x1x256xf32> to vector<16x16x256xf32>
    %67 = arith.mulf %62, %66 : vector<16x16x256xf32>
    %68 = arith.addf %61, %67 : vector<16x16x256xf32>
    %c2_37 = arith.constant 2 : index
    %c1_38 = arith.constant 1 : index
    %c0_39 = arith.constant 0 : index
    %69 = vector.load %arg10[%c2_37, %c1_38, %c0_39] : memref<18x18x256xf32, #tpu.memory_space<vmem>>, vector<16x16x256xf32>
    %70 = vector.extract_strided_slice %18 {offsets = [7, 0], sizes = [1, 256], strides = [1, 1]} : vector<9x256xf32> to vector<1x256xf32>
    %71 = vector.shape_cast %70 : vector<1x256xf32> to vector<256xf32>
    %72 = vector.shape_cast %71 : vector<256xf32> to vector<1x1x256xf32>
    %73 = vector.broadcast %72 : vector<1x1x256xf32> to vector<16x16x256xf32>
    %74 = arith.mulf %69, %73 : vector<16x16x256xf32>
    %75 = arith.addf %68, %74 : vector<16x16x256xf32>
    %c2_40 = arith.constant 2 : index
    %c2_41 = arith.constant 2 : index
    %c0_42 = arith.constant 0 : index
    %76 = vector.load %arg10[%c2_40, %c2_41, %c0_42] : memref<18x18x256xf32, #tpu.memory_space<vmem>>, vector<16x16x256xf32>
    %77 = vector.extract_strided_slice %18 {offsets = [8, 0], sizes = [1, 256], strides = [1, 1]} : vector<9x256xf32> to vector<1x256xf32>
    %78 = vector.shape_cast %77 : vector<1x256xf32> to vector<256xf32>
    %79 = vector.shape_cast %78 : vector<256xf32> to vector<1x1x256xf32>
    %80 = vector.broadcast %79 : vector<1x1x256xf32> to vector<16x16x256xf32>
    %81 = arith.mulf %76, %80 : vector<16x16x256xf32>
    %82 = arith.addf %75, %81 : vector<16x16x256xf32>
    %cst_43 = arith.constant 0.000000e+00 : f32
    %83 = vector.broadcast %cst_43 : f32 to vector<16x16x256xf32>
    %84 = arith.subf %83, %82 : vector<16x16x256xf32>
    %85 = math.exp %84 : vector<16x16x256xf32>
    %cst_44 = arith.constant 1.000000e+00 : f32
    %86 = vector.broadcast %cst_44 : f32 to vector<16x16x256xf32>
    %87 = arith.addf %86, %85 : vector<16x16x256xf32>
    %cst_45 = arith.constant 1.000000e+00 : f32
    %88 = vector.broadcast %cst_45 : f32 to vector<16x16x256xf32>
    %89 = arith.divf %88, %87 : vector<16x16x256xf32>
    %90 = arith.mulf %82, %89 : vector<16x16x256xf32>
    %91 = vector.shape_cast %90 : vector<16x16x256xf32> to vector<256x256xf32>
    %cst_46 = arith.constant dense<0.000000e+00> : vector<256xf32>
    %92 = vector.multi_reduction <add>, %91, %cst_46 [0] : vector<256x256xf32> to vector<256xf32>
    %93 = vector.shape_cast %92 : vector<256xf32> to vector<1x256xf32>
    %cst_47 = arith.constant 2.560000e+02 : f32
    %94 = vector.broadcast %cst_47 : f32 to vector<1x256xf32>
    %95 = arith.divf %93, %94 : vector<1x256xf32>
    %c0_48 = arith.constant 0 : index
    %c0_49 = arith.constant 0 : index
    %96 = vector.load %arg4[%c0_48, %c0_49] : memref<256x16xf32, #tpu.memory_space<vmem>>, vector<256x16xf32>
    %cst_50 = arith.constant dense<0.000000e+00> : vector<1x16xf32>
    %97 = tpu.matmul %95, %96, %cst_50 {dimension_numbers = #tpu.dot_dimension_numbers<[1], [0], [0], [1], [0, 0, 1, 1], [], []>} : vector<1x256xf32>, vector<256x16xf32>, vector<1x16xf32> -> vector<1x16xf32>
    %c0_51 = arith.constant 0 : index
    %c0_52 = arith.constant 0 : index
    %98 = vector.load %arg5[%c0_51, %c0_52] : memref<1x16xf32, #tpu.memory_space<vmem>>, vector<1x16xf32>
    %99 = arith.addf %97, %98 : vector<1x16xf32>
    %cst_53 = arith.constant 0.000000e+00 : f32
    %100 = vector.broadcast %cst_53 : f32 to vector<1x16xf32>
    %101 = arith.subf %100, %99 : vector<1x16xf32>
    %102 = math.exp %101 : vector<1x16xf32>
    %cst_54 = arith.constant 1.000000e+00 : f32
    %103 = vector.broadcast %cst_54 : f32 to vector<1x16xf32>
    %104 = arith.addf %103, %102 : vector<1x16xf32>
    %cst_55 = arith.constant 1.000000e+00 : f32
    %105 = vector.broadcast %cst_55 : f32 to vector<1x16xf32>
    %106 = arith.divf %105, %104 : vector<1x16xf32>
    %107 = arith.mulf %99, %106 : vector<1x16xf32>
    %c0_56 = arith.constant 0 : index
    %c0_57 = arith.constant 0 : index
    %108 = vector.load %arg6[%c0_56, %c0_57] : memref<16x256xf32, #tpu.memory_space<vmem>>, vector<16x256xf32>
    %cst_58 = arith.constant dense<0.000000e+00> : vector<1x256xf32>
    %109 = tpu.matmul %107, %108, %cst_58 {dimension_numbers = #tpu.dot_dimension_numbers<[1], [0], [0], [1], [0, 0, 1, 1], [], []>} : vector<1x16xf32>, vector<16x256xf32>, vector<1x256xf32> -> vector<1x256xf32>
    %c0_59 = arith.constant 0 : index
    %c0_60 = arith.constant 0 : index
    %110 = vector.load %arg7[%c0_59, %c0_60] : memref<1x256xf32, #tpu.memory_space<vmem>>, vector<1x256xf32>
    %111 = arith.addf %109, %110 : vector<1x256xf32>
    %cst_61 = arith.constant 0.000000e+00 : f32
    %112 = vector.broadcast %cst_61 : f32 to vector<1x256xf32>
    %113 = arith.subf %112, %111 : vector<1x256xf32>
    %114 = math.exp %113 : vector<1x256xf32>
    %cst_62 = arith.constant 1.000000e+00 : f32
    %115 = vector.broadcast %cst_62 : f32 to vector<1x256xf32>
    %116 = arith.addf %115, %114 : vector<1x256xf32>
    %cst_63 = arith.constant 1.000000e+00 : f32
    %117 = vector.broadcast %cst_63 : f32 to vector<1x256xf32>
    %118 = arith.divf %117, %116 : vector<1x256xf32>
    %119 = vector.broadcast %118 : vector<1x256xf32> to vector<256x256xf32>
    %120 = arith.mulf %91, %119 : vector<256x256xf32>
    %121 = arith.truncf %120 : vector<256x256xf32> to vector<256x256xbf16>
    %c0_64 = arith.constant 0 : index
    %c0_65 = arith.constant 0 : index
    %122 = vector.load %arg8[%c0_64, %c0_65] : memref<256x64xbf16, #tpu.memory_space<vmem>>, vector<256x64xbf16>
    %cst_66 = arith.constant dense<0.000000e+00> : vector<256x64xf32>
    %123 = tpu.matmul %121, %122, %cst_66 {dimension_numbers = #tpu.dot_dimension_numbers<[1], [0], [0], [1], [0, 0, 1, 1], [], []>} : vector<256x256xbf16>, vector<256x64xbf16>, vector<256x64xf32> -> vector<256x64xf32>
    %124 = arith.addf %123, %2 : vector<256x64xf32>
    %125 = vector.shape_cast %124 : vector<256x64xf32> to vector<16x16x64xf32>
    %c0_67 = arith.constant 0 : index
    %c0_68 = arith.constant 0 : index
    %c0_69 = arith.constant 0 : index
    %c0_70 = arith.constant 0 : index
    %126 = vector.load %arg9[%c0_67, %c0_68, %c0_69, %c0_70] : memref<1x16x16x64xf32, #tpu.memory_space<vmem>>, vector<1x16x16x64xf32>
    %127 = vector.shape_cast %126 : vector<1x16x16x64xf32> to vector<16x16x64xf32>
    %128 = vector.shape_cast %125 : vector<16x16x64xf32> to vector<1x16x16x64xf32>
    tpu.vector_store %arg9[%c0_67, %c0_68, %c0_69, %c0_70], %128 {strides = array<i32>} : memref<1x16x16x64xf32, #tpu.memory_space<vmem>>, vector<1x16x16x64xf32>,
    return
  }
  func.func @transform_0(%arg0: i32) -> (i32, i32, i32, i32) {
    %c0_i32 = arith.constant 0 : i32
    %c0_i32_0 = arith.constant 0 : i32
    %c0_i32_1 = arith.constant 0 : i32
    %c0_i32_2 = arith.constant 0 : i32
    return %arg0, %c0_i32, %c0_i32_0, %c0_i32_1 : i32, i32, i32, i32
  }
  func.func @transform_1(%arg0: i32) -> (i32, i32) {
    %c0_i32 = arith.constant 0 : i32
    %c0_i32_0 = arith.constant 0 : i32
    %c0_i32_1 = arith.constant 0 : i32
    return %c0_i32, %c0_i32_0 : i32, i32
  }
  func.func @transform_2(%arg0: i32) -> (i32, i32) {
    %c0_i32 = arith.constant 0 : i32
    %c0_i32_0 = arith.constant 0 : i32
    %c0_i32_1 = arith.constant 0 : i32
    return %c0_i32, %c0_i32_0 : i32, i32
  }
  func.func @transform_3(%arg0: i32) -> (i32, i32) {
    %c0_i32 = arith.constant 0 : i32
    %c0_i32_0 = arith.constant 0 : i32
    %c0_i32_1 = arith.constant 0 : i32
    return %c0_i32, %c0_i32_0 : i32, i32
  }
  func.func @transform_4(%arg0: i32) -> (i32, i32) {
    %c0_i32 = arith.constant 0 : i32
    %c0_i32_0 = arith.constant 0 : i32
    %c0_i32_1 = arith.constant 0 : i32
    return %c0_i32, %c0_i32_0 : i32, i32
  }
  func.func @transform_5(%arg0: i32) -> (i32, i32) {
    %c0_i32 = arith.constant 0 : i32
    %c0_i32_0 = arith.constant 0 : i32
    %c0_i32_1 = arith.constant 0 : i32
    return %c0_i32, %c0_i32_0 : i32, i32
  }
  func.func @transform_6(%arg0: i32) -> (i32, i32) {
    %c0_i32 = arith.constant 0 : i32
    %c0_i32_0 = arith.constant 0 : i32
    %c0_i32_1 = arith.constant 0 : i32
    return %c0_i32, %c0_i32_0 : i32, i32
  }
  func.func @transform_7(%arg0: i32) -> (i32, i32) {
    %c0_i32 = arith.constant 0 : i32
    %c0_i32_0 = arith.constant 0 : i32
    %c0_i32_1 = arith.constant 0 : i32
    return %c0_i32, %c0_i32_0 : i32, i32
  }
  func.func @transform_8(%arg0: i32) -> (i32, i32, i32, i32) {
    %c0_i32 = arith.constant 0 : i32
    %c0_i32_0 = arith.constant 0 : i32
    %c0_i32_1 = arith.constant 0 : i32
    %c0_i32_2 = arith.constant 0 : i32
    return %arg0, %c0_i32, %c0_i32_0, %c0_i32_1 : i32, i32, i32, i32
  }
}

</mosaic_0001>

<llo_original>
// kernel: tpu_custom_call.1
$region0: #{tpu_custom_call.1}
  #allocation0 [shape = 'u32[]', space=smem, size = 0x4, offset = 0x4, fixed_abs, tag = 'smem constant byte address 0x4 - core index']
  #allocation1 [shape = 'u32[144,128]{1,0:T(1,128)}', space=vmem, size = 0x12000, scoped, tag = 'internal scratch']
  #allocation2 [shape = 'f32[18,18,256]{2,1,0:T(8,128)}', space=vmem, size = 0x6c000, scoped, tag = 'scratch operand']
  %s0 = inlined_call_operand.hbm [shape: f32[2,16,16,64], index: 0, kind: input, shape index: {}]
  %s1 = inlined_call_operand.vmem [shape: bf16[64,256], index: 1, kind: input, shape index: {}]
  %s2 = inlined_call_operand.vmem [shape: f32[9,256], index: 2, kind: input, shape index: {}]
  %s3 = inlined_call_operand.vmem [shape: f32[256,16], index: 3, kind: input, shape index: {}]
  %s4 = inlined_call_operand.vmem [shape: f32[1,16], index: 4, kind: input, shape index: {}]
  %s5 = inlined_call_operand.vmem [shape: f32[16,256], index: 5, kind: input, shape index: {}]
  %s6 = inlined_call_operand.vmem [shape: f32[1,256], index: 6, kind: input, shape index: {}]
  %s7 = inlined_call_operand.vmem [shape: bf16[256,64], index: 7, kind: input, shape index: {}]
  %s8 = inlined_call_operand.hbm [shape: f32[2,16,16,64], index: 8, kind: output, shape index: {}]
  %s9 = sld [smem:[#allocation0]]
  $region69: #{tpu_custom_call.1} parent=0
    _
  %s11 = ssub.s32 1, %s9
  %s12 = scalar_select 0, %s11, %s9
  $region1: #{tpu_custom_call.1} parent=0
    #allocation3 [shape = 'u8[262144]{0}', space=vmem, size = 0x40000, scoped, tag = 'input window, operand 0']
    #allocation4 [shape = 's32[2]{0}', space=sflag, size = 0x8, scoped, tag = 'scoped memory for tpu_custom_call.1']
    #allocation5 [shape = 's32[2]{0}', space=sflag, size = 0x8, scoped, tag = 'scoped memory for tpu_custom_call.1']
    #allocation6 [shape = 'u8[262144]{0}', space=vmem, size = 0x40000, scoped, tag = 'output window, operand 0']
    %13 = vsyncpa [#allocation4], 0
    %s14 = scalar_lea.sflag [#allocation4], 1
    %15 = vsyncpa %s14, 0
    %16 = vsyncpa [#allocation5], 0
    %s17 = scalar_lea.sflag [#allocation5], 1
    %18 = vsyncpa %s17, 0
    loop: start=0, step=1, limit=4
    $region2: #{tpu_custom_call.1} parent=1 // loop_pre_header
      _
    $region3: #{tpu_custom_call.1} parent=1 // loop_header
      %s20 = sphi 0, %s24
      %p21 = scmp.ge.s32.totalorder %s20, 4
      %s30 = sphi 0, %s32
      %s33 = sphi 0, %s30
      %s34 = sphi 0, %s33
      %s50 = sphi 0, %s34
      %s54 = sphi 0, %s54
      %s56 = sphi 0, %s54
      %s57 = sphi 0, %s56
      %s71 = sphi 0, %s57
      %s75 = sphi 0, %s75
      %s77 = sphi 0, %s75
      %s78 = sphi 0, %s77
      %s92 = sphi 0, %s78
      %s96 = sphi 0, %s96
      %s98 = sphi 0, %s96
      %s99 = sphi 0, %s98
      %s113 = sphi 0, %s99
      %s117 = sphi 0, %s117
      %s119 = sphi 0, %s117
      %s120 = sphi 0, %s119
      %s134 = sphi 0, %s120
      %s138 = sphi 0, %s138
      %s140 = sphi 0, %s138
      %s141 = sphi 0, %s140
      %s155 = sphi 0, %s141
      %s159 = sphi 0, %s159
      %s161 = sphi 0, %s159
      %s162 = sphi 0, %s161
      %s176 = sphi 0, %s162
      %s180 = sphi 0, %s180
      %s182 = sphi 0, %s180
      %s183 = sphi 0, %s182
      %s197 = sphi 0, %s183
      %s203 = sphi 0, %s205
      %s206 = sphi 0, %s203
      %s207 = sphi 0, %s206
      %s223 = sphi 0, %s207
    $region4: #{tpu_custom_call.1} parent=1 // loop_header_branch
      %23 = sbr.rel (%p21) target = $region8
    $region5: #{tpu_custom_call.1} parent=1 // loop_body
      %s25 = ssub.s32 %s20, 1
      %s26 = ssub.s32 %s20, 2
      %s27 = sadd.s32 %s20, 1
      %s28 = ssub.s32 %s20, %s27
      %p29 = scmp.eq.s32.totalorder %s28, 0
      %s31 = sadd.s32 %s30, 1
      %s32 = scalar_select %p29, %s30, %s31
      %p35 = pneg %p29
      %p36 = scmp.eq.s32.totalorder %s20, 1
      %p37 = por %p35, %p36
      %p38 = scmp.ne.s32.totalorder %s30, %s33
      %p39 = scmp.eq.s32.totalorder %s20, 0
      %p40 = por %p38, %p39
      %p41 = scmp.ne.s32.totalorder %s30, %s33
      %p42 = scmp.eq.s32.totalorder %s25, 1
      %p43 = por %p41, %p42
      %p44 = scmp.ne.s32.totalorder %s33, %s34
      %p45 = scmp.eq.s32.totalorder %s25, 0
      %p46 = por %p44, %p45
      %p47 = scmp.ne.s32.totalorder %s33, %s34
      %p48 = scmp.eq.s32.totalorder %s26, 1
      %p49 = por %p47, %p48
      %p51 = scmp.ne.s32.totalorder %s34, %s50
      %p52 = scmp.eq.s32.totalorder %s26, 0
      %p53 = por %p51, %p52
      %s55 = sadd.s32 %s54, 1
      %p58 = scmp.eq.s32.totalorder %s20, 1
      %p59 = scmp.ne.s32.totalorder %s54, %s56
      %p60 = scmp.eq.s32.totalorder %s20, 0
      %p61 = por %p59, %p60
      %p62 = scmp.ne.s32.totalorder %s54, %s56
      %p63 = scmp.eq.s32.totalorder %s25, 1
      %p64 = por %p62, %p63
      %p65 = scmp.ne.s32.totalorder %s56, %s57
      %p66 = scmp.eq.s32.totalorder %s25, 0
      %p67 = por %p65, %p66
      %p68 = scmp.ne.s32.totalorder %s56, %s57
      %p69 = scmp.eq.s32.totalorder %s26, 1
      %p70 = por %p68, %p69
      %p72 = scmp.ne.s32.totalorder %s57, %s71
      %p73 = scmp.eq.s32.totalorder %s26, 0
      %p74 = por %p72, %p73
      %s76 = sadd.s32 %s75, 1
      %p79 = scmp.eq.s32.totalorder %s20, 1
      %p80 = scmp.ne.s32.totalorder %s75, %s77
      %p81 = scmp.eq.s32.totalorder %s20, 0
      %p82 = por %p80, %p81
      %p83 = scmp.ne.s32.totalorder %s75, %s77
      %p84 = scmp.eq.s32.totalorder %s25, 1
      %p85 = por %p83, %p84
      %p86 = scmp.ne.s32.totalorder %s77, %s78
      %p87 = scmp.eq.s32.totalorder %s25, 0
      %p88 = por %p86, %p87
      %p89 = scmp.ne.s32.totalorder %s77, %s78
      %p90 = scmp.eq.s32.totalorder %s26, 1
      %p91 = por %p89, %p90
      %p93 = scmp.ne.s32.totalorder %s78, %s92
      %p94 = scmp.eq.s32.totalorder %s26, 0
      %p95 = por %p93, %p94
      %s97 = sadd.s32 %s96, 1
      %p100 = scmp.eq.s32.totalorder %s20, 1
      %p101 = scmp.ne.s32.totalorder %s96, %s98
      %p102 = scmp.eq.s32.totalorder %s20, 0
      %p103 = por %p101, %p102
      %p104 = scmp.ne.s32.totalorder %s96, %s98
      %p105 = scmp.eq.s32.totalorder %s25, 1
      %p106 = por %p104, %p105
      %p107 = scmp.ne.s32.totalorder %s98, %s99
      %p108 = scmp.eq.s32.totalorder %s25, 0
      %p109 = por %p107, %p108
      %p110 = scmp.ne.s32.totalorder %s98, %s99
      %p111 = scmp.eq.s32.totalorder %s26, 1
      %p112 = por %p110, %p111
      %p114 = scmp.ne.s32.totalorder %s99, %s113
      %p115 = scmp.eq.s32.totalorder %s26, 0
      %p116 = por %p114, %p115
      %s118 = sadd.s32 %s117, 1
      %p121 = scmp.eq.s32.totalorder %s20, 1
      %p122 = scmp.ne.s32.totalorder %s117, %s119
      %p123 = scmp.eq.s32.totalorder %s20, 0
      %p124 = por %p122, %p123
      %p125 = scmp.ne.s32.totalorder %s117, %s119
      %p126 = scmp.eq.s32.totalorder %s25, 1
      %p127 = por %p125, %p126
      %p128 = scmp.ne.s32.totalorder %s119, %s120
      %p129 = scmp.eq.s32.totalorder %s25, 0
      %p130 = por %p128, %p129
      %p131 = scmp.ne.s32.totalorder %s119, %s120
      %p132 = scmp.eq.s32.totalorder %s26, 1
      %p133 = por %p131, %p132
      %p135 = scmp.ne.s32.totalorder %s120, %s134
      %p136 = scmp.eq.s32.totalorder %s26, 0
      %p137 = por %p135, %p136
      %s139 = sadd.s32 %s138, 1
      %p142 = scmp.eq.s32.totalorder %s20, 1
      %p143 = scmp.ne.s32.totalorder %s138, %s140
      %p144 = scmp.eq.s32.totalorder %s20, 0
      %p145 = por %p143, %p144
      %p146 = scmp.ne.s32.totalorder %s138, %s140
      %p147 = scmp.eq.s32.totalorder %s25, 1
      %p148 = por %p146, %p147
      %p149 = scmp.ne.s32.totalorder %s140, %s141
      %p150 = scmp.eq.s32.totalorder %s25, 0
      %p151 = por %p149, %p150
      %p152 = scmp.ne.s32.totalorder %s140, %s141
      %p153 = scmp.eq.s32.totalorder %s26, 1
      %p154 = por %p152, %p153
      %p156 = scmp.ne.s32.totalorder %s141, %s155
      %p157 = scmp.eq.s32.totalorder %s26, 0
      %p158 = por %p156, %p157
      %s160 = sadd.s32 %s159, 1
      %p163 = scmp.eq.s32.totalorder %s20, 1
      %p164 = scmp.ne.s32.totalorder %s159, %s161
      %p165 = scmp.eq.s32.totalorder %s20, 0
      %p166 = por %p164, %p165
      %p167 = scmp.ne.s32.totalorder %s159, %s161
      %p168 = scmp.eq.s32.totalorder %s25, 1
      %p169 = por %p167, %p168
      %p170 = scmp.ne.s32.totalorder %s161, %s162
      %p171 = scmp.eq.s32.totalorder %s25, 0
      %p172 = por %p170, %p171
      %p173 = scmp.ne.s32.totalorder %s161, %s162
      %p174 = scmp.eq.s32.totalorder %s26, 1
      %p175 = por %p173, %p174
      %p177 = scmp.ne.s32.totalorder %s162, %s176
      %p178 = scmp.eq.s32.totalorder %s26, 0
      %p179 = por %p177, %p178
      %s181 = sadd.s32 %s180, 1
      %p184 = scmp.eq.s32.totalorder %s20, 1
      %p185 = scmp.ne.s32.totalorder %s180, %s182
      %p186 = scmp.eq.s32.totalorder %s20, 0
      %p187 = por %p185, %p186
      %p188 = scmp.ne.s32.totalorder %s180, %s182
      %p189 = scmp.eq.s32.totalorder %s25, 1
      %p190 = por %p188, %p189
      %p191 = scmp.ne.s32.totalorder %s182, %s183
      %p192 = scmp.eq.s32.totalorder %s25, 0
      %p193 = por %p191, %p192
      %p194 = scmp.ne.s32.totalorder %s182, %s183
      %p195 = scmp.eq.s32.totalorder %s26, 1
      %p196 = por %p194, %p195
      %p198 = scmp.ne.s32.totalorder %s183, %s197
      %p199 = scmp.eq.s32.totalorder %s26, 0
      %p200 = por %p198, %p199
      %s201 = ssub.s32 %s20, %s27
      %p202 = scmp.eq.s32.totalorder %s201, 0
      %s204 = sadd.s32 %s203, 1
      %s205 = scalar_select %p202, %s203, %s204
      %p208 = pneg %p202
      %p209 = scmp.eq.s32.totalorder %s20, 1
      %p210 = por %p208, %p209
      %p211 = scmp.ne.s32.totalorder %s203, %s206
      %p212 = scmp.eq.s32.totalorder %s20, 0
      %p213 = por %p211, %p212
      %p214 = scmp.ne.s32.totalorder %s203, %s206
      %p215 = scmp.eq.s32.totalorder %s25, 1
      %p216 = por %p214, %p215
      %p217 = scmp.ne.s32.totalorder %s206, %s207
      %p218 = scmp.eq.s32.totalorder %s25, 0
      %p219 = por %p217, %p218
      %p220 = scmp.ne.s32.totalorder %s206, %s207
      %p221 = scmp.eq.s32.totalorder %s26, 1
      %p222 = por %p220, %p221
      %p224 = scmp.ne.s32.totalorder %s207, %s223
      %p225 = scmp.eq.s32.totalorder %s26, 0
      %p226 = por %p224, %p225
      %p227 = scmp.le.s32.totalorder 1, %s20
      %p228 = scmp.lt.s32.totalorder %s20, 3
      %p229 = pnand %p227, %p228
      %p230 = pneg %p229
      // Predicated region
      $region9: #{tpu_custom_call.1} parent=5 // pred_check
        _
      $region10: #{tpu_custom_call.1} parent=5 // pred_check_branch
        %232 = sbr.rel (%p229) target = $region12
      $region11: #{tpu_custom_call.1} parent=5 // pred_region
        %s233 = ssub.s32 %s20, 1
        // Predicated region
        $region13: #{tpu_custom_call.1} parent=11 // pred_check
          %p234 = pneg %p67
        $region14: #{tpu_custom_call.1} parent=11 // pred_check_branch
          %236 = sbr.rel (%p234) target = $region16
        $region15: #{tpu_custom_call.1} parent=11 // pred_region
          _
        $region16: #{tpu_custom_call.1} parent=11 // pred_fallthru
          _
        // Predicated region
        $region17: #{tpu_custom_call.1} parent=11 // pred_check
          %p237 = pneg %p88
        $region18: #{tpu_custom_call.1} parent=11 // pred_check_branch
          %239 = sbr.rel (%p237) target = $region20
        $region19: #{tpu_custom_call.1} parent=11 // pred_region
          _
        $region20: #{tpu_custom_call.1} parent=11 // pred_fallthru
          _
        // Predicated region
        $region21: #{tpu_custom_call.1} parent=11 // pred_check
          %p240 = pneg %p109
        $region22: #{tpu_custom_call.1} parent=11 // pred_check_branch
          %242 = sbr.rel (%p240) target = $region24
        $region23: #{tpu_custom_call.1} parent=11 // pred_region
          _
        $region24: #{tpu_custom_call.1} parent=11 // pred_fallthru
          _
        // Predicated region
        $region25: #{tpu_custom_call.1} parent=11 // pred_check
          %p243 = pneg %p130
        $region26: #{tpu_custom_call.1} parent=11 // pred_check_branch
          %245 = sbr.rel (%p243) target = $region28
        $region27: #{tpu_custom_call.1} parent=11 // pred_region
          _
        $region28: #{tpu_custom_call.1} parent=11 // pred_fallthru
          _
        // Predicated region
        $region29: #{tpu_custom_call.1} parent=11 // pred_check
          %p246 = pneg %p151
        $region30: #{tpu_custom_call.1} parent=11 // pred_check_branch
          %248 = sbr.rel (%p246) target = $region32
        $region31: #{tpu_custom_call.1} parent=11 // pred_region
          _
        $region32: #{tpu_custom_call.1} parent=11 // pred_fallthru
          _
        // Predicated region
        $region33: #{tpu_custom_call.1} parent=11 // pred_check
          %p249 = pneg %p172
        $region34: #{tpu_custom_call.1} parent=11 // pred_check_branch
          %251 = sbr.rel (%p249) target = $region36
        $region35: #{tpu_custom_call.1} parent=11 // pred_region
          _
        $region36: #{tpu_custom_call.1} parent=11 // pred_fallthru
          _
        // Predicated region
        $region37: #{tpu_custom_call.1} parent=11 // pred_check
          %p252 = pneg %p193
        $region38: #{tpu_custom_call.1} parent=11 // pred_check_branch
          %254 = sbr.rel (%p252) target = $region40
        $region39: #{tpu_custom_call.1} parent=11 // pred_region
          _
        $region40: #{tpu_custom_call.1} parent=11 // pred_fallthru
          _
      $region12: #{tpu_custom_call.1} parent=5 // pred_fallthru
        _
      %p255 = scmp.lt.s32.totalorder %s20, 2
      // Predicated region
      $region41: #{tpu_custom_call.1} parent=5 // pred_check
        %p256 = pneg %p255
      $region42: #{tpu_custom_call.1} parent=5 // pred_check_branch
        %258 = sbr.rel (%p256) target = $region44
      $region43: #{tpu_custom_call.1} parent=5 // pred_region
        // Predicated region
        $region45: #{tpu_custom_call.1} parent=43 // pred_check
          %p259 = pneg %p40
        $region46: #{tpu_custom_call.1} parent=43 // pred_check_branch
          %261 = sbr.rel (%p259) target = $region48
        $region47: #{tpu_custom_call.1} parent=43 // pred_region
          %s262 = sand.u32 %s30, 1
          %s263 = scalar_lea.sflag [#allocation4], %s262
          %s264 = sand.u32 %s30, 1
          %s265 = smul.addr %s264, 256
          %s266 = scalar_lea.vmem [#allocation3], %s265
          %s268 = ssub.s32 4096, 4096
          %269 = vsyncadd %s263, %s268
          %s270 = smul.addr %s20, 32
          %s271 = smul.addr %s270, 128
          %s272 = scalar_lea.hbm %s0, %s271
          %s273 = sshll.u32 %s266, 4
          %s274 = int_to_ptr.vmem [resolvable:$true] %s273
          %279 = dma.hbm_to_vmem [thread:$0]  %s272, 4096, %s274, %s263, 128, 128, 8
        $region48: #{tpu_custom_call.1} parent=43 // pred_fallthru
          _
      $region44: #{tpu_custom_call.1} parent=5 // pred_fallthru
        _
      %p280 = scmp.le.s32.totalorder 1, %s20
      %p281 = scmp.lt.s32.totalorder %s20, 3
      %p282 = pnand %p280, %p281
      %p283 = pneg %p282
      // Predicated region
      $region49: #{tpu_custom_call.1} parent=5 // pred_check
        _
      $region50: #{tpu_custom_call.1} parent=5 // pred_check_branch
        %285 = sbr.rel (%p282) target = $region52
      $region51: #{tpu_custom_call.1} parent=5 // pred_region
        %s286 = ssub.s32 %s20, 1
        %s287 = sand.u32 %s33, 1
        %s288 = scalar_lea.sflag [#allocation4], %s287
        %s289 = sand.u32 %s33, 1
        %s290 = smul.addr %s289, 256
        %s291 = scalar_lea.vmem [#allocation3], %s290
        // Predicated region
        $region53: #{tpu_custom_call.1} parent=51 // pred_check
          %p292 = pneg %p46
        $region54: #{tpu_custom_call.1} parent=51 // pred_check_branch
          %294 = sbr.rel (%p292) target = $region56
        $region55: #{tpu_custom_call.1} parent=51 // pred_region
          %295 = dma.done %s288, 4096
        $region56: #{tpu_custom_call.1} parent=51 // pred_fallthru
          _
        %s296 = sand.u32 %s33, 1
        %s297 = scalar_lea.sflag [#allocation4], %s296
        %s298 = sand.u32 %s33, 1
        %s299 = smul.addr %s298, 256
        %s300 = scalar_lea.vmem [#allocation3], %s299
        %p301 = pneg %p46
        %p302 = pneg %p43
        %p303 = pneg %p67
        %p304 = pneg %p64
        %p305 = pneg %p88
        %p306 = pneg %p85
        %p307 = pneg %p109
        %p308 = pneg %p106
        %p309 = pneg %p130
        %p310 = pneg %p127
        %p311 = pneg %p151
        %p312 = pneg %p148
        %p313 = pneg %p172
        %p314 = pneg %p169
        %p315 = pneg %p193
        %p316 = pneg %p190
        %p317 = pneg %p219
        %p318 = pneg %p216
        %s319 = sand.u32 %s206, 1
        %s320 = scalar_lea.sflag [#allocation5], %s319
        %s321 = sand.u32 %s206, 1
        %s322 = smul.addr %s321, 256
        %s323 = scalar_lea.vmem [#allocation6], %s322
        %v325 = vld [vmem:[%s291] sm:$0xff]
        %v326 = vld [vmem:[%s291 + $0x8] sm:$0xff]
        %v327 = vld [vmem:[%s291 + $0x10] sm:$0xff]
        %v328 = vld [vmem:[%s291 + $0x18] sm:$0xff]
        %v329 = vld [vmem:[%s291 + $0x20] sm:$0xff]
        %v330 = vld [vmem:[%s291 + $0x28] sm:$0xff]
        %v331 = vld [vmem:[%s291 + $0x30] sm:$0xff]
        %v332 = vld [vmem:[%s291 + $0x38] sm:$0xff]
        %v333 = vld [vmem:[%s291 + $0x40] sm:$0xff]
        %v334 = vld [vmem:[%s291 + $0x48] sm:$0xff]
        %v335 = vld [vmem:[%s291 + $0x50] sm:$0xff]
        %v336 = vld [vmem:[%s291 + $0x58] sm:$0xff]
        %v337 = vld [vmem:[%s291 + $0x60] sm:$0xff]
        %v338 = vld [vmem:[%s291 + $0x68] sm:$0xff]
        %v339 = vld [vmem:[%s291 + $0x70] sm:$0xff]
        %v340 = vld [vmem:[%s291 + $0x78] sm:$0xff]
        %v341 = vld [vmem:[%s291 + $0x80] sm:$0xff]
        %v342 = vld [vmem:[%s291 + $0x88] sm:$0xff]
        %v343 = vld [vmem:[%s291 + $0x90] sm:$0xff]
        %v344 = vld [vmem:[%s291 + $0x98] sm:$0xff]
        %v345 = vld [vmem:[%s291 + $0xa0] sm:$0xff]
        %v346 = vld [vmem:[%s291 + $0xa8] sm:$0xff]
        %v347 = vld [vmem:[%s291 + $0xb0] sm:$0xff]
        %v348 = vld [vmem:[%s291 + $0xb8] sm:$0xff]
        %v349 = vld [vmem:[%s291 + $0xc0] sm:$0xff]
        %v350 = vld [vmem:[%s291 + $0xc8] sm:$0xff]
        %v351 = vld [vmem:[%s291 + $0xd0] sm:$0xff]
        %v352 = vld [vmem:[%s291 + $0xd8] sm:$0xff]
        %v353 = vld [vmem:[%s291 + $0xe0] sm:$0xff]
        %v354 = vld [vmem:[%s291 + $0xe8] sm:$0xff]
        %v355 = vld [vmem:[%s291 + $0xf0] sm:$0xff]
        %v356 = vld [vmem:[%s291 + $0xf8] sm:$0xff]
        %v357 = vpack.c.bf16 %v326, %v325
        %v358 = vpack.c.bf16 %v328, %v327
        %v359 = vpack.c.bf16 %v330, %v329
        %v360 = vpack.c.bf16 %v332, %v331
        %v361 = vpack.c.bf16 %v334, %v333
        %v362 = vpack.c.bf16 %v336, %v335
        %v363 = vpack.c.bf16 %v338, %v337
        %v364 = vpack.c.bf16 %v340, %v339
        %v365 = vpack.c.bf16 %v342, %v341
        %v366 = vpack.c.bf16 %v344, %v343
        %v367 = vpack.c.bf16 %v346, %v345
        %v368 = vpack.c.bf16 %v348, %v347
        %v369 = vpack.c.bf16 %v350, %v349
        %v370 = vpack.c.bf16 %v352, %v351
        %v371 = vpack.c.bf16 %v354, %v353
        %v372 = vpack.c.bf16 %v356, %v355
        %v373 = vld [vmem:[%s1] sm:$0xff]
        %v374 = vld [vmem:[%s1 + $0x8] sm:$0xff]
        %v375 = vld [vmem:[%s1 + $0x10] sm:$0xff]
        %v376 = vld [vmem:[%s1 + $0x18] sm:$0xff]
        %v377 = vld [vmem:[%s1 + $0x20] sm:$0xff]
        %v378 = vld [vmem:[%s1 + $0x28] sm:$0xff]
        %v379 = vld [vmem:[%s1 + $0x30] sm:$0xff]
        %v380 = vld [vmem:[%s1 + $0x38] sm:$0xff]
        %v389 = vunpack.c.l.b16 %v373
        %v390 = vunpack.c.h.b16 %v373
        %v391 = vunpack.c.l.b16 %v374
        %v392 = vunpack.c.h.b16 %v374
        %v393 = vunpack.c.l.b16 %v375
        %v394 = vunpack.c.h.b16 %v375
        %v395 = vunpack.c.l.b16 %v376
        %v396 = vunpack.c.h.b16 %v376
        %v397 = vunpack.c.l.b16 %v377
        %v398 = vunpack.c.h.b16 %v377
        %v399 = vunpack.c.l.b16 %v378
        %v400 = vunpack.c.h.b16 %v378
        %v401 = vunpack.c.l.b16 %v379
        %v402 = vunpack.c.h.b16 %v379
        %v403 = vunpack.c.l.b16 %v380
        %v404 = vunpack.c.h.b16 %v380
        %v405 = vpack.c.b16 %v391, %v389
        %v406 = vpack.c.b16 %v392, %v390
        %v407 = vpack.c.b16 %v395, %v393
        %v408 = vpack.c.b16 %v396, %v394
        %v409 = vpack.c.b16 %v399, %v397
        %v410 = vpack.c.b16 %v400, %v398
        %v411 = vpack.c.b16 %v403, %v401
        %v412 = vpack.c.b16 %v404, %v402
        %vm421 = vcmask 523264
        %v423 = vsel %vm421, %v357, 0
        %v426 = vsel %vm421, %v358, 0
        %v429 = vsel %vm421, %v359, 0
        %v432 = vsel %vm421, %v360, 0
        %v435 = vsel %vm421, %v361, 0
        %v438 = vsel %vm421, %v362, 0
        %v441 = vsel %vm421, %v363, 0
        %v444 = vsel %vm421, %v364, 0
        %v447 = vsel %vm421, %v365, 0
        %v450 = vsel %vm421, %v366, 0
        %v453 = vsel %vm421, %v367, 0
        %v456 = vsel %vm421, %v368, 0
        %v459 = vsel %vm421, %v369, 0
        %v462 = vsel %vm421, %v370, 0
        %v465 = vsel %vm421, %v371, 0
        %v468 = vsel %vm421, %v372, 0
        %470 = vmatprep.subr.bf16.mxu0 0
        %471 = vmatpush1.bf16.msra.mxu0 0
        %472 = vmatprep.subr.bf16.mxu0 0
        %473 = vmatpush1.bf16.msra.mxu0 0
        %474 = vmatprep.subr.bf16.mxu0 0
        %475 = vmatpush1.bf16.msra.mxu0 0
        %476 = vmatprep.subr.bf16.mxu0 0
        %477 = vmatpush1.bf16.msra.mxu0 0
        %478 = vmatprep.subr.bf16.mxu0 %v412
        %479 = vmatpush1.bf16.msra.mxu0 %v411
        %480 = vmatprep.subr.bf16.mxu0 %v410
        %481 = vmatpush1.bf16.msra.mxu0 %v409
        %482 = vmatprep.subr.bf16.mxu0 %v408
        %483 = vmatpush1.bf16.msra.mxu0 %v407
        %484 = vmatprep.subr.bf16.mxu0 %v406
        %485 = vmatpush1.bf16.msra.mxu0 %v405
        %486 = vmatprep.subr.bf16.mxu0 0
        %487 = vmatpush2.bf16.msra.mxu0 0
        %488 = vmatprep.subr.bf16.mxu0 0
        %489 = vmatpush2.bf16.msra.mxu0 0
        %490 = vmatprep.subr.bf16.mxu0 0
        %491 = vmatpush2.bf16.msra.mxu0 0
        %492 = vmatprep.subr.bf16.mxu0 0
        %493 = vmatpush2.bf16.msra.mxu0 0
        %494 = vmatprep.subr.bf16.mxu0 0
        %495 = vmatpush2.bf16.msra.mxu0 0
        %496 = vmatprep.subr.bf16.mxu0 0
        %497 = vmatpush2.bf16.msra.mxu0 0
        %498 = vmatprep.subr.bf16.mxu0 0
        %499 = vmatpush2.bf16.msra.mxu0 0
        %500 = vmatprep.subr.bf16.mxu0 0
        %501 = vmatpush2.bf16.msra.mxu0 0
        %502 = vmatprep.mubr.bf16.mxu0 0
        %503 = vmatmul.mubr.bf16.gmra.mxu0 %v423
        %v504 = vpop.f32.mrf.mxu0
        %v505 = vadd.f32 0.0, %v504
        %v506 = vpop.f32.mrf.mxu0
        %v507 = vadd.f32 0.0, %v506
        %v508 = vpop.f32.mrf.mxu0
        %v509 = vadd.f32 0.0, %v508
        %v510 = vpop.f32.mrf.mxu0
        %v511 = vadd.f32 0.0, %v510
        %512 = vmatprep.mubr.bf16.mxu0 0
        %513 = vmatmul.mubr.bf16.gmra.mxu0 %v426
        %v514 = vpop.f32.mrf.mxu0
        %v515 = vadd.f32 0.0, %v514
        %v516 = vpop.f32.mrf.mxu0
        %v517 = vadd.f32 0.0, %v516
        %v518 = vpop.f32.mrf.mxu0
        %v519 = vadd.f32 0.0, %v518
        %v520 = vpop.f32.mrf.mxu0
        %v521 = vadd.f32 0.0, %v520
        %522 = vmatprep.mubr.bf16.mxu0 0
        %523 = vmatmul.mubr.bf16.gmra.mxu0 %v429
        %v524 = vpop.f32.mrf.mxu0
        %v525 = vadd.f32 0.0, %v524
        %v526 = vpop.f32.mrf.mxu0
        %v527 = vadd.f32 0.0, %v526
        %v528 = vpop.f32.mrf.mxu0
        %v529 = vadd.f32 0.0, %v528
        %v530 = vpop.f32.mrf.mxu0
        %v531 = vadd.f32 0.0, %v530
        %532 = vmatprep.mubr.bf16.mxu0 0
        %533 = vmatmul.mubr.bf16.gmra.mxu0 %v432
        %v534 = vpop.f32.mrf.mxu0
        %v535 = vadd.f32 0.0, %v534
        %v536 = vpop.f32.mrf.mxu0
        %v537 = vadd.f32 0.0, %v536
        %v538 = vpop.f32.mrf.mxu0
        %v539 = vadd.f32 0.0, %v538
        %v540 = vpop.f32.mrf.mxu0
        %v541 = vadd.f32 0.0, %v540
        %542 = vmatprep.mubr.bf16.mxu0 0
        %543 = vmatmul.mubr.bf16.gmra.mxu0 %v435
        %v544 = vpop.f32.mrf.mxu0
        %v545 = vadd.f32 0.0, %v544
        %v546 = vpop.f32.mrf.mxu0
        %v547 = vadd.f32 0.0, %v546
        %v548 = vpop.f32.mrf.mxu0
        %v549 = vadd.f32 0.0, %v548
        %v550 = vpop.f32.mrf.mxu0
        %v551 = vadd.f32 0.0, %v550
        %552 = vmatprep.mubr.bf16.mxu0 0
        %553 = vmatmul.mubr.bf16.gmra.mxu0 %v438
        %v554 = vpop.f32.mrf.mxu0
        %v555 = vadd.f32 0.0, %v554
        %v556 = vpop.f32.mrf.mxu0
        %v557 = vadd.f32 0.0, %v556
        %v558 = vpop.f32.mrf.mxu0
        %v559 = vadd.f32 0.0, %v558
        %v560 = vpop.f32.mrf.mxu0
        %v561 = vadd.f32 0.0, %v560
        %562 = vmatprep.mubr.bf16.mxu0 0
        %563 = vmatmul.mubr.bf16.gmra.mxu0 %v441
        %v564 = vpop.f32.mrf.mxu0
        %v565 = vadd.f32 0.0, %v564
        %v566 = vpop.f32.mrf.mxu0
        %v567 = vadd.f32 0.0, %v566
        %v568 = vpop.f32.mrf.mxu0
        %v569 = vadd.f32 0.0, %v568
        %v570 = vpop.f32.mrf.mxu0
        %v571 = vadd.f32 0.0, %v570
        %572 = vmatprep.mubr.bf16.mxu0 0
        %573 = vmatmul.mubr.bf16.gmra.mxu0 %v444
        %v574 = vpop.f32.mrf.mxu0
        %v575 = vadd.f32 0.0, %v574
        %v576 = vpop.f32.mrf.mxu0
        %v577 = vadd.f32 0.0, %v576
        %v578 = vpop.f32.mrf.mxu0
        %v579 = vadd.f32 0.0, %v578
        %v580 = vpop.f32.mrf.mxu0
        %v581 = vadd.f32 0.0, %v580
        %582 = vmatprep.mubr.bf16.mxu0 0
        %583 = vmatmul.mubr.bf16.gmra.mxu0 %v447
        %v584 = vpop.f32.mrf.mxu0
        %v585 = vadd.f32 0.0, %v584
        %v586 = vpop.f32.mrf.mxu0
        %v587 = vadd.f32 0.0, %v586
        %v588 = vpop.f32.mrf.mxu0
        %v589 = vadd.f32 0.0, %v588
        %v590 = vpop.f32.mrf.mxu0
        %v591 = vadd.f32 0.0, %v590
        %592 = vmatprep.mubr.bf16.mxu0 0
        %593 = vmatmul.mubr.bf16.gmra.mxu0 %v450
        %v594 = vpop.f32.mrf.mxu0
        %v595 = vadd.f32 0.0, %v594
        %v596 = vpop.f32.mrf.mxu0
        %v597 = vadd.f32 0.0, %v596
        %v598 = vpop.f32.mrf.mxu0
        %v599 = vadd.f32 0.0, %v598
        %v600 = vpop.f32.mrf.mxu0
        %v601 = vadd.f32 0.0, %v600
        %602 = vmatprep.mubr.bf16.mxu0 0
        %603 = vmatmul.mubr.bf16.gmra.mxu0 %v453
        %v604 = vpop.f32.mrf.mxu0
        %v605 = vadd.f32 0.0, %v604
        %v606 = vpop.f32.mrf.mxu0
        %v607 = vadd.f32 0.0, %v606
        %v608 = vpop.f32.mrf.mxu0
        %v609 = vadd.f32 0.0, %v608
        %v610 = vpop.f32.mrf.mxu0
        %v611 = vadd.f32 0.0, %v610
        %612 = vmatprep.mubr.bf16.mxu0 0
        %613 = vmatmul.mubr.bf16.gmra.mxu0 %v456
        %v614 = vpop.f32.mrf.mxu0
        %v615 = vadd.f32 0.0, %v614
        %v616 = vpop.f32.mrf.mxu0
        %v617 = vadd.f32 0.0, %v616
        %v618 = vpop.f32.mrf.mxu0
        %v619 = vadd.f32 0.0, %v618
        %v620 = vpop.f32.mrf.mxu0
        %v621 = vadd.f32 0.0, %v620
        %622 = vmatprep.mubr.bf16.mxu0 0
        %623 = vmatmul.mubr.bf16.gmra.mxu0 %v459
        %v624 = vpop.f32.mrf.mxu0
        %v625 = vadd.f32 0.0, %v624
        %v626 = vpop.f32.mrf.mxu0
        %v627 = vadd.f32 0.0, %v626
        %v628 = vpop.f32.mrf.mxu0
        %v629 = vadd.f32 0.0, %v628
        %v630 = vpop.f32.mrf.mxu0
        %v631 = vadd.f32 0.0, %v630
        %632 = vmatprep.mubr.bf16.mxu0 0
        %633 = vmatmul.mubr.bf16.gmra.mxu0 %v462
        %v634 = vpop.f32.mrf.mxu0
        %v635 = vadd.f32 0.0, %v634
        %v636 = vpop.f32.mrf.mxu0
        %v637 = vadd.f32 0.0, %v636
        %v638 = vpop.f32.mrf.mxu0
        %v639 = vadd.f32 0.0, %v638
        %v640 = vpop.f32.mrf.mxu0
        %v641 = vadd.f32 0.0, %v640
        %642 = vmatprep.mubr.bf16.mxu0 0
        %643 = vmatmul.mubr.bf16.gmra.mxu0 %v465
        %v644 = vpop.f32.mrf.mxu0
        %v645 = vadd.f32 0.0, %v644
        %v646 = vpop.f32.mrf.mxu0
        %v647 = vadd.f32 0.0, %v646
        %v648 = vpop.f32.mrf.mxu0
        %v649 = vadd.f32 0.0, %v648
        %v650 = vpop.f32.mrf.mxu0
        %v651 = vadd.f32 0.0, %v650
        %652 = vmatprep.mubr.bf16.mxu0 0
        %653 = vmatmul.mubr.bf16.gmra.mxu0 %v468
        %v654 = vpop.f32.mrf.mxu0
        %v655 = vadd.f32 0.0, %v654
        %v656 = vpop.f32.mrf.mxu0
        %v657 = vadd.f32 0.0, %v656
        %v658 = vpop.f32.mrf.mxu0
        %v659 = vadd.f32 0.0, %v658
        %v660 = vpop.f32.mrf.mxu0
        %v661 = vadd.f32 0.0, %v660
        %662 = vdwg.mxu0
        %v663 = vsub.f32 0.0, %v505
        %v664 = vsub.f32 0.0, %v507
        %v665 = vsub.f32 0.0, %v509
        %v666 = vsub.f32 0.0, %v511
        %v667 = vsub.f32 0.0, %v515
        %v668 = vsub.f32 0.0, %v517
        %v669 = vsub.f32 0.0, %v519
        %v670 = vsub.f32 0.0, %v521
        %v671 = vsub.f32 0.0, %v525
        %v672 = vsub.f32 0.0, %v527
        %v673 = vsub.f32 0.0, %v529
        %v674 = vsub.f32 0.0, %v531
        %v675 = vsub.f32 0.0, %v535
        %v676 = vsub.f32 0.0, %v537
        %v677 = vsub.f32 0.0, %v539
        %v678 = vsub.f32 0.0, %v541
        %v679 = vsub.f32 0.0, %v545
        %v680 = vsub.f32 0.0, %v547
        %v681 = vsub.f32 0.0, %v549
        %v682 = vsub.f32 0.0, %v551
        %v683 = vsub.f32 0.0, %v555
        %v684 = vsub.f32 0.0, %v557
        %v685 = vsub.f32 0.0, %v559
        %v686 = vsub.f32 0.0, %v561
        %v687 = vsub.f32 0.0, %v565
        %v688 = vsub.f32 0.0, %v567
        %v689 = vsub.f32 0.0, %v569
        %v690 = vsub.f32 0.0, %v571
        %v691 = vsub.f32 0.0, %v575
        %v692 = vsub.f32 0.0, %v577
        %v693 = vsub.f32 0.0, %v579
        %v694 = vsub.f32 0.0, %v581
        %v695 = vsub.f32 0.0, %v585
        %v696 = vsub.f32 0.0, %v587
        %v697 = vsub.f32 0.0, %v589
        %v698 = vsub.f32 0.0, %v591
        %v699 = vsub.f32 0.0, %v595
        %v700 = vsub.f32 0.0, %v597
        %v701 = vsub.f32 0.0, %v599
        %v702 = vsub.f32 0.0, %v601
        %v703 = vsub.f32 0.0, %v605
        %v704 = vsub.f32 0.0, %v607
        %v705 = vsub.f32 0.0, %v609
        %v706 = vsub.f32 0.0, %v611
        %v707 = vsub.f32 0.0, %v615
        %v708 = vsub.f32 0.0, %v617
        %v709 = vsub.f32 0.0, %v619
        %v710 = vsub.f32 0.0, %v621
        %v711 = vsub.f32 0.0, %v625
        %v712 = vsub.f32 0.0, %v627
        %v713 = vsub.f32 0.0, %v629
        %v714 = vsub.f32 0.0, %v631
        %v715 = vsub.f32 0.0, %v635
        %v716 = vsub.f32 0.0, %v637
        %v717 = vsub.f32 0.0, %v639
        %v718 = vsub.f32 0.0, %v641
        %v719 = vsub.f32 0.0, %v645
        %v720 = vsub.f32 0.0, %v647
        %v721 = vsub.f32 0.0, %v649
        %v722 = vsub.f32 0.0, %v651
        %v723 = vsub.f32 0.0, %v655
        %v724 = vsub.f32 0.0, %v657
        %v725 = vsub.f32 0.0, %v659
        %v726 = vsub.f32 0.0, %v661
        %v727 = vmul.f32 %v663, 1.442695
        %v728 = vpow.pop %v727
        %v729 = vmul.f32 %v664, 1.442695
        %v730 = vpow.pop %v729
        %v731 = vmul.f32 %v665, 1.442695
        %v732 = vpow.pop %v731
        %v733 = vmul.f32 %v666, 1.442695
        %v734 = vpow.pop %v733
        %v735 = vmul.f32 %v667, 1.442695
        %v736 = vpow.pop %v735
        %v737 = vmul.f32 %v668, 1.442695
        %v738 = vpow.pop %v737
        %v739 = vmul.f32 %v669, 1.442695
        %v740 = vpow.pop %v739
        %v741 = vmul.f32 %v670, 1.442695
        %v742 = vpow.pop %v741
        %v743 = vmul.f32 %v671, 1.442695
        %v744 = vpow.pop %v743
        %v745 = vmul.f32 %v672, 1.442695
        %v746 = vpow.pop %v745
        %v747 = vmul.f32 %v673, 1.442695
        %v748 = vpow.pop %v747
        %v749 = vmul.f32 %v674, 1.442695
        %v750 = vpow.pop %v749
        %v751 = vmul.f32 %v675, 1.442695
        %v752 = vpow.pop %v751
        %v753 = vmul.f32 %v676, 1.442695
        %v754 = vpow.pop %v753
        %v755 = vmul.f32 %v677, 1.442695
        %v756 = vpow.pop %v755
        %v757 = vmul.f32 %v678, 1.442695
        %v758 = vpow.pop %v757
        %v759 = vmul.f32 %v679, 1.442695
        %v760 = vpow.pop %v759
        %v761 = vmul.f32 %v680, 1.442695
        %v762 = vpow.pop %v761
        %v763 = vmul.f32 %v681, 1.442695
        %v764 = vpow.pop %v763
        %v765 = vmul.f32 %v682, 1.442695
        %v766 = vpow.pop %v765
        %v767 = vmul.f32 %v683, 1.442695
        %v768 = vpow.pop %v767
        %v769 = vmul.f32 %v684, 1.442695
        %v770 = vpow.pop %v769
        %v771 = vmul.f32 %v685, 1.442695
        %v772 = vpow.pop %v771
        %v773 = vmul.f32 %v686, 1.442695
        %v774 = vpow.pop %v773
        %v775 = vmul.f32 %v687, 1.442695
        %v776 = vpow.pop %v775
        %v777 = vmul.f32 %v688, 1.442695
        %v778 = vpow.pop %v777
        %v779 = vmul.f32 %v689, 1.442695
        %v780 = vpow.pop %v779
        %v781 = vmul.f32 %v690, 1.442695
        %v782 = vpow.pop %v781
        %v783 = vmul.f32 %v691, 1.442695
        %v784 = vpow.pop %v783
        %v785 = vmul.f32 %v692, 1.442695
        %v786 = vpow.pop %v785
        %v787 = vmul.f32 %v693, 1.442695
        %v788 = vpow.pop %v787
        %v789 = vmul.f32 %v694, 1.442695
        %v790 = vpow.pop %v789
        %v791 = vmul.f32 %v695, 1.442695
        %v792 = vpow.pop %v791
        %v793 = vmul.f32 %v696, 1.442695
        %v794 = vpow.pop %v793
        %v795 = vmul.f32 %v697, 1.442695
        %v796 = vpow.pop %v795
        %v797 = vmul.f32 %v698, 1.442695
        %v798 = vpow.pop %v797
        %v799 = vmul.f32 %v699, 1.442695
        %v800 = vpow.pop %v799
        %v801 = vmul.f32 %v700, 1.442695
        %v802 = vpow.pop %v801
        %v803 = vmul.f32 %v701, 1.442695
        %v804 = vpow.pop %v803
        %v805 = vmul.f32 %v702, 1.442695
        %v806 = vpow.pop %v805
        %v807 = vmul.f32 %v703, 1.442695
        %v808 = vpow.pop %v807
        %v809 = vmul.f32 %v704, 1.442695
        %v810 = vpow.pop %v809
        %v811 = vmul.f32 %v705, 1.442695
        %v812 = vpow.pop %v811
        %v813 = vmul.f32 %v706, 1.442695
        %v814 = vpow.pop %v813
        %v815 = vmul.f32 %v707, 1.442695
        %v816 = vpow.pop %v815
        %v817 = vmul.f32 %v708, 1.442695
        %v818 = vpow.pop %v817
        %v819 = vmul.f32 %v709, 1.442695
        %v820 = vpow.pop %v819
        %v821 = vmul.f32 %v710, 1.442695
        %v822 = vpow.pop %v821
        %v823 = vmul.f32 %v711, 1.442695
        %v824 = vpow.pop %v823
        %v825 = vmul.f32 %v712, 1.442695
        %v826 = vpow.pop %v825
        %v827 = vmul.f32 %v713, 1.442695
        %v828 = vpow.pop %v827
        %v829 = vmul.f32 %v714, 1.442695
        %v830 = vpow.pop %v829
        %v831 = vmul.f32 %v715, 1.442695
        %v832 = vpow.pop %v831
        %v833 = vmul.f32 %v716, 1.442695
        %v834 = vpow.pop %v833
        %v835 = vmul.f32 %v717, 1.442695
        %v836 = vpow.pop %v835
        %v837 = vmul.f32 %v718, 1.442695
        %v838 = vpow.pop %v837
        %v839 = vmul.f32 %v719, 1.442695
        %v840 = vpow.pop %v839
        %v841 = vmul.f32 %v720, 1.442695
        %v842 = vpow.pop %v841
        %v843 = vmul.f32 %v721, 1.442695
        %v844 = vpow.pop %v843
        %v845 = vmul.f32 %v722, 1.442695
        %v846 = vpow.pop %v845
        %v847 = vmul.f32 %v723, 1.442695
        %v848 = vpow.pop %v847
        %v849 = vmul.f32 %v724, 1.442695
        %v850 = vpow.pop %v849
        %v851 = vmul.f32 %v725, 1.442695
        %v852 = vpow.pop %v851
        %v853 = vmul.f32 %v726, 1.442695
        %v854 = vpow.pop %v853
        %v855 = vadd.f32 %v728, 1.0
        %v856 = vadd.f32 %v730, 1.0
        %v857 = vadd.f32 %v732, 1.0
        %v858 = vadd.f32 %v734, 1.0
        %v859 = vadd.f32 %v736, 1.0
        %v860 = vadd.f32 %v738, 1.0
        %v861 = vadd.f32 %v740, 1.0
        %v862 = vadd.f32 %v742, 1.0
        %v863 = vadd.f32 %v744, 1.0
        %v864 = vadd.f32 %v746, 1.0
        %v865 = vadd.f32 %v748, 1.0
        %v866 = vadd.f32 %v750, 1.0
        %v867 = vadd.f32 %v752, 1.0
        %v868 = vadd.f32 %v754, 1.0
        %v869 = vadd.f32 %v756, 1.0
        %v870 = vadd.f32 %v758, 1.0
        %v871 = vadd.f32 %v760, 1.0
        %v872 = vadd.f32 %v762, 1.0
        %v873 = vadd.f32 %v764, 1.0
        %v874 = vadd.f32 %v766, 1.0
        %v875 = vadd.f32 %v768, 1.0
        %v876 = vadd.f32 %v770, 1.0
        %v877 = vadd.f32 %v772, 1.0
        %v878 = vadd.f32 %v774, 1.0
        %v879 = vadd.f32 %v776, 1.0
        %v880 = vadd.f32 %v778, 1.0
        %v881 = vadd.f32 %v780, 1.0
        %v882 = vadd.f32 %v782, 1.0
        %v883 = vadd.f32 %v784, 1.0
        %v884 = vadd.f32 %v786, 1.0
        %v885 = vadd.f32 %v788, 1.0
        %v886 = vadd.f32 %v790, 1.0
        %v887 = vadd.f32 %v792, 1.0
        %v888 = vadd.f32 %v794, 1.0
        %v889 = vadd.f32 %v796, 1.0
        %v890 = vadd.f32 %v798, 1.0
        %v891 = vadd.f32 %v800, 1.0
        %v892 = vadd.f32 %v802, 1.0
        %v893 = vadd.f32 %v804, 1.0
        %v894 = vadd.f32 %v806, 1.0
        %v895 = vadd.f32 %v808, 1.0
        %v896 = vadd.f32 %v810, 1.0
        %v897 = vadd.f32 %v812, 1.0
        %v898 = vadd.f32 %v814, 1.0
        %v899 = vadd.f32 %v816, 1.0
        %v900 = vadd.f32 %v818, 1.0
        %v901 = vadd.f32 %v820, 1.0
        %v902 = vadd.f32 %v822, 1.0
        %v903 = vadd.f32 %v824, 1.0
        %v904 = vadd.f32 %v826, 1.0
        %v905 = vadd.f32 %v828, 1.0
        %v906 = vadd.f32 %v830, 1.0
        %v907 = vadd.f32 %v832, 1.0
        %v908 = vadd.f32 %v834, 1.0
        %v909 = vadd.f32 %v836, 1.0
        %v910 = vadd.f32 %v838, 1.0
        %v911 = vadd.f32 %v840, 1.0
        %v912 = vadd.f32 %v842, 1.0
        %v913 = vadd.f32 %v844, 1.0
        %v914 = vadd.f32 %v846, 1.0
        %v915 = vadd.f32 %v848, 1.0
        %v916 = vadd.f32 %v850, 1.0
        %v917 = vadd.f32 %v852, 1.0
        %v918 = vadd.f32 %v854, 1.0
        %v919 = vrcp.pop %v855
        %v920 = vmul.f32 1.0, %v919
        %v921 = vrcp.pop %v856
        %v922 = vmul.f32 1.0, %v921
        %v923 = vrcp.pop %v857
        %v924 = vmul.f32 1.0, %v923
        %v925 = vrcp.pop %v858
        %v926 = vmul.f32 1.0, %v925
        %v927 = vrcp.pop %v859
        %v928 = vmul.f32 1.0, %v927
        %v929 = vrcp.pop %v860
        %v930 = vmul.f32 1.0, %v929
        %v931 = vrcp.pop %v861
        %v932 = vmul.f32 1.0, %v931
        %v933 = vrcp.pop %v862
        %v934 = vmul.f32 1.0, %v933
        %v935 = vrcp.pop %v863
        %v936 = vmul.f32 1.0, %v935
        %v937 = vrcp.pop %v864
        %v938 = vmul.f32 1.0, %v937
        %v939 = vrcp.pop %v865
        %v940 = vmul.f32 1.0, %v939
        %v941 = vrcp.pop %v866
        %v942 = vmul.f32 1.0, %v941
        %v943 = vrcp.pop %v867
        %v944 = vmul.f32 1.0, %v943
        %v945 = vrcp.pop %v868
        %v946 = vmul.f32 1.0, %v945
        %v947 = vrcp.pop %v869
        %v948 = vmul.f32 1.0, %v947
        %v949 = vrcp.pop %v870
        %v950 = vmul.f32 1.0, %v949
        %v951 = vrcp.pop %v871
        %v952 = vmul.f32 1.0, %v951
        %v953 = vrcp.pop %v872
        %v954 = vmul.f32 1.0, %v953
        %v955 = vrcp.pop %v873
        %v956 = vmul.f32 1.0, %v955
        %v957 = vrcp.pop %v874
        %v958 = vmul.f32 1.0, %v957
        %v959 = vrcp.pop %v875
        %v960 = vmul.f32 1.0, %v959
        %v961 = vrcp.pop %v876
        %v962 = vmul.f32 1.0, %v961
        %v963 = vrcp.pop %v877
        %v964 = vmul.f32 1.0, %v963
        %v965 = vrcp.pop %v878
        %v966 = vmul.f32 1.0, %v965
        %v967 = vrcp.pop %v879
        %v968 = vmul.f32 1.0, %v967
        %v969 = vrcp.pop %v880
        %v970 = vmul.f32 1.0, %v969
        %v971 = vrcp.pop %v881
        %v972 = vmul.f32 1.0, %v971
        %v973 = vrcp.pop %v882
        %v974 = vmul.f32 1.0, %v973
        %v975 = vrcp.pop %v883
        %v976 = vmul.f32 1.0, %v975
        %v977 = vrcp.pop %v884
        %v978 = vmul.f32 1.0, %v977
        %v979 = vrcp.pop %v885
        %v980 = vmul.f32 1.0, %v979
        %v981 = vrcp.pop %v886
        %v982 = vmul.f32 1.0, %v981
        %v983 = vrcp.pop %v887
        %v984 = vmul.f32 1.0, %v983
        %v985 = vrcp.pop %v888
        %v986 = vmul.f32 1.0, %v985
        %v987 = vrcp.pop %v889
        %v988 = vmul.f32 1.0, %v987
        %v989 = vrcp.pop %v890
        %v990 = vmul.f32 1.0, %v989
        %v991 = vrcp.pop %v891
        %v992 = vmul.f32 1.0, %v991
        %v993 = vrcp.pop %v892
        %v994 = vmul.f32 1.0, %v993
        %v995 = vrcp.pop %v893
        %v996 = vmul.f32 1.0, %v995
        %v997 = vrcp.pop %v894
        %v998 = vmul.f32 1.0, %v997
        %v999 = vrcp.pop %v895
        %v1000 = vmul.f32 1.0, %v999
        %v1001 = vrcp.pop %v896
        %v1002 = vmul.f32 1.0, %v1001
        %v1003 = vrcp.pop %v897
        %v1004 = vmul.f32 1.0, %v1003
        %v1005 = vrcp.pop %v898
        %v1006 = vmul.f32 1.0, %v1005
        %v1007 = vrcp.pop %v899
        %v1008 = vmul.f32 1.0, %v1007
        %v1009 = vrcp.pop %v900
        %v1010 = vmul.f32 1.0, %v1009
        %v1011 = vrcp.pop %v901
        %v1012 = vmul.f32 1.0, %v1011
        %v1013 = vrcp.pop %v902
        %v1014 = vmul.f32 1.0, %v1013
        %v1015 = vrcp.pop %v903
        %v1016 = vmul.f32 1.0, %v1015
        %v1017 = vrcp.pop %v904
        %v1018 = vmul.f32 1.0, %v1017
        %v1019 = vrcp.pop %v905
        %v1020 = vmul.f32 1.0, %v1019
        %v1021 = vrcp.pop %v906
        %v1022 = vmul.f32 1.0, %v1021
        %v1023 = vrcp.pop %v907
        %v1024 = vmul.f32 1.0, %v1023
        %v1025 = vrcp.pop %v908
        %v1026 = vmul.f32 1.0, %v1025
        %v1027 = vrcp.pop %v909
        %v1028 = vmul.f32 1.0, %v1027
        %v1029 = vrcp.pop %v910
        %v1030 = vmul.f32 1.0, %v1029
        %v1031 = vrcp.pop %v911
        %v1032 = vmul.f32 1.0, %v1031
        %v1033 = vrcp.pop %v912
        %v1034 = vmul.f32 1.0, %v1033
        %v1035 = vrcp.pop %v913
        %v1036 = vmul.f32 1.0, %v1035
        %v1037 = vrcp.pop %v914
        %v1038 = vmul.f32 1.0, %v1037
        %v1039 = vrcp.pop %v915
        %v1040 = vmul.f32 1.0, %v1039
        %v1041 = vrcp.pop %v916
        %v1042 = vmul.f32 1.0, %v1041
        %v1043 = vrcp.pop %v917
        %v1044 = vmul.f32 1.0, %v1043
        %v1045 = vrcp.pop %v918
        %v1046 = vmul.f32 1.0, %v1045
        %v1047 = vmul.f32 %v505, %v920
        %v1048 = vmul.f32 %v507, %v922
        %v1049 = vmul.f32 %v509, %v924
        %v1050 = vmul.f32 %v511, %v926
        %v1051 = vmul.f32 %v515, %v928
        %v1052 = vmul.f32 %v517, %v930
        %v1053 = vmul.f32 %v519, %v932
        %v1054 = vmul.f32 %v521, %v934
        %v1055 = vmul.f32 %v525, %v936
        %v1056 = vmul.f32 %v527, %v938
        %v1057 = vmul.f32 %v529, %v940
        %v1058 = vmul.f32 %v531, %v942
        %v1059 = vmul.f32 %v535, %v944
        %v1060 = vmul.f32 %v537, %v946
        %v1061 = vmul.f32 %v539, %v948
        %v1062 = vmul.f32 %v541, %v950
        %v1063 = vmul.f32 %v545, %v952
        %v1064 = vmul.f32 %v547, %v954
        %v1065 = vmul.f32 %v549, %v956
        %v1066 = vmul.f32 %v551, %v958
        %v1067 = vmul.f32 %v555, %v960
        %v1068 = vmul.f32 %v557, %v962
        %v1069 = vmul.f32 %v559, %v964
        %v1070 = vmul.f32 %v561, %v966
        %v1071 = vmul.f32 %v565, %v968
        %v1072 = vmul.f32 %v567, %v970
        %v1073 = vmul.f32 %v569, %v972
        %v1074 = vmul.f32 %v571, %v974
        %v1075 = vmul.f32 %v575, %v976
        %v1076 = vmul.f32 %v577, %v978
        %v1077 = vmul.f32 %v579, %v980
        %v1078 = vmul.f32 %v581, %v982
        %v1079 = vmul.f32 %v585, %v984
        %v1080 = vmul.f32 %v587, %v986
        %v1081 = vmul.f32 %v589, %v988
        %v1082 = vmul.f32 %v591, %v990
        %v1083 = vmul.f32 %v595, %v992
        %v1084 = vmul.f32 %v597, %v994
        %v1085 = vmul.f32 %v599, %v996
        %v1086 = vmul.f32 %v601, %v998
        %v1087 = vmul.f32 %v605, %v1000
        %v1088 = vmul.f32 %v607, %v1002
        %v1089 = vmul.f32 %v609, %v1004
        %v1090 = vmul.f32 %v611, %v1006
        %v1091 = vmul.f32 %v615, %v1008
        %v1092 = vmul.f32 %v617, %v1010
        %v1093 = vmul.f32 %v619, %v1012
        %v1094 = vmul.f32 %v621, %v1014
        %v1095 = vmul.f32 %v625, %v1016
        %v1096 = vmul.f32 %v627, %v1018
        %v1097 = vmul.f32 %v629, %v1020
        %v1098 = vmul.f32 %v631, %v1022
        %v1099 = vmul.f32 %v635, %v1024
        %v1100 = vmul.f32 %v637, %v1026
        %v1101 = vmul.f32 %v639, %v1028
        %v1102 = vmul.f32 %v641, %v1030
        %v1103 = vmul.f32 %v645, %v1032
        %v1104 = vmul.f32 %v647, %v1034
        %v1105 = vmul.f32 %v649, %v1036
        %v1106 = vmul.f32 %v651, %v1038
        %v1107 = vmul.f32 %v655, %v1040
        %v1108 = vmul.f32 %v657, %v1042
        %v1109 = vmul.f32 %v659, %v1044
        %v1110 = vmul.f32 %v661, %v1046
        %1111 = vst [vmem:[#allocation2] sm:$0xff] 0.0
        %1112 = vst [vmem:[#allocation2 + $0x8] sm:$0xff] 0.0
        %1113 = vst [vmem:[#allocation2 + $0x10] sm:$0xff] 0.0
        %1114 = vst [vmem:[#allocation2 + $0x18] sm:$0xff] 0.0
        %1115 = vst [vmem:[#allocation2 + $0x20] sm:$0x3] 0.0
        %1116 = vst [vmem:[#allocation2 + $0x28] sm:$0x3] 0.0
        %1117 = vst [vmem:[#allocation2 + $0x30] sm:$0xff] 0.0
        %1118 = vst [vmem:[#allocation2 + $0x38] sm:$0xff] 0.0
        %1119 = vst [vmem:[#allocation2 + $0x40] sm:$0xff] 0.0
        %1120 = vst [vmem:[#allocation2 + $0x48] sm:$0xff] 0.0
        %1121 = vst [vmem:[#allocation2 + $0x50] sm:$0x3] 0.0
        %1122 = vst [vmem:[#allocation2 + $0x58] sm:$0x3] 0.0
        %1123 = vst [vmem:[#allocation2 + $0x60] sm:$0xff] 0.0
        %1124 = vst [vmem:[#allocation2 + $0x68] sm:$0xff] 0.0
        %1125 = vst [vmem:[#allocation2 + $0x70] sm:$0xff] 0.0
        %1126 = vst [vmem:[#allocation2 + $0x78] sm:$0xff] 0.0
        %1127 = vst [vmem:[#allocation2 + $0x80] sm:$0x3] 0.0
        %1128 = vst [vmem:[#allocation2 + $0x88] sm:$0x3] 0.0
        %1129 = vst [vmem:[#allocation2 + $0x90] sm:$0xff] 0.0
        %1130 = vst [vmem:[#allocation2 + $0x98] sm:$0xff] 0.0
        %1131 = vst [vmem:[#allocation2 + $0xa0] sm:$0xff] 0.0
        %1132 = vst [vmem:[#allocation2 + $0xa8] sm:$0xff] 0.0
        %1133 = vst [vmem:[#allocation2 + $0xb0] sm:$0x3] 0.0
        %1134 = vst [vmem:[#allocation2 + $0xb8] sm:$0x3] 0.0
        %1135 = vst [vmem:[#allocation2 + $0xc0] sm:$0xff] 0.0
        %1136 = vst [vmem:[#allocation2 + $0xc8] sm:$0xff] 0.0
        %1137 = vst [vmem:[#allocation2 + $0xd0] sm:$0xff] 0.0
        %1138 = vst [vmem:[#allocation2 + $0xd8] sm:$0xff] 0.0
        %1139 = vst [vmem:[#allocation2 + $0xe0] sm:$0x3] 0.0
        %1140 = vst [vmem:[#allocation2 + $0xe8] sm:$0x3] 0.0
        %1141 = vst [vmem:[#allocation2 + $0xf0] sm:$0xff] 0.0
        %1142 = vst [vmem:[#allocation2 + $0xf8] sm:$0xff] 0.0
        %1143 = vst [vmem:[#allocation2 + $0x100] sm:$0xff] 0.0
        %1144 = vst [vmem:[#allocation2 + $0x108] sm:$0xff] 0.0
        %1145 = vst [vmem:[#allocation2 + $0x110] sm:$0x3] 0.0
        %1146 = vst [vmem:[#allocation2 + $0x118] sm:$0x3] 0.0
        %1147 = vst [vmem:[#allocation2 + $0x120] sm:$0xff] 0.0
        %1148 = vst [vmem:[#allocation2 + $0x128] sm:$0xff] 0.0
        %1149 = vst [vmem:[#allocation2 + $0x130] sm:$0xff] 0.0
        %1150 = vst [vmem:[#allocation2 + $0x138] sm:$0xff] 0.0
        %1151 = vst [vmem:[#allocation2 + $0x140] sm:$0x3] 0.0
        %1152 = vst [vmem:[#allocation2 + $0x148] sm:$0x3] 0.0
        %1153 = vst [vmem:[#allocation2 + $0x150] sm:$0xff] 0.0
        %1154 = vst [vmem:[#allocation2 + $0x158] sm:$0xff] 0.0
        %1155 = vst [vmem:[#allocation2 + $0x160] sm:$0xff] 0.0
        %1156 = vst [vmem:[#allocation2 + $0x168] sm:$0xff] 0.0
        %1157 = vst [vmem:[#allocation2 + $0x170] sm:$0x3] 0.0
        %1158 = vst [vmem:[#allocation2 + $0x178] sm:$0x3] 0.0
        %1159 = vst [vmem:[#allocation2 + $0x180] sm:$0xff] 0.0
        %1160 = vst [vmem:[#allocation2 + $0x188] sm:$0xff] 0.0
        %1161 = vst [vmem:[#allocation2 + $0x190] sm:$0xff] 0.0
        %1162 = vst [vmem:[#allocation2 + $0x198] sm:$0xff] 0.0
        %1163 = vst [vmem:[#allocation2 + $0x1a0] sm:$0x3] 0.0
        %1164 = vst [vmem:[#allocation2 + $0x1a8] sm:$0x3] 0.0
        %1165 = vst [vmem:[#allocation2 + $0x1b0] sm:$0xff] 0.0
        %1166 = vst [vmem:[#allocation2 + $0x1b8] sm:$0xff] 0.0
        %1167 = vst [vmem:[#allocation2 + $0x1c0] sm:$0xff] 0.0
        %1168 = vst [vmem:[#allocation2 + $0x1c8] sm:$0xff] 0.0
        %1169 = vst [vmem:[#allocation2 + $0x1d0] sm:$0x3] 0.0
        %1170 = vst [vmem:[#allocation2 + $0x1d8] sm:$0x3] 0.0
        %1171 = vst [vmem:[#allocation2 + $0x1e0] sm:$0xff] 0.0
        %1172 = vst [vmem:[#allocation2 + $0x1e8] sm:$0xff] 0.0
        %1173 = vst [vmem:[#allocation2 + $0x1f0] sm:$0xff] 0.0
        %1174 = vst [vmem:[#allocation2 + $0x1f8] sm:$0xff] 0.0
        %1175 = vst [vmem:[#allocation2 + $0x200] sm:$0x3] 0.0
        %1176 = vst [vmem:[#allocation2 + $0x208] sm:$0x3] 0.0
        %1177 = vst [vmem:[#allocation2 + $0x210] sm:$0xff] 0.0
        %1178 = vst [vmem:[#allocation2 + $0x218] sm:$0xff] 0.0
        %1179 = vst [vmem:[#allocation2 + $0x220] sm:$0xff] 0.0
        %1180 = vst [vmem:[#allocation2 + $0x228] sm:$0xff] 0.0
        %1181 = vst [vmem:[#allocation2 + $0x230] sm:$0x3] 0.0
        %1182 = vst [vmem:[#allocation2 + $0x238] sm:$0x3] 0.0
        %1183 = vst [vmem:[#allocation2 + $0x240] sm:$0xff] 0.0
        %1184 = vst [vmem:[#allocation2 + $0x248] sm:$0xff] 0.0
        %1185 = vst [vmem:[#allocation2 + $0x250] sm:$0xff] 0.0
        %1186 = vst [vmem:[#allocation2 + $0x258] sm:$0xff] 0.0
        %1187 = vst [vmem:[#allocation2 + $0x260] sm:$0x3] 0.0
        %1188 = vst [vmem:[#allocation2 + $0x268] sm:$0x3] 0.0
        %1189 = vst [vmem:[#allocation2 + $0x270] sm:$0xff] 0.0
        %1190 = vst [vmem:[#allocation2 + $0x278] sm:$0xff] 0.0
        %1191 = vst [vmem:[#allocation2 + $0x280] sm:$0xff] 0.0
        %1192 = vst [vmem:[#allocation2 + $0x288] sm:$0xff] 0.0
        %1193 = vst [vmem:[#allocation2 + $0x290] sm:$0x3] 0.0
        %1194 = vst [vmem:[#allocation2 + $0x298] sm:$0x3] 0.0
        %1195 = vst [vmem:[#allocation2 + $0x2a0] sm:$0xff] 0.0
        %1196 = vst [vmem:[#allocation2 + $0x2a8] sm:$0xff] 0.0
        %1197 = vst [vmem:[#allocation2 + $0x2b0] sm:$0xff] 0.0
        %1198 = vst [vmem:[#allocation2 + $0x2b8] sm:$0xff] 0.0
        %1199 = vst [vmem:[#allocation2 + $0x2c0] sm:$0x3] 0.0
        %1200 = vst [vmem:[#allocation2 + $0x2c8] sm:$0x3] 0.0
        %1201 = vst [vmem:[#allocation2 + $0x2d0] sm:$0xff] 0.0
        %1202 = vst [vmem:[#allocation2 + $0x2d8] sm:$0xff] 0.0
        %1203 = vst [vmem:[#allocation2 + $0x2e0] sm:$0xff] 0.0
        %1204 = vst [vmem:[#allocation2 + $0x2e8] sm:$0xff] 0.0
        %1205 = vst [vmem:[#allocation2 + $0x2f0] sm:$0x3] 0.0
        %1206 = vst [vmem:[#allocation2 + $0x2f8] sm:$0x3] 0.0
        %1207 = vst [vmem:[#allocation2 + $0x300] sm:$0xff] 0.0
        %1208 = vst [vmem:[#allocation2 + $0x308] sm:$0xff] 0.0
        %1209 = vst [vmem:[#allocation2 + $0x310] sm:$0xff] 0.0
        %1210 = vst [vmem:[#allocation2 + $0x318] sm:$0xff] 0.0
        %1211 = vst [vmem:[#allocation2 + $0x320] sm:$0x3] 0.0
        %1212 = vst [vmem:[#allocation2 + $0x328] sm:$0x3] 0.0
        %1213 = vst [vmem:[#allocation2 + $0x330] sm:$0xff] 0.0
        %1214 = vst [vmem:[#allocation2 + $0x338] sm:$0xff] 0.0
        %1215 = vst [vmem:[#allocation2 + $0x340] sm:$0xff] 0.0
        %1216 = vst [vmem:[#allocation2 + $0x348] sm:$0xff] 0.0
        %1217 = vst [vmem:[#allocation2 + $0x350] sm:$0x3] 0.0
        %1218 = vst [vmem:[#allocation2 + $0x358] sm:$0x3] 0.0
        %vm1283 = vcmask 1040384
        %v1284 = vrot.slane %v1047, 7
        %v1285 = vrot.slane %v1048, 7
        %v1286 = vrot.slane %v1049, 7
        %v1287 = vsel %vm1283, %v1284, %v1286
        %v1288 = vrot.slane %v1050, 7
        %v1289 = vsel %vm1283, %v1285, %v1288
        %v1290 = vrot.slane %v1051, 7
        %v1291 = vrot.slane %v1052, 7
        %v1292 = vrot.slane %v1053, 7
        %v1293 = vsel %vm1283, %v1290, %v1292
        %v1294 = vrot.slane %v1054, 7
        %v1295 = vsel %vm1283, %v1291, %v1294
        %v1296 = vrot.slane %v1055, 7
        %v1297 = vrot.slane %v1056, 7
        %v1298 = vrot.slane %v1057, 7
        %v1299 = vsel %vm1283, %v1296, %v1298
        %v1300 = vrot.slane %v1058, 7
        %v1301 = vsel %vm1283, %v1297, %v1300
        %v1302 = vrot.slane %v1059, 7
        %v1303 = vrot.slane %v1060, 7
        %v1304 = vrot.slane %v1061, 7
        %v1305 = vsel %vm1283, %v1302, %v1304
        %v1306 = vrot.slane %v1062, 7
        %v1307 = vsel %vm1283, %v1303, %v1306
        %v1308 = vrot.slane %v1063, 7
        %v1309 = vrot.slane %v1064, 7
        %v1310 = vrot.slane %v1065, 7
        %v1311 = vsel %vm1283, %v1308, %v1310
        %v1312 = vrot.slane %v1066, 7
        %v1313 = vsel %vm1283, %v1309, %v1312
        %v1314 = vrot.slane %v1067, 7
        %v1315 = vrot.slane %v1068, 7
        %v1316 = vrot.slane %v1069, 7
        %v1317 = vsel %vm1283, %v1314, %v1316
        %v1318 = vrot.slane %v1070, 7
        %v1319 = vsel %vm1283, %v1315, %v1318
        %v1320 = vrot.slane %v1071, 7
        %v1321 = vrot.slane %v1072, 7
        %v1322 = vrot.slane %v1073, 7
        %v1323 = vsel %vm1283, %v1320, %v1322
        %v1324 = vrot.slane %v1074, 7
        %v1325 = vsel %vm1283, %v1321, %v1324
        %v1326 = vrot.slane %v1075, 7
        %v1327 = vrot.slane %v1076, 7
        %v1328 = vrot.slane %v1077, 7
        %v1329 = vsel %vm1283, %v1326, %v1328
        %v1330 = vrot.slane %v1078, 7
        %v1331 = vsel %vm1283, %v1327, %v1330
        %v1332 = vrot.slane %v1079, 7
        %v1333 = vrot.slane %v1080, 7
        %v1334 = vrot.slane %v1081, 7
        %v1335 = vsel %vm1283, %v1332, %v1334
        %v1336 = vrot.slane %v1082, 7
        %v1337 = vsel %vm1283, %v1333, %v1336
        %v1338 = vrot.slane %v1083, 7
        %v1339 = vrot.slane %v1084, 7
        %v1340 = vrot.slane %v1085, 7
        %v1341 = vsel %vm1283, %v1338, %v1340
        %v1342 = vrot.slane %v1086, 7
        %v1343 = vsel %vm1283, %v1339, %v1342
        %v1344 = vrot.slane %v1087, 7
        %v1345 = vrot.slane %v1088, 7
        %v1346 = vrot.slane %v1089, 7
        %v1347 = vsel %vm1283, %v1344, %v1346
        %v1348 = vrot.slane %v1090, 7
        %v1349 = vsel %vm1283, %v1345, %v1348
        %v1350 = vrot.slane %v1091, 7
        %v1351 = vrot.slane %v1092, 7
        %v1352 = vrot.slane %v1093, 7
        %v1353 = vsel %vm1283, %v1350, %v1352
        %v1354 = vrot.slane %v1094, 7
        %v1355 = vsel %vm1283, %v1351, %v1354
        %v1356 = vrot.slane %v1095, 7
        %v1357 = vrot.slane %v1096, 7
        %v1358 = vrot.slane %v1097, 7
        %v1359 = vsel %vm1283, %v1356, %v1358
        %v1360 = vrot.slane %v1098, 7
        %v1361 = vsel %vm1283, %v1357, %v1360
        %v1362 = vrot.slane %v1099, 7
        %v1363 = vrot.slane %v1100, 7
        %v1364 = vrot.slane %v1101, 7
        %v1365 = vsel %vm1283, %v1362, %v1364
        %v1366 = vrot.slane %v1102, 7
        %v1367 = vsel %vm1283, %v1363, %v1366
        %v1368 = vrot.slane %v1103, 7
        %v1369 = vrot.slane %v1104, 7
        %v1370 = vrot.slane %v1105, 7
        %v1371 = vsel %vm1283, %v1368, %v1370
        %v1372 = vrot.slane %v1106, 7
        %v1373 = vsel %vm1283, %v1369, %v1372
        %v1374 = vrot.slane %v1107, 7
        %v1375 = vrot.slane %v1108, 7
        %v1376 = vrot.slane %v1109, 7
        %v1377 = vsel %vm1283, %v1374, %v1376
        %v1378 = vrot.slane %v1110, 7
        %v1379 = vsel %vm1283, %v1375, %v1378
        %s1476 = scalar_lea.vmem [#allocation2], 48
        %1477 = vst [vmem:[%s1476] sm:$0xfe] %v1284
        %1478 = vst [vmem:[%s1476 + $0x8] sm:$0xfe] %v1285
        %1479 = vst [vmem:[%s1476 + $0x10] sm:$0xff] %v1287
        %1480 = vst [vmem:[%s1476 + $0x18] sm:$0xff] %v1289
        %1481 = vst [vmem:[%s1476 + $0x20] sm:$0x1] %v1286
        %1482 = vst [vmem:[%s1476 + $0x28] sm:$0x1] %v1288
        %1483 = vst [vmem:[%s1476 + $0x30] sm:$0xfe] %v1290
        %1484 = vst [vmem:[%s1476 + $0x38] sm:$0xfe] %v1291
        %1485 = vst [vmem:[%s1476 + $0x40] sm:$0xff] %v1293
        %1486 = vst [vmem:[%s1476 + $0x48] sm:$0xff] %v1295
        %1487 = vst [vmem:[%s1476 + $0x50] sm:$0x1] %v1292
        %1488 = vst [vmem:[%s1476 + $0x58] sm:$0x1] %v1294
        %1489 = vst [vmem:[%s1476 + $0x60] sm:$0xfe] %v1296
        %1490 = vst [vmem:[%s1476 + $0x68] sm:$0xfe] %v1297
        %1491 = vst [vmem:[%s1476 + $0x70] sm:$0xff] %v1299
        %1492 = vst [vmem:[%s1476 + $0x78] sm:$0xff] %v1301
        %1493 = vst [vmem:[%s1476 + $0x80] sm:$0x1] %v1298
        %1494 = vst [vmem:[%s1476 + $0x88] sm:$0x1] %v1300
        %1495 = vst [vmem:[%s1476 + $0x90] sm:$0xfe] %v1302
        %1496 = vst [vmem:[%s1476 + $0x98] sm:$0xfe] %v1303
        %1497 = vst [vmem:[%s1476 + $0xa0] sm:$0xff] %v1305
        %1498 = vst [vmem:[%s1476 + $0xa8] sm:$0xff] %v1307
        %1499 = vst [vmem:[%s1476 + $0xb0] sm:$0x1] %v1304
        %1500 = vst [vmem:[%s1476 + $0xb8] sm:$0x1] %v1306
        %1501 = vst [vmem:[%s1476 + $0xc0] sm:$0xfe] %v1308
        %1502 = vst [vmem:[%s1476 + $0xc8] sm:$0xfe] %v1309
        %1503 = vst [vmem:[%s1476 + $0xd0] sm:$0xff] %v1311
        %1504 = vst [vmem:[%s1476 + $0xd8] sm:$0xff] %v1313
        %1505 = vst [vmem:[%s1476 + $0xe0] sm:$0x1] %v1310
        %1506 = vst [vmem:[%s1476 + $0xe8] sm:$0x1] %v1312
        %1507 = vst [vmem:[%s1476 + $0xf0] sm:$0xfe] %v1314
        %1508 = vst [vmem:[%s1476 + $0xf8] sm:$0xfe] %v1315
        %1509 = vst [vmem:[%s1476 + $0x100] sm:$0xff] %v1317
        %1510 = vst [vmem:[%s1476 + $0x108] sm:$0xff] %v1319
        %1511 = vst [vmem:[%s1476 + $0x110] sm:$0x1] %v1316
        %1512 = vst [vmem:[%s1476 + $0x118] sm:$0x1] %v1318
        %1513 = vst [vmem:[%s1476 + $0x120] sm:$0xfe] %v1320
        %1514 = vst [vmem:[%s1476 + $0x128] sm:$0xfe] %v1321
        %1515 = vst [vmem:[%s1476 + $0x130] sm:$0xff] %v1323
        %1516 = vst [vmem:[%s1476 + $0x138] sm:$0xff] %v1325
        %1517 = vst [vmem:[%s1476 + $0x140] sm:$0x1] %v1322
        %1518 = vst [vmem:[%s1476 + $0x148] sm:$0x1] %v1324
        %1519 = vst [vmem:[%s1476 + $0x150] sm:$0xfe] %v1326
        %1520 = vst [vmem:[%s1476 + $0x158] sm:$0xfe] %v1327
        %1521 = vst [vmem:[%s1476 + $0x160] sm:$0xff] %v1329
        %1522 = vst [vmem:[%s1476 + $0x168] sm:$0xff] %v1331
        %1523 = vst [vmem:[%s1476 + $0x170] sm:$0x1] %v1328
        %1524 = vst [vmem:[%s1476 + $0x178] sm:$0x1] %v1330
        %1525 = vst [vmem:[%s1476 + $0x180] sm:$0xfe] %v1332
        %1526 = vst [vmem:[%s1476 + $0x188] sm:$0xfe] %v1333
        %1527 = vst [vmem:[%s1476 + $0x190] sm:$0xff] %v1335
        %1528 = vst [vmem:[%s1476 + $0x198] sm:$0xff] %v1337
        %1529 = vst [vmem:[%s1476 + $0x1a0] sm:$0x1] %v1334
        %1530 = vst [vmem:[%s1476 + $0x1a8] sm:$0x1] %v1336
        %1531 = vst [vmem:[%s1476 + $0x1b0] sm:$0xfe] %v1338
        %1532 = vst [vmem:[%s1476 + $0x1b8] sm:$0xfe] %v1339
        %1533 = vst [vmem:[%s1476 + $0x1c0] sm:$0xff] %v1341
        %1534 = vst [vmem:[%s1476 + $0x1c8] sm:$0xff] %v1343
        %1535 = vst [vmem:[%s1476 + $0x1d0] sm:$0x1] %v1340
        %1536 = vst [vmem:[%s1476 + $0x1d8] sm:$0x1] %v1342
        %1537 = vst [vmem:[%s1476 + $0x1e0] sm:$0xfe] %v1344
        %1538 = vst [vmem:[%s1476 + $0x1e8] sm:$0xfe] %v1345
        %1539 = vst [vmem:[%s1476 + $0x1f0] sm:$0xff] %v1347
        %1540 = vst [vmem:[%s1476 + $0x1f8] sm:$0xff] %v1349
        %1541 = vst [vmem:[%s1476 + $0x200] sm:$0x1] %v1346
        %1542 = vst [vmem:[%s1476 + $0x208] sm:$0x1] %v1348
        %1543 = vst [vmem:[%s1476 + $0x210] sm:$0xfe] %v1350
        %1544 = vst [vmem:[%s1476 + $0x218] sm:$0xfe] %v1351
        %1545 = vst [vmem:[%s1476 + $0x220] sm:$0xff] %v1353
        %1546 = vst [vmem:[%s1476 + $0x228] sm:$0xff] %v1355
        %1547 = vst [vmem:[%s1476 + $0x230] sm:$0x1] %v1352
        %1548 = vst [vmem:[%s1476 + $0x238] sm:$0x1] %v1354
        %1549 = vst [vmem:[%s1476 + $0x240] sm:$0xfe] %v1356
        %1550 = vst [vmem:[%s1476 + $0x248] sm:$0xfe] %v1357
        %1551 = vst [vmem:[%s1476 + $0x250] sm:$0xff] %v1359
        %1552 = vst [vmem:[%s1476 + $0x258] sm:$0xff] %v1361
        %1553 = vst [vmem:[%s1476 + $0x260] sm:$0x1] %v1358
        %1554 = vst [vmem:[%s1476 + $0x268] sm:$0x1] %v1360
        %1555 = vst [vmem:[%s1476 + $0x270] sm:$0xfe] %v1362
        %1556 = vst [vmem:[%s1476 + $0x278] sm:$0xfe] %v1363
        %1557 = vst [vmem:[%s1476 + $0x280] sm:$0xff] %v1365
        %1558 = vst [vmem:[%s1476 + $0x288] sm:$0xff] %v1367
        %1559 = vst [vmem:[%s1476 + $0x290] sm:$0x1] %v1364
        %1560 = vst [vmem:[%s1476 + $0x298] sm:$0x1] %v1366
        %1561 = vst [vmem:[%s1476 + $0x2a0] sm:$0xfe] %v1368
        %1562 = vst [vmem:[%s1476 + $0x2a8] sm:$0xfe] %v1369
        %1563 = vst [vmem:[%s1476 + $0x2b0] sm:$0xff] %v1371
        %1564 = vst [vmem:[%s1476 + $0x2b8] sm:$0xff] %v1373
        %1565 = vst [vmem:[%s1476 + $0x2c0] sm:$0x1] %v1370
        %1566 = vst [vmem:[%s1476 + $0x2c8] sm:$0x1] %v1372
        %1567 = vst [vmem:[%s1476 + $0x2d0] sm:$0xfe] %v1374
        %1568 = vst [vmem:[%s1476 + $0x2d8] sm:$0xfe] %v1375
        %1569 = vst [vmem:[%s1476 + $0x2e0] sm:$0xff] %v1377
        %1570 = vst [vmem:[%s1476 + $0x2e8] sm:$0xff] %v1379
        %1571 = vst [vmem:[%s1476 + $0x2f0] sm:$0x1] %v1376
        %1572 = vst [vmem:[%s1476 + $0x2f8] sm:$0x1] %v1378
        %v1573 = vld [vmem:[%s2] sm:$0xff]
        %v1574 = vld [vmem:[%s2 + $0x8] sm:$0xff]
        %v1575 = vld [vmem:[%s2 + $0x10] sm:$0x1]
        %v1576 = vld [vmem:[%s2 + $0x18] sm:$0x1]
        %v1577 = vld [vmem:[#allocation2] sm:$0xff]
        %v1578 = vld [vmem:[#allocation2 + $0x8] sm:$0xff]
        %v1579 = vld [vmem:[#allocation2 + $0x10] sm:$0xff]
        %v1580 = vld [vmem:[#allocation2 + $0x18] sm:$0xff]
        %v1581 = vld [vmem:[#allocation2 + $0x30] sm:$0xff]
        %v1582 = vld [vmem:[#allocation2 + $0x38] sm:$0xff]
        %v1583 = vld [vmem:[#allocation2 + $0x40] sm:$0xff]
        %v1584 = vld [vmem:[#allocation2 + $0x48] sm:$0xff]
        %v1585 = vld [vmem:[#allocation2 + $0x60] sm:$0xff]
        %v1586 = vld [vmem:[#allocation2 + $0x68] sm:$0xff]
        %v1587 = vld [vmem:[#allocation2 + $0x70] sm:$0xff]
        %v1588 = vld [vmem:[#allocation2 + $0x78] sm:$0xff]
        %v1589 = vld [vmem:[#allocation2 + $0x90] sm:$0xff]
        %v1590 = vld [vmem:[#allocation2 + $0x98] sm:$0xff]
        %v1591 = vld [vmem:[#allocation2 + $0xa0] sm:$0xff]
        %v1592 = vld [vmem:[#allocation2 + $0xa8] sm:$0xff]
        %v1593 = vld [vmem:[#allocation2 + $0xc0] sm:$0xff]
        %v1594 = vld [vmem:[#allocation2 + $0xc8] sm:$0xff]
        %v1595 = vld [vmem:[#allocation2 + $0xd0] sm:$0xff]
        %v1596 = vld [vmem:[#allocation2 + $0xd8] sm:$0xff]
        %v1597 = vld [vmem:[#allocation2 + $0xf0] sm:$0xff]
        %v1598 = vld [vmem:[#allocation2 + $0xf8] sm:$0xff]
        %v1599 = vld [vmem:[#allocation2 + $0x100] sm:$0xff]
        %v1600 = vld [vmem:[#allocation2 + $0x108] sm:$0xff]
        %v1601 = vld [vmem:[#allocation2 + $0x120] sm:$0xff]
        %v1602 = vld [vmem:[#allocation2 + $0x128] sm:$0xff]
        %v1603 = vld [vmem:[#allocation2 + $0x130] sm:$0xff]
        %v1604 = vld [vmem:[#allocation2 + $0x138] sm:$0xff]
        %v1605 = vld [vmem:[#allocation2 + $0x150] sm:$0xff]
        %v1606 = vld [vmem:[#allocation2 + $0x158] sm:$0xff]
        %v1607 = vld [vmem:[#allocation2 + $0x160] sm:$0xff]
        %v1608 = vld [vmem:[#allocation2 + $0x168] sm:$0xff]
        %v1609 = vld [vmem:[#allocation2 + $0x180] sm:$0xff]
        %v1610 = vld [vmem:[#allocation2 + $0x188] sm:$0xff]
        %v1611 = vld [vmem:[#allocation2 + $0x190] sm:$0xff]
        %v1612 = vld [vmem:[#allocation2 + $0x198] sm:$0xff]
        %v1613 = vld [vmem:[#allocation2 + $0x1b0] sm:$0xff]
        %v1614 = vld [vmem:[#allocation2 + $0x1b8] sm:$0xff]
        %v1615 = vld [vmem:[#allocation2 + $0x1c0] sm:$0xff]
        %v1616 = vld [vmem:[#allocation2 + $0x1c8] sm:$0xff]
        %v1617 = vld [vmem:[#allocation2 + $0x1e0] sm:$0xff]
        %v1618 = vld [vmem:[#allocation2 + $0x1e8] sm:$0xff]
        %v1619 = vld [vmem:[#allocation2 + $0x1f0] sm:$0xff]
        %v1620 = vld [vmem:[#allocation2 + $0x1f8] sm:$0xff]
        %v1621 = vld [vmem:[#allocation2 + $0x210] sm:$0xff]
        %v1622 = vld [vmem:[#allocation2 + $0x218] sm:$0xff]
        %v1623 = vld [vmem:[#allocation2 + $0x220] sm:$0xff]
        %v1624 = vld [vmem:[#allocation2 + $0x228] sm:$0xff]
        %v1625 = vld [vmem:[#allocation2 + $0x240] sm:$0xff]
        %v1626 = vld [vmem:[#allocation2 + $0x248] sm:$0xff]
        %v1627 = vld [vmem:[#allocation2 + $0x250] sm:$0xff]
        %v1628 = vld [vmem:[#allocation2 + $0x258] sm:$0xff]
        %v1629 = vld [vmem:[#allocation2 + $0x270] sm:$0xff]
        %v1630 = vld [vmem:[#allocation2 + $0x278] sm:$0xff]
        %v1631 = vld [vmem:[#allocation2 + $0x280] sm:$0xff]
        %v1632 = vld [vmem:[#allocation2 + $0x288] sm:$0xff]
        %v1633 = vld [vmem:[#allocation2 + $0x2a0] sm:$0xff]
        %v1634 = vld [vmem:[#allocation2 + $0x2a8] sm:$0xff]
        %v1635 = vld [vmem:[#allocation2 + $0x2b0] sm:$0xff]
        %v1636 = vld [vmem:[#allocation2 + $0x2b8] sm:$0xff]
        %v1637 = vld [vmem:[#allocation2 + $0x2d0] sm:$0xff]
        %v1638 = vld [vmem:[#allocation2 + $0x2d8] sm:$0xff]
        %v1639 = vld [vmem:[#allocation2 + $0x2e0] sm:$0xff]
        %v1640 = vld [vmem:[#allocation2 + $0x2e8] sm:$0xff]
        %v1641 = vlaneseq
        %v1642 = vshrl.u32 %v1641, 7
        %v1643 = vsub.s32 0, %v1642
        %v1644 = vrot.slane %v1573, %v1643
        %v1645 = vlaneseq
        %v1646 = vshrl.u32 %v1645, 7
        %v1647 = vsub.s32 0, %v1646
        %v1648 = vrot.slane %v1574, %v1647
        %v1649 = vmul.f32 %v1577, %v1644
        %v1650 = vmul.f32 %v1578, %v1648
        %v1651 = vmul.f32 %v1579, %v1644
        %v1652 = vmul.f32 %v1580, %v1648
        %v1653 = vmul.f32 %v1581, %v1644
        %v1654 = vmul.f32 %v1582, %v1648
        %v1655 = vmul.f32 %v1583, %v1644
        %v1656 = vmul.f32 %v1584, %v1648
        %v1657 = vmul.f32 %v1585, %v1644
        %v1658 = vmul.f32 %v1586, %v1648
        %v1659 = vmul.f32 %v1587, %v1644
        %v1660 = vmul.f32 %v1588, %v1648
        %v1661 = vmul.f32 %v1589, %v1644
        %v1662 = vmul.f32 %v1590, %v1648
        %v1663 = vmul.f32 %v1591, %v1644
        %v1664 = vmul.f32 %v1592, %v1648
        %v1665 = vmul.f32 %v1593, %v1644
        %v1666 = vmul.f32 %v1594, %v1648
        %v1667 = vmul.f32 %v1595, %v1644
        %v1668 = vmul.f32 %v1596, %v1648
        %v1669 = vmul.f32 %v1597, %v1644
        %v1670 = vmul.f32 %v1598, %v1648
        %v1671 = vmul.f32 %v1599, %v1644
        %v1672 = vmul.f32 %v1600, %v1648
        %v1673 = vmul.f32 %v1601, %v1644
        %v1674 = vmul.f32 %v1602, %v1648
        %v1675 = vmul.f32 %v1603, %v1644
        %v1676 = vmul.f32 %v1604, %v1648
        %v1677 = vmul.f32 %v1605, %v1644
        %v1678 = vmul.f32 %v1606, %v1648
        %v1679 = vmul.f32 %v1607, %v1644
        %v1680 = vmul.f32 %v1608, %v1648
        %v1681 = vmul.f32 %v1609, %v1644
        %v1682 = vmul.f32 %v1610, %v1648
        %v1683 = vmul.f32 %v1611, %v1644
        %v1684 = vmul.f32 %v1612, %v1648
        %v1685 = vmul.f32 %v1613, %v1644
        %v1686 = vmul.f32 %v1614, %v1648
        %v1687 = vmul.f32 %v1615, %v1644
        %v1688 = vmul.f32 %v1616, %v1648
        %v1689 = vmul.f32 %v1617, %v1644
        %v1690 = vmul.f32 %v1618, %v1648
        %v1691 = vmul.f32 %v1619, %v1644
        %v1692 = vmul.f32 %v1620, %v1648
        %v1693 = vmul.f32 %v1621, %v1644
        %v1694 = vmul.f32 %v1622, %v1648
        %v1695 = vmul.f32 %v1623, %v1644
        %v1696 = vmul.f32 %v1624, %v1648
        %v1697 = vmul.f32 %v1625, %v1644
        %v1698 = vmul.f32 %v1626, %v1648
        %v1699 = vmul.f32 %v1627, %v1644
        %v1700 = vmul.f32 %v1628, %v1648
        %v1701 = vmul.f32 %v1629, %v1644
        %v1702 = vmul.f32 %v1630, %v1648
        %v1703 = vmul.f32 %v1631, %v1644
        %v1704 = vmul.f32 %v1632, %v1648
        %v1705 = vmul.f32 %v1633, %v1644
        %v1706 = vmul.f32 %v1634, %v1648
        %v1707 = vmul.f32 %v1635, %v1644
        %v1708 = vmul.f32 %v1636, %v1648
        %v1709 = vmul.f32 %v1637, %v1644
        %v1710 = vmul.f32 %v1638, %v1648
        %v1711 = vmul.f32 %v1639, %v1644
        %v1712 = vmul.f32 %v1640, %v1648
        %v1713 = vadd.f32 %v1649, 0.0
        %v1714 = vadd.f32 %v1650, 0.0
        %v1715 = vadd.f32 %v1651, 0.0
        %v1716 = vadd.f32 %v1652, 0.0
        %v1717 = vadd.f32 %v1653, 0.0
        %v1718 = vadd.f32 %v1654, 0.0
        %v1719 = vadd.f32 %v1655, 0.0
        %v1720 = vadd.f32 %v1656, 0.0
        %v1721 = vadd.f32 %v1657, 0.0
        %v1722 = vadd.f32 %v1658, 0.0
        %v1723 = vadd.f32 %v1659, 0.0
        %v1724 = vadd.f32 %v1660, 0.0
        %v1725 = vadd.f32 %v1661, 0.0
        %v1726 = vadd.f32 %v1662, 0.0
        %v1727 = vadd.f32 %v1663, 0.0
        %v1728 = vadd.f32 %v1664, 0.0
        %v1729 = vadd.f32 %v1665, 0.0
        %v1730 = vadd.f32 %v1666, 0.0
        %v1731 = vadd.f32 %v1667, 0.0
        %v1732 = vadd.f32 %v1668, 0.0
        %v1733 = vadd.f32 %v1669, 0.0
        %v1734 = vadd.f32 %v1670, 0.0
        %v1735 = vadd.f32 %v1671, 0.0
        %v1736 = vadd.f32 %v1672, 0.0
        %v1737 = vadd.f32 %v1673, 0.0
        %v1738 = vadd.f32 %v1674, 0.0
        %v1739 = vadd.f32 %v1675, 0.0
        %v1740 = vadd.f32 %v1676, 0.0
        %v1741 = vadd.f32 %v1677, 0.0
        %v1742 = vadd.f32 %v1678, 0.0
        %v1743 = vadd.f32 %v1679, 0.0
        %v1744 = vadd.f32 %v1680, 0.0
        %v1745 = vadd.f32 %v1681, 0.0
        %v1746 = vadd.f32 %v1682, 0.0
        %v1747 = vadd.f32 %v1683, 0.0
        %v1748 = vadd.f32 %v1684, 0.0
        %v1749 = vadd.f32 %v1685, 0.0
        %v1750 = vadd.f32 %v1686, 0.0
        %v1751 = vadd.f32 %v1687, 0.0
        %v1752 = vadd.f32 %v1688, 0.0
        %v1753 = vadd.f32 %v1689, 0.0
        %v1754 = vadd.f32 %v1690, 0.0
        %v1755 = vadd.f32 %v1691, 0.0
        %v1756 = vadd.f32 %v1692, 0.0
        %v1757 = vadd.f32 %v1693, 0.0
        %v1758 = vadd.f32 %v1694, 0.0
        %v1759 = vadd.f32 %v1695, 0.0
        %v1760 = vadd.f32 %v1696, 0.0
        %v1761 = vadd.f32 %v1697, 0.0
        %v1762 = vadd.f32 %v1698, 0.0
        %v1763 = vadd.f32 %v1699, 0.0
        %v1764 = vadd.f32 %v1700, 0.0
        %v1765 = vadd.f32 %v1701, 0.0
        %v1766 = vadd.f32 %v1702, 0.0
        %v1767 = vadd.f32 %v1703, 0.0
        %v1768 = vadd.f32 %v1704, 0.0
        %v1769 = vadd.f32 %v1705, 0.0
        %v1770 = vadd.f32 %v1706, 0.0
        %v1771 = vadd.f32 %v1707, 0.0
        %v1772 = vadd.f32 %v1708, 0.0
        %v1773 = vadd.f32 %v1709, 0.0
        %v1774 = vadd.f32 %v1710, 0.0
        %v1775 = vadd.f32 %v1711, 0.0
        %v1776 = vadd.f32 %v1712, 0.0
        %v1777 = vld [vmem:[#allocation2] sm:$0xfe]
        %v1778 = vld [vmem:[#allocation2 + $0x8] sm:$0xfe]
        %v1779 = vld [vmem:[#allocation2 + $0x20] sm:$0x1]
        %v1780 = vld [vmem:[#allocation2 + $0x28] sm:$0x1]
        %v1781 = vld [vmem:[#allocation2 + $0x30] sm:$0xfe]
        %v1782 = vld [vmem:[#allocation2 + $0x38] sm:$0xfe]
        %v1783 = vld [vmem:[#allocation2 + $0x50] sm:$0x1]
        %v1784 = vld [vmem:[#allocation2 + $0x58] sm:$0x1]
        %v1785 = vld [vmem:[#allocation2 + $0x60] sm:$0xfe]
        %v1786 = vld [vmem:[#allocation2 + $0x68] sm:$0xfe]
        %v1787 = vld [vmem:[#allocation2 + $0x80] sm:$0x1]
        %v1788 = vld [vmem:[#allocation2 + $0x88] sm:$0x1]
        %v1789 = vld [vmem:[#allocation2 + $0x90] sm:$0xfe]
        %v1790 = vld [vmem:[#allocation2 + $0x98] sm:$0xfe]
        %v1791 = vld [vmem:[#allocation2 + $0xb0] sm:$0x1]
        %v1792 = vld [vmem:[#allocation2 + $0xb8] sm:$0x1]
        %v1793 = vld [vmem:[#allocation2 + $0xc0] sm:$0xfe]
        %v1794 = vld [vmem:[#allocation2 + $0xc8] sm:$0xfe]
        %v1795 = vld [vmem:[#allocation2 + $0xe0] sm:$0x1]
        %v1796 = vld [vmem:[#allocation2 + $0xe8] sm:$0x1]
        %v1797 = vld [vmem:[#allocation2 + $0xf0] sm:$0xfe]
        %v1798 = vld [vmem:[#allocation2 + $0xf8] sm:$0xfe]
        %v1799 = vld [vmem:[#allocation2 + $0x110] sm:$0x1]
        %v1800 = vld [vmem:[#allocation2 + $0x118] sm:$0x1]
        %v1801 = vld [vmem:[#allocation2 + $0x120] sm:$0xfe]
        %v1802 = vld [vmem:[#allocation2 + $0x128] sm:$0xfe]
        %v1803 = vld [vmem:[#allocation2 + $0x140] sm:$0x1]
        %v1804 = vld [vmem:[#allocation2 + $0x148] sm:$0x1]
        %v1805 = vld [vmem:[#allocation2 + $0x150] sm:$0xfe]
        %v1806 = vld [vmem:[#allocation2 + $0x158] sm:$0xfe]
        %v1807 = vld [vmem:[#allocation2 + $0x170] sm:$0x1]
        %v1808 = vld [vmem:[#allocation2 + $0x178] sm:$0x1]
        %v1809 = vld [vmem:[#allocation2 + $0x180] sm:$0xfe]
        %v1810 = vld [vmem:[#allocation2 + $0x188] sm:$0xfe]
        %v1811 = vld [vmem:[#allocation2 + $0x1a0] sm:$0x1]
        %v1812 = vld [vmem:[#allocation2 + $0x1a8] sm:$0x1]
        %v1813 = vld [vmem:[#allocation2 + $0x1b0] sm:$0xfe]
        %v1814 = vld [vmem:[#allocation2 + $0x1b8] sm:$0xfe]
        %v1815 = vld [vmem:[#allocation2 + $0x1d0] sm:$0x1]
        %v1816 = vld [vmem:[#allocation2 + $0x1d8] sm:$0x1]
        %v1817 = vld [vmem:[#allocation2 + $0x1e0] sm:$0xfe]
        %v1818 = vld [vmem:[#allocation2 + $0x1e8] sm:$0xfe]
        %v1819 = vld [vmem:[#allocation2 + $0x200] sm:$0x1]
        %v1820 = vld [vmem:[#allocation2 + $0x208] sm:$0x1]
        %v1821 = vld [vmem:[#allocation2 + $0x210] sm:$0xfe]
        %v1822 = vld [vmem:[#allocation2 + $0x218] sm:$0xfe]
        %v1823 = vld [vmem:[#allocation2 + $0x230] sm:$0x1]
        %v1824 = vld [vmem:[#allocation2 + $0x238] sm:$0x1]
        %v1825 = vld [vmem:[#allocation2 + $0x240] sm:$0xfe]
        %v1826 = vld [vmem:[#allocation2 + $0x248] sm:$0xfe]
        %v1827 = vld [vmem:[#allocation2 + $0x260] sm:$0x1]
        %v1828 = vld [vmem:[#allocation2 + $0x268] sm:$0x1]
        %v1829 = vld [vmem:[#allocation2 + $0x270] sm:$0xfe]
        %v1830 = vld [vmem:[#allocation2 + $0x278] sm:$0xfe]
        %v1831 = vld [vmem:[#allocation2 + $0x290] sm:$0x1]
        %v1832 = vld [vmem:[#allocation2 + $0x298] sm:$0x1]
        %v1833 = vld [vmem:[#allocation2 + $0x2a0] sm:$0xfe]
        %v1834 = vld [vmem:[#allocation2 + $0x2a8] sm:$0xfe]
        %v1835 = vld [vmem:[#allocation2 + $0x2c0] sm:$0x1]
        %v1836 = vld [vmem:[#allocation2 + $0x2c8] sm:$0x1]
        %v1837 = vld [vmem:[#allocation2 + $0x2d0] sm:$0xfe]
        %v1838 = vld [vmem:[#allocation2 + $0x2d8] sm:$0xfe]
        %v1839 = vld [vmem:[#allocation2 + $0x2f0] sm:$0x1]
        %v1840 = vld [vmem:[#allocation2 + $0x2f8] sm:$0x1]
        %v1841 = vlaneseq
        %v1842 = vshrl.u32 %v1841, 7
        %v1843 = vsub.s32 1, %v1842
        %v1844 = vrot.slane %v1573, %v1843
        %v1845 = vlaneseq
        %v1846 = vshrl.u32 %v1845, 7
        %v1847 = vsub.s32 1, %v1846
        %v1848 = vrot.slane %v1574, %v1847
        %v1849 = vmul.f32 %v1777, %v1844
        %v1850 = vmul.f32 %v1778, %v1848
        %v1851 = vmul.f32 %v1579, %v1844
        %v1852 = vmul.f32 %v1580, %v1848
        %v1853 = vmul.f32 %v1779, %v1844
        %v1854 = vmul.f32 %v1780, %v1848
        %v1855 = vmul.f32 %v1781, %v1844
        %v1856 = vmul.f32 %v1782, %v1848
        %v1857 = vmul.f32 %v1583, %v1844
        %v1858 = vmul.f32 %v1584, %v1848
        %v1859 = vmul.f32 %v1783, %v1844
        %v1860 = vmul.f32 %v1784, %v1848
        %v1861 = vmul.f32 %v1785, %v1844
        %v1862 = vmul.f32 %v1786, %v1848
        %v1863 = vmul.f32 %v1587, %v1844
        %v1864 = vmul.f32 %v1588, %v1848
        %v1865 = vmul.f32 %v1787, %v1844
        %v1866 = vmul.f32 %v1788, %v1848
        %v1867 = vmul.f32 %v1789, %v1844
        %v1868 = vmul.f32 %v1790, %v1848
        %v1869 = vmul.f32 %v1591, %v1844
        %v1870 = vmul.f32 %v1592, %v1848
        %v1871 = vmul.f32 %v1791, %v1844
        %v1872 = vmul.f32 %v1792, %v1848
        %v1873 = vmul.f32 %v1793, %v1844
        %v1874 = vmul.f32 %v1794, %v1848
        %v1875 = vmul.f32 %v1595, %v1844
        %v1876 = vmul.f32 %v1596, %v1848
        %v1877 = vmul.f32 %v1795, %v1844
        %v1878 = vmul.f32 %v1796, %v1848
        %v1879 = vmul.f32 %v1797, %v1844
        %v1880 = vmul.f32 %v1798, %v1848
        %v1881 = vmul.f32 %v1599, %v1844
        %v1882 = vmul.f32 %v1600, %v1848
        %v1883 = vmul.f32 %v1799, %v1844
        %v1884 = vmul.f32 %v1800, %v1848
        %v1885 = vmul.f32 %v1801, %v1844
        %v1886 = vmul.f32 %v1802, %v1848
        %v1887 = vmul.f32 %v1603, %v1844
        %v1888 = vmul.f32 %v1604, %v1848
        %v1889 = vmul.f32 %v1803, %v1844
        %v1890 = vmul.f32 %v1804, %v1848
        %v1891 = vmul.f32 %v1805, %v1844
        %v1892 = vmul.f32 %v1806, %v1848
        %v1893 = vmul.f32 %v1607, %v1844
        %v1894 = vmul.f32 %v1608, %v1848
        %v1895 = vmul.f32 %v1807, %v1844
        %v1896 = vmul.f32 %v1808, %v1848
        %v1897 = vmul.f32 %v1809, %v1844
        %v1898 = vmul.f32 %v1810, %v1848
        %v1899 = vmul.f32 %v1611, %v1844
        %v1900 = vmul.f32 %v1612, %v1848
        %v1901 = vmul.f32 %v1811, %v1844
        %v1902 = vmul.f32 %v1812, %v1848
        %v1903 = vmul.f32 %v1813, %v1844
        %v1904 = vmul.f32 %v1814, %v1848
        %v1905 = vmul.f32 %v1615, %v1844
        %v1906 = vmul.f32 %v1616, %v1848
        %v1907 = vmul.f32 %v1815, %v1844
        %v1908 = vmul.f32 %v1816, %v1848
        %v1909 = vmul.f32 %v1817, %v1844
        %v1910 = vmul.f32 %v1818, %v1848
        %v1911 = vmul.f32 %v1619, %v1844
        %v1912 = vmul.f32 %v1620, %v1848
        %v1913 = vmul.f32 %v1819, %v1844
        %v1914 = vmul.f32 %v1820, %v1848
        %v1915 = vmul.f32 %v1821, %v1844
        %v1916 = vmul.f32 %v1822, %v1848
        %v1917 = vmul.f32 %v1623, %v1844
        %v1918 = vmul.f32 %v1624, %v1848
        %v1919 = vmul.f32 %v1823, %v1844
        %v1920 = vmul.f32 %v1824, %v1848
        %v1921 = vmul.f32 %v1825, %v1844
        %v1922 = vmul.f32 %v1826, %v1848
        %v1923 = vmul.f32 %v1627, %v1844
        %v1924 = vmul.f32 %v1628, %v1848
        %v1925 = vmul.f32 %v1827, %v1844
        %v1926 = vmul.f32 %v1828, %v1848
        %v1927 = vmul.f32 %v1829, %v1844
        %v1928 = vmul.f32 %v1830, %v1848
        %v1929 = vmul.f32 %v1631, %v1844
        %v1930 = vmul.f32 %v1632, %v1848
        %v1931 = vmul.f32 %v1831, %v1844
        %v1932 = vmul.f32 %v1832, %v1848
        %v1933 = vmul.f32 %v1833, %v1844
        %v1934 = vmul.f32 %v1834, %v1848
        %v1935 = vmul.f32 %v1635, %v1844
        %v1936 = vmul.f32 %v1636, %v1848
        %v1937 = vmul.f32 %v1835, %v1844
        %v1938 = vmul.f32 %v1836, %v1848
        %v1939 = vmul.f32 %v1837, %v1844
        %v1940 = vmul.f32 %v1838, %v1848
        %v1941 = vmul.f32 %v1639, %v1844
        %v1942 = vmul.f32 %v1640, %v1848
        %v1943 = vmul.f32 %v1839, %v1844
        %v1944 = vmul.f32 %v1840, %v1848
        %vm2041 = vcmask 1046528
        %v2042 = vrot.slane %v1849, 1
        %v2043 = vrot.slane %v1851, 1
        %v2044 = vsel %vm2041, %v2042, %v2043
        %v2045 = vrot.slane %v1850, 1
        %v2046 = vrot.slane %v1852, 1
        %v2047 = vsel %vm2041, %v2045, %v2046
        %v2048 = vrot.slane %v1853, 1
        %v2049 = vsel %vm2041, %v2043, %v2048
        %v2050 = vrot.slane %v1854, 1
        %v2051 = vsel %vm2041, %v2046, %v2050
        %v2052 = vrot.slane %v1855, 1
        %v2053 = vrot.slane %v1857, 1
        %v2054 = vsel %vm2041, %v2052, %v2053
        %v2055 = vrot.slane %v1856, 1
        %v2056 = vrot.slane %v1858, 1
        %v2057 = vsel %vm2041, %v2055, %v2056
        %v2058 = vrot.slane %v1859, 1
        %v2059 = vsel %vm2041, %v2053, %v2058
        %v2060 = vrot.slane %v1860, 1
        %v2061 = vsel %vm2041, %v2056, %v2060
        %v2062 = vrot.slane %v1861, 1
        %v2063 = vrot.slane %v1863, 1
        %v2064 = vsel %vm2041, %v2062, %v2063
        %v2065 = vrot.slane %v1862, 1
        %v2066 = vrot.slane %v1864, 1
        %v2067 = vsel %vm2041, %v2065, %v2066
        %v2068 = vrot.slane %v1865, 1
        %v2069 = vsel %vm2041, %v2063, %v2068
        %v2070 = vrot.slane %v1866, 1
        %v2071 = vsel %vm2041, %v2066, %v2070
        %v2072 = vrot.slane %v1867, 1
        %v2073 = vrot.slane %v1869, 1
        %v2074 = vsel %vm2041, %v2072, %v2073
        %v2075 = vrot.slane %v1868, 1
        %v2076 = vrot.slane %v1870, 1
        %v2077 = vsel %vm2041, %v2075, %v2076
        %v2078 = vrot.slane %v1871, 1
        %v2079 = vsel %vm2041, %v2073, %v2078
        %v2080 = vrot.slane %v1872, 1
        %v2081 = vsel %vm2041, %v2076, %v2080
        %v2082 = vrot.slane %v1873, 1
        %v2083 = vrot.slane %v1875, 1
        %v2084 = vsel %vm2041, %v2082, %v2083
        %v2085 = vrot.slane %v1874, 1
        %v2086 = vrot.slane %v1876, 1
        %v2087 = vsel %vm2041, %v2085, %v2086
        %v2088 = vrot.slane %v1877, 1
        %v2089 = vsel %vm2041, %v2083, %v2088
        %v2090 = vrot.slane %v1878, 1
        %v2091 = vsel %vm2041, %v2086, %v2090
        %v2092 = vrot.slane %v1879, 1
        %v2093 = vrot.slane %v1881, 1
        %v2094 = vsel %vm2041, %v2092, %v2093
        %v2095 = vrot.slane %v1880, 1
        %v2096 = vrot.slane %v1882, 1
        %v2097 = vsel %vm2041, %v2095, %v2096
        %v2098 = vrot.slane %v1883, 1
        %v2099 = vsel %vm2041, %v2093, %v2098
        %v2100 = vrot.slane %v1884, 1
        %v2101 = vsel %vm2041, %v2096, %v2100
        %v2102 = vrot.slane %v1885, 1
        %v2103 = vrot.slane %v1887, 1
        %v2104 = vsel %vm2041, %v2102, %v2103
        %v2105 = vrot.slane %v1886, 1
        %v2106 = vrot.slane %v1888, 1
        %v2107 = vsel %vm2041, %v2105, %v2106
        %v2108 = vrot.slane %v1889, 1
        %v2109 = vsel %vm2041, %v2103, %v2108
        %v2110 = vrot.slane %v1890, 1
        %v2111 = vsel %vm2041, %v2106, %v2110
        %v2112 = vrot.slane %v1891, 1
        %v2113 = vrot.slane %v1893, 1
        %v2114 = vsel %vm2041, %v2112, %v2113
        %v2115 = vrot.slane %v1892, 1
        %v2116 = vrot.slane %v1894, 1
        %v2117 = vsel %vm2041, %v2115, %v2116
        %v2118 = vrot.slane %v1895, 1
        %v2119 = vsel %vm2041, %v2113, %v2118
        %v2120 = vrot.slane %v1896, 1
        %v2121 = vsel %vm2041, %v2116, %v2120
        %v2122 = vrot.slane %v1897, 1
        %v2123 = vrot.slane %v1899, 1
        %v2124 = vsel %vm2041, %v2122, %v2123
        %v2125 = vrot.slane %v1898, 1
        %v2126 = vrot.slane %v1900, 1
        %v2127 = vsel %vm2041, %v2125, %v2126
        %v2128 = vrot.slane %v1901, 1
        %v2129 = vsel %vm2041, %v2123, %v2128
        %v2130 = vrot.slane %v1902, 1
        %v2131 = vsel %vm2041, %v2126, %v2130
        %v2132 = vrot.slane %v1903, 1
        %v2133 = vrot.slane %v1905, 1
        %v2134 = vsel %vm2041, %v2132, %v2133
        %v2135 = vrot.slane %v1904, 1
        %v2136 = vrot.slane %v1906, 1
        %v2137 = vsel %vm2041, %v2135, %v2136
        %v2138 = vrot.slane %v1907, 1
        %v2139 = vsel %vm2041, %v2133, %v2138
        %v2140 = vrot.slane %v1908, 1
        %v2141 = vsel %vm2041, %v2136, %v2140
        %v2142 = vrot.slane %v1909, 1
        %v2143 = vrot.slane %v1911, 1
        %v2144 = vsel %vm2041, %v2142, %v2143
        %v2145 = vrot.slane %v1910, 1
        %v2146 = vrot.slane %v1912, 1
        %v2147 = vsel %vm2041, %v2145, %v2146
        %v2148 = vrot.slane %v1913, 1
        %v2149 = vsel %vm2041, %v2143, %v2148
        %v2150 = vrot.slane %v1914, 1
        %v2151 = vsel %vm2041, %v2146, %v2150
        %v2152 = vrot.slane %v1915, 1
        %v2153 = vrot.slane %v1917, 1
        %v2154 = vsel %vm2041, %v2152, %v2153
        %v2155 = vrot.slane %v1916, 1
        %v2156 = vrot.slane %v1918, 1
        %v2157 = vsel %vm2041, %v2155, %v2156
        %v2158 = vrot.slane %v1919, 1
        %v2159 = vsel %vm2041, %v2153, %v2158
        %v2160 = vrot.slane %v1920, 1
        %v2161 = vsel %vm2041, %v2156, %v2160
        %v2162 = vrot.slane %v1921, 1
        %v2163 = vrot.slane %v1923, 1
        %v2164 = vsel %vm2041, %v2162, %v2163
        %v2165 = vrot.slane %v1922, 1
        %v2166 = vrot.slane %v1924, 1
        %v2167 = vsel %vm2041, %v2165, %v2166
        %v2168 = vrot.slane %v1925, 1
        %v2169 = vsel %vm2041, %v2163, %v2168
        %v2170 = vrot.slane %v1926, 1
        %v2171 = vsel %vm2041, %v2166, %v2170
        %v2172 = vrot.slane %v1927, 1
        %v2173 = vrot.slane %v1929, 1
        %v2174 = vsel %vm2041, %v2172, %v2173
        %v2175 = vrot.slane %v1928, 1
        %v2176 = vrot.slane %v1930, 1
        %v2177 = vsel %vm2041, %v2175, %v2176
        %v2178 = vrot.slane %v1931, 1
        %v2179 = vsel %vm2041, %v2173, %v2178
        %v2180 = vrot.slane %v1932, 1
        %v2181 = vsel %vm2041, %v2176, %v2180
        %v2182 = vrot.slane %v1933, 1
        %v2183 = vrot.slane %v1935, 1
        %v2184 = vsel %vm2041, %v2182, %v2183
        %v2185 = vrot.slane %v1934, 1
        %v2186 = vrot.slane %v1936, 1
        %v2187 = vsel %vm2041, %v2185, %v2186
        %v2188 = vrot.slane %v1937, 1
        %v2189 = vsel %vm2041, %v2183, %v2188
        %v2190 = vrot.slane %v1938, 1
        %v2191 = vsel %vm2041, %v2186, %v2190
        %v2192 = vrot.slane %v1939, 1
        %v2193 = vrot.slane %v1941, 1
        %v2194 = vsel %vm2041, %v2192, %v2193
        %v2195 = vrot.slane %v1940, 1
        %v2196 = vrot.slane %v1942, 1
        %v2197 = vsel %vm2041, %v2195, %v2196
        %v2198 = vrot.slane %v1943, 1
        %v2199 = vsel %vm2041, %v2193, %v2198
        %v2200 = vrot.slane %v1944, 1
        %v2201 = vsel %vm2041, %v2196, %v2200
        %v2266 = vadd.f32 %v1713, %v2044
        %v2267 = vadd.f32 %v1714, %v2047
        %v2268 = vadd.f32 %v1715, %v2049
        %v2269 = vadd.f32 %v1716, %v2051
        %v2270 = vadd.f32 %v1717, %v2054
        %v2271 = vadd.f32 %v1718, %v2057
        %v2272 = vadd.f32 %v1719, %v2059
        %v2273 = vadd.f32 %v1720, %v2061
        %v2274 = vadd.f32 %v1721, %v2064
        %v2275 = vadd.f32 %v1722, %v2067
        %v2276 = vadd.f32 %v1723, %v2069
        %v2277 = vadd.f32 %v1724, %v2071
        %v2278 = vadd.f32 %v1725, %v2074
        %v2279 = vadd.f32 %v1726, %v2077
        %v2280 = vadd.f32 %v1727, %v2079
        %v2281 = vadd.f32 %v1728, %v2081
        %v2282 = vadd.f32 %v1729, %v2084
        %v2283 = vadd.f32 %v1730, %v2087
        %v2284 = vadd.f32 %v1731, %v2089
        %v2285 = vadd.f32 %v1732, %v2091
        %v2286 = vadd.f32 %v1733, %v2094
        %v2287 = vadd.f32 %v1734, %v2097
        %v2288 = vadd.f32 %v1735, %v2099
        %v2289 = vadd.f32 %v1736, %v2101
        %v2290 = vadd.f32 %v1737, %v2104
        %v2291 = vadd.f32 %v1738, %v2107
        %v2292 = vadd.f32 %v1739, %v2109
        %v2293 = vadd.f32 %v1740, %v2111
        %v2294 = vadd.f32 %v1741, %v2114
        %v2295 = vadd.f32 %v1742, %v2117
        %v2296 = vadd.f32 %v1743, %v2119
        %v2297 = vadd.f32 %v1744, %v2121
        %v2298 = vadd.f32 %v1745, %v2124
        %v2299 = vadd.f32 %v1746, %v2127
        %v2300 = vadd.f32 %v1747, %v2129
        %v2301 = vadd.f32 %v1748, %v2131
        %v2302 = vadd.f32 %v1749, %v2134
        %v2303 = vadd.f32 %v1750, %v2137
        %v2304 = vadd.f32 %v1751, %v2139
        %v2305 = vadd.f32 %v1752, %v2141
        %v2306 = vadd.f32 %v1753, %v2144
        %v2307 = vadd.f32 %v1754, %v2147
        %v2308 = vadd.f32 %v1755, %v2149
        %v2309 = vadd.f32 %v1756, %v2151
        %v2310 = vadd.f32 %v1757, %v2154
        %v2311 = vadd.f32 %v1758, %v2157
        %v2312 = vadd.f32 %v1759, %v2159
        %v2313 = vadd.f32 %v1760, %v2161
        %v2314 = vadd.f32 %v1761, %v2164
        %v2315 = vadd.f32 %v1762, %v2167
        %v2316 = vadd.f32 %v1763, %v2169
        %v2317 = vadd.f32 %v1764, %v2171
        %v2318 = vadd.f32 %v1765, %v2174
        %v2319 = vadd.f32 %v1766, %v2177
        %v2320 = vadd.f32 %v1767, %v2179
        %v2321 = vadd.f32 %v1768, %v2181
        %v2322 = vadd.f32 %v1769, %v2184
        %v2323 = vadd.f32 %v1770, %v2187
        %v2324 = vadd.f32 %v1771, %v2189
        %v2325 = vadd.f32 %v1772, %v2191
        %v2326 = vadd.f32 %v1773, %v2194
        %v2327 = vadd.f32 %v1774, %v2197
        %v2328 = vadd.f32 %v1775, %v2199
        %v2329 = vadd.f32 %v1776, %v2201
        %v2330 = vld [vmem:[#allocation2] sm:$0xfc]
        %v2331 = vld [vmem:[#allocation2 + $0x8] sm:$0xfc]
        %v2332 = vld [vmem:[#allocation2 + $0x20] sm:$0x3]
        %v2333 = vld [vmem:[#allocation2 + $0x28] sm:$0x3]
        %v2334 = vld [vmem:[#allocation2 + $0x30] sm:$0xfc]
        %v2335 = vld [vmem:[#allocation2 + $0x38] sm:$0xfc]
        %v2336 = vld [vmem:[#allocation2 + $0x50] sm:$0x3]
        %v2337 = vld [vmem:[#allocation2 + $0x58] sm:$0x3]
        %v2338 = vld [vmem:[#allocation2 + $0x60] sm:$0xfc]
        %v2339 = vld [vmem:[#allocation2 + $0x68] sm:$0xfc]
        %v2340 = vld [vmem:[#allocation2 + $0x80] sm:$0x3]
        %v2341 = vld [vmem:[#allocation2 + $0x88] sm:$0x3]
        %v2342 = vld [vmem:[#allocation2 + $0x90] sm:$0xfc]
        %v2343 = vld [vmem:[#allocation2 + $0x98] sm:$0xfc]
        %v2344 = vld [vmem:[#allocation2 + $0xb0] sm:$0x3]
        %v2345 = vld [vmem:[#allocation2 + $0xb8] sm:$0x3]
        %v2346 = vld [vmem:[#allocation2 + $0xc0] sm:$0xfc]
        %v2347 = vld [vmem:[#allocation2 + $0xc8] sm:$0xfc]
        %v2348 = vld [vmem:[#allocation2 + $0xe0] sm:$0x3]
        %v2349 = vld [vmem:[#allocation2 + $0xe8] sm:$0x3]
        %v2350 = vld [vmem:[#allocation2 + $0xf0] sm:$0xfc]
        %v2351 = vld [vmem:[#allocation2 + $0xf8] sm:$0xfc]
        %v2352 = vld [vmem:[#allocation2 + $0x110] sm:$0x3]
        %v2353 = vld [vmem:[#allocation2 + $0x118] sm:$0x3]
        %v2354 = vld [vmem:[#allocation2 + $0x120] sm:$0xfc]
        %v2355 = vld [vmem:[#allocation2 + $0x128] sm:$0xfc]
        %v2356 = vld [vmem:[#allocation2 + $0x140] sm:$0x3]
        %v2357 = vld [vmem:[#allocation2 + $0x148] sm:$0x3]
        %v2358 = vld [vmem:[#allocation2 + $0x150] sm:$0xfc]
        %v2359 = vld [vmem:[#allocation2 + $0x158] sm:$0xfc]
        %v2360 = vld [vmem:[#allocation2 + $0x170] sm:$0x3]
        %v2361 = vld [vmem:[#allocation2 + $0x178] sm:$0x3]
        %v2362 = vld [vmem:[#allocation2 + $0x180] sm:$0xfc]
        %v2363 = vld [vmem:[#allocation2 + $0x188] sm:$0xfc]
        %v2364 = vld [vmem:[#allocation2 + $0x1a0] sm:$0x3]
        %v2365 = vld [vmem:[#allocation2 + $0x1a8] sm:$0x3]
        %v2366 = vld [vmem:[#allocation2 + $0x1b0] sm:$0xfc]
        %v2367 = vld [vmem:[#allocation2 + $0x1b8] sm:$0xfc]
        %v2368 = vld [vmem:[#allocation2 + $0x1d0] sm:$0x3]
        %v2369 = vld [vmem:[#allocation2 + $0x1d8] sm:$0x3]
        %v2370 = vld [vmem:[#allocation2 + $0x1e0] sm:$0xfc]
        %v2371 = vld [vmem:[#allocation2 + $0x1e8] sm:$0xfc]
        %v2372 = vld [vmem:[#allocation2 + $0x200] sm:$0x3]
        %v2373 = vld [vmem:[#allocation2 + $0x208] sm:$0x3]
        %v2374 = vld [vmem:[#allocation2 + $0x210] sm:$0xfc]
        %v2375 = vld [vmem:[#allocation2 + $0x218] sm:$0xfc]
        %v2376 = vld [vmem:[#allocation2 + $0x230] sm:$0x3]
        %v2377 = vld [vmem:[#allocation2 + $0x238] sm:$0x3]
        %v2378 = vld [vmem:[#allocation2 + $0x240] sm:$0xfc]
        %v2379 = vld [vmem:[#allocation2 + $0x248] sm:$0xfc]
        %v2380 = vld [vmem:[#allocation2 + $0x260] sm:$0x3]
        %v2381 = vld [vmem:[#allocation2 + $0x268] sm:$0x3]
        %v2382 = vld [vmem:[#allocation2 + $0x270] sm:$0xfc]
        %v2383 = vld [vmem:[#allocation2 + $0x278] sm:$0xfc]
        %v2384 = vld [vmem:[#allocation2 + $0x290] sm:$0x3]
        %v2385 = vld [vmem:[#allocation2 + $0x298] sm:$0x3]
        %v2386 = vld [vmem:[#allocation2 + $0x2a0] sm:$0xfc]
        %v2387 = vld [vmem:[#allocation2 + $0x2a8] sm:$0xfc]
        %v2388 = vld [vmem:[#allocation2 + $0x2c0] sm:$0x3]
        %v2389 = vld [vmem:[#allocation2 + $0x2c8] sm:$0x3]
        %v2390 = vld [vmem:[#allocation2 + $0x2d0] sm:$0xfc]
        %v2391 = vld [vmem:[#allocation2 + $0x2d8] sm:$0xfc]
        %v2392 = vld [vmem:[#allocation2 + $0x2f0] sm:$0x3]
        %v2393 = vld [vmem:[#allocation2 + $0x2f8] sm:$0x3]
        %v2394 = vlaneseq
        %v2395 = vshrl.u32 %v2394, 7
        %v2396 = vsub.s32 2, %v2395
        %v2397 = vrot.slane %v1573, %v2396
        %v2398 = vlaneseq
        %v2399 = vshrl.u32 %v2398, 7
        %v2400 = vsub.s32 2, %v2399
        %v2401 = vrot.slane %v1574, %v2400
        %v2402 = vmul.f32 %v2330, %v2397
        %v2403 = vmul.f32 %v2331, %v2401
        %v2404 = vmul.f32 %v1579, %v2397
        %v2405 = vmul.f32 %v1580, %v2401
        %v2406 = vmul.f32 %v2332, %v2397
        %v2407 = vmul.f32 %v2333, %v2401
        %v2408 = vmul.f32 %v2334, %v2397
        %v2409 = vmul.f32 %v2335, %v2401
        %v2410 = vmul.f32 %v1583, %v2397
        %v2411 = vmul.f32 %v1584, %v2401
        %v2412 = vmul.f32 %v2336, %v2397
        %v2413 = vmul.f32 %v2337, %v2401
        %v2414 = vmul.f32 %v2338, %v2397
        %v2415 = vmul.f32 %v2339, %v2401
        %v2416 = vmul.f32 %v1587, %v2397
        %v2417 = vmul.f32 %v1588, %v2401
        %v2418 = vmul.f32 %v2340, %v2397
        %v2419 = vmul.f32 %v2341, %v2401
        %v2420 = vmul.f32 %v2342, %v2397
        %v2421 = vmul.f32 %v2343, %v2401
        %v2422 = vmul.f32 %v1591, %v2397
        %v2423 = vmul.f32 %v1592, %v2401
        %v2424 = vmul.f32 %v2344, %v2397
        %v2425 = vmul.f32 %v2345, %v2401
        %v2426 = vmul.f32 %v2346, %v2397
        %v2427 = vmul.f32 %v2347, %v2401
        %v2428 = vmul.f32 %v1595, %v2397
        %v2429 = vmul.f32 %v1596, %v2401
        %v2430 = vmul.f32 %v2348, %v2397
        %v2431 = vmul.f32 %v2349, %v2401
        %v2432 = vmul.f32 %v2350, %v2397
        %v2433 = vmul.f32 %v2351, %v2401
        %v2434 = vmul.f32 %v1599, %v2397
        %v2435 = vmul.f32 %v1600, %v2401
        %v2436 = vmul.f32 %v2352, %v2397
        %v2437 = vmul.f32 %v2353, %v2401
        %v2438 = vmul.f32 %v2354, %v2397
        %v2439 = vmul.f32 %v2355, %v2401
        %v2440 = vmul.f32 %v1603, %v2397
        %v2441 = vmul.f32 %v1604, %v2401
        %v2442 = vmul.f32 %v2356, %v2397
        %v2443 = vmul.f32 %v2357, %v2401
        %v2444 = vmul.f32 %v2358, %v2397
        %v2445 = vmul.f32 %v2359, %v2401
        %v2446 = vmul.f32 %v1607, %v2397
        %v2447 = vmul.f32 %v1608, %v2401
        %v2448 = vmul.f32 %v2360, %v2397
        %v2449 = vmul.f32 %v2361, %v2401
        %v2450 = vmul.f32 %v2362, %v2397
        %v2451 = vmul.f32 %v2363, %v2401
        %v2452 = vmul.f32 %v1611, %v2397
        %v2453 = vmul.f32 %v1612, %v2401
        %v2454 = vmul.f32 %v2364, %v2397
        %v2455 = vmul.f32 %v2365, %v2401
        %v2456 = vmul.f32 %v2366, %v2397
        %v2457 = vmul.f32 %v2367, %v2401
        %v2458 = vmul.f32 %v1615, %v2397
        %v2459 = vmul.f32 %v1616, %v2401
        %v2460 = vmul.f32 %v2368, %v2397
        %v2461 = vmul.f32 %v2369, %v2401
        %v2462 = vmul.f32 %v2370, %v2397
        %v2463 = vmul.f32 %v2371, %v2401
        %v2464 = vmul.f32 %v1619, %v2397
        %v2465 = vmul.f32 %v1620, %v2401
        %v2466 = vmul.f32 %v2372, %v2397
        %v2467 = vmul.f32 %v2373, %v2401
        %v2468 = vmul.f32 %v2374, %v2397
        %v2469 = vmul.f32 %v2375, %v2401
        %v2470 = vmul.f32 %v1623, %v2397
        %v2471 = vmul.f32 %v1624, %v2401
        %v2472 = vmul.f32 %v2376, %v2397
        %v2473 = vmul.f32 %v2377, %v2401
        %v2474 = vmul.f32 %v2378, %v2397
        %v2475 = vmul.f32 %v2379, %v2401
        %v2476 = vmul.f32 %v1627, %v2397
        %v2477 = vmul.f32 %v1628, %v2401
        %v2478 = vmul.f32 %v2380, %v2397
        %v2479 = vmul.f32 %v2381, %v2401
        %v2480 = vmul.f32 %v2382, %v2397
        %v2481 = vmul.f32 %v2383, %v2401
        %v2482 = vmul.f32 %v1631, %v2397
        %v2483 = vmul.f32 %v1632, %v2401
        %v2484 = vmul.f32 %v2384, %v2397
        %v2485 = vmul.f32 %v2385, %v2401
        %v2486 = vmul.f32 %v2386, %v2397
        %v2487 = vmul.f32 %v2387, %v2401
        %v2488 = vmul.f32 %v1635, %v2397
        %v2489 = vmul.f32 %v1636, %v2401
        %v2490 = vmul.f32 %v2388, %v2397
        %v2491 = vmul.f32 %v2389, %v2401
        %v2492 = vmul.f32 %v2390, %v2397
        %v2493 = vmul.f32 %v2391, %v2401
        %v2494 = vmul.f32 %v1639, %v2397
        %v2495 = vmul.f32 %v1640, %v2401
        %v2496 = vmul.f32 %v2392, %v2397
        %v2497 = vmul.f32 %v2393, %v2401
        %vm2594 = vcmask 1045504
        %v2595 = vrot.slane %v2402, 2
        %v2596 = vrot.slane %v2404, 2
        %v2597 = vsel %vm2594, %v2595, %v2596
        %v2598 = vrot.slane %v2403, 2
        %v2599 = vrot.slane %v2405, 2
        %v2600 = vsel %vm2594, %v2598, %v2599
        %v2601 = vrot.slane %v2406, 2
        %v2602 = vsel %vm2594, %v2596, %v2601
        %v2603 = vrot.slane %v2407, 2
        %v2604 = vsel %vm2594, %v2599, %v2603
        %v2605 = vrot.slane %v2408, 2
        %v2606 = vrot.slane %v2410, 2
        %v2607 = vsel %vm2594, %v2605, %v2606
        %v2608 = vrot.slane %v2409, 2
        %v2609 = vrot.slane %v2411, 2
        %v2610 = vsel %vm2594, %v2608, %v2609
        %v2611 = vrot.slane %v2412, 2
        %v2612 = vsel %vm2594, %v2606, %v2611
        %v2613 = vrot.slane %v2413, 2
        %v2614 = vsel %vm2594, %v2609, %v2613
        %v2615 = vrot.slane %v2414, 2
        %v2616 = vrot.slane %v2416, 2
        %v2617 = vsel %vm2594, %v2615, %v2616
        %v2618 = vrot.slane %v2415, 2
        %v2619 = vrot.slane %v2417, 2
        %v2620 = vsel %vm2594, %v2618, %v2619
        %v2621 = vrot.slane %v2418, 2
        %v2622 = vsel %vm2594, %v2616, %v2621
        %v2623 = vrot.slane %v2419, 2
        %v2624 = vsel %vm2594, %v2619, %v2623
        %v2625 = vrot.slane %v2420, 2
        %v2626 = vrot.slane %v2422, 2
        %v2627 = vsel %vm2594, %v2625, %v2626
        %v2628 = vrot.slane %v2421, 2
        %v2629 = vrot.slane %v2423, 2
        %v2630 = vsel %vm2594, %v2628, %v2629
        %v2631 = vrot.slane %v2424, 2
        %v2632 = vsel %vm2594, %v2626, %v2631
        %v2633 = vrot.slane %v2425, 2
        %v2634 = vsel %vm2594, %v2629, %v2633
        %v2635 = vrot.slane %v2426, 2
        %v2636 = vrot.slane %v2428, 2
        %v2637 = vsel %vm2594, %v2635, %v2636
        %v2638 = vrot.slane %v2427, 2
        %v2639 = vrot.slane %v2429, 2
        %v2640 = vsel %vm2594, %v2638, %v2639
        %v2641 = vrot.slane %v2430, 2
        %v2642 = vsel %vm2594, %v2636, %v2641
        %v2643 = vrot.slane %v2431, 2
        %v2644 = vsel %vm2594, %v2639, %v2643
        %v2645 = vrot.slane %v2432, 2
        %v2646 = vrot.slane %v2434, 2
        %v2647 = vsel %vm2594, %v2645, %v2646
        %v2648 = vrot.slane %v2433, 2
        %v2649 = vrot.slane %v2435, 2
        %v2650 = vsel %vm2594, %v2648, %v2649
        %v2651 = vrot.slane %v2436, 2
        %v2652 = vsel %vm2594, %v2646, %v2651
        %v2653 = vrot.slane %v2437, 2
        %v2654 = vsel %vm2594, %v2649, %v2653
        %v2655 = vrot.slane %v2438, 2
        %v2656 = vrot.slane %v2440, 2
        %v2657 = vsel %vm2594, %v2655, %v2656
        %v2658 = vrot.slane %v2439, 2
        %v2659 = vrot.slane %v2441, 2
        %v2660 = vsel %vm2594, %v2658, %v2659
        %v2661 = vrot.slane %v2442, 2
        %v2662 = vsel %vm2594, %v2656, %v2661
        %v2663 = vrot.slane %v2443, 2
        %v2664 = vsel %vm2594, %v2659, %v2663
        %v2665 = vrot.slane %v2444, 2
        %v2666 = vrot.slane %v2446, 2
        %v2667 = vsel %vm2594, %v2665, %v2666
        %v2668 = vrot.slane %v2445, 2
        %v2669 = vrot.slane %v2447, 2
        %v2670 = vsel %vm2594, %v2668, %v2669
        %v2671 = vrot.slane %v2448, 2
        %v2672 = vsel %vm2594, %v2666, %v2671
        %v2673 = vrot.slane %v2449, 2
        %v2674 = vsel %vm2594, %v2669, %v2673
        %v2675 = vrot.slane %v2450, 2
        %v2676 = vrot.slane %v2452, 2
        %v2677 = vsel %vm2594, %v2675, %v2676
        %v2678 = vrot.slane %v2451, 2
        %v2679 = vrot.slane %v2453, 2
        %v2680 = vsel %vm2594, %v2678, %v2679
        %v2681 = vrot.slane %v2454, 2
        %v2682 = vsel %vm2594, %v2676, %v2681
        %v2683 = vrot.slane %v2455, 2
        %v2684 = vsel %vm2594, %v2679, %v2683
        %v2685 = vrot.slane %v2456, 2
        %v2686 = vrot.slane %v2458, 2
        %v2687 = vsel %vm2594, %v2685, %v2686
        %v2688 = vrot.slane %v2457, 2
        %v2689 = vrot.slane %v2459, 2
        %v2690 = vsel %vm2594, %v2688, %v2689
        %v2691 = vrot.slane %v2460, 2
        %v2692 = vsel %vm2594, %v2686, %v2691
        %v2693 = vrot.slane %v2461, 2
        %v2694 = vsel %vm2594, %v2689, %v2693
        %v2695 = vrot.slane %v2462, 2
        %v2696 = vrot.slane %v2464, 2
        %v2697 = vsel %vm2594, %v2695, %v2696
        %v2698 = vrot.slane %v2463, 2
        %v2699 = vrot.slane %v2465, 2
        %v2700 = vsel %vm2594, %v2698, %v2699
        %v2701 = vrot.slane %v2466, 2
        %v2702 = vsel %vm2594, %v2696, %v2701
        %v2703 = vrot.slane %v2467, 2
        %v2704 = vsel %vm2594, %v2699, %v2703
        %v2705 = vrot.slane %v2468, 2
        %v2706 = vrot.slane %v2470, 2
        %v2707 = vsel %vm2594, %v2705, %v2706
        %v2708 = vrot.slane %v2469, 2
        %v2709 = vrot.slane %v2471, 2
        %v2710 = vsel %vm2594, %v2708, %v2709
        %v2711 = vrot.slane %v2472, 2
        %v2712 = vsel %vm2594, %v2706, %v2711
        %v2713 = vrot.slane %v2473, 2
        %v2714 = vsel %vm2594, %v2709, %v2713
        %v2715 = vrot.slane %v2474, 2
        %v2716 = vrot.slane %v2476, 2
        %v2717 = vsel %vm2594, %v2715, %v2716
        %v2718 = vrot.slane %v2475, 2
        %v2719 = vrot.slane %v2477, 2
        %v2720 = vsel %vm2594, %v2718, %v2719
        %v2721 = vrot.slane %v2478, 2
        %v2722 = vsel %vm2594, %v2716, %v2721
        %v2723 = vrot.slane %v2479, 2
        %v2724 = vsel %vm2594, %v2719, %v2723
        %v2725 = vrot.slane %v2480, 2
        %v2726 = vrot.slane %v2482, 2
        %v2727 = vsel %vm2594, %v2725, %v2726
        %v2728 = vrot.slane %v2481, 2
        %v2729 = vrot.slane %v2483, 2
        %v2730 = vsel %vm2594, %v2728, %v2729
        %v2731 = vrot.slane %v2484, 2
        %v2732 = vsel %vm2594, %v2726, %v2731
        %v2733 = vrot.slane %v2485, 2
        %v2734 = vsel %vm2594, %v2729, %v2733
        %v2735 = vrot.slane %v2486, 2
        %v2736 = vrot.slane %v2488, 2
        %v2737 = vsel %vm2594, %v2735, %v2736
        %v2738 = vrot.slane %v2487, 2
        %v2739 = vrot.slane %v2489, 2
        %v2740 = vsel %vm2594, %v2738, %v2739
        %v2741 = vrot.slane %v2490, 2
        %v2742 = vsel %vm2594, %v2736, %v2741
        %v2743 = vrot.slane %v2491, 2
        %v2744 = vsel %vm2594, %v2739, %v2743
        %v2745 = vrot.slane %v2492, 2
        %v2746 = vrot.slane %v2494, 2
        %v2747 = vsel %vm2594, %v2745, %v2746
        %v2748 = vrot.slane %v2493, 2
        %v2749 = vrot.slane %v2495, 2
        %v2750 = vsel %vm2594, %v2748, %v2749
        %v2751 = vrot.slane %v2496, 2
        %v2752 = vsel %vm2594, %v2746, %v2751
        %v2753 = vrot.slane %v2497, 2
        %v2754 = vsel %vm2594, %v2749, %v2753
        %v2819 = vadd.f32 %v2266, %v2597
        %v2820 = vadd.f32 %v2267, %v2600
        %v2821 = vadd.f32 %v2268, %v2602
        %v2822 = vadd.f32 %v2269, %v2604
        %v2823 = vadd.f32 %v2270, %v2607
        %v2824 = vadd.f32 %v2271, %v2610
        %v2825 = vadd.f32 %v2272, %v2612
        %v2826 = vadd.f32 %v2273, %v2614
        %v2827 = vadd.f32 %v2274, %v2617
        %v2828 = vadd.f32 %v2275, %v2620
        %v2829 = vadd.f32 %v2276, %v2622
        %v2830 = vadd.f32 %v2277, %v2624
        %v2831 = vadd.f32 %v2278, %v2627
        %v2832 = vadd.f32 %v2279, %v2630
        %v2833 = vadd.f32 %v2280, %v2632
        %v2834 = vadd.f32 %v2281, %v2634
        %v2835 = vadd.f32 %v2282, %v2637
        %v2836 = vadd.f32 %v2283, %v2640
        %v2837 = vadd.f32 %v2284, %v2642
        %v2838 = vadd.f32 %v2285, %v2644
        %v2839 = vadd.f32 %v2286, %v2647
        %v2840 = vadd.f32 %v2287, %v2650
        %v2841 = vadd.f32 %v2288, %v2652
        %v2842 = vadd.f32 %v2289, %v2654
        %v2843 = vadd.f32 %v2290, %v2657
        %v2844 = vadd.f32 %v2291, %v2660
        %v2845 = vadd.f32 %v2292, %v2662
        %v2846 = vadd.f32 %v2293, %v2664
        %v2847 = vadd.f32 %v2294, %v2667
        %v2848 = vadd.f32 %v2295, %v2670
        %v2849 = vadd.f32 %v2296, %v2672
        %v2850 = vadd.f32 %v2297, %v2674
        %v2851 = vadd.f32 %v2298, %v2677
        %v2852 = vadd.f32 %v2299, %v2680
        %v2853 = vadd.f32 %v2300, %v2682
        %v2854 = vadd.f32 %v2301, %v2684
        %v2855 = vadd.f32 %v2302, %v2687
        %v2856 = vadd.f32 %v2303, %v2690
        %v2857 = vadd.f32 %v2304, %v2692
        %v2858 = vadd.f32 %v2305, %v2694
        %v2859 = vadd.f32 %v2306, %v2697
        %v2860 = vadd.f32 %v2307, %v2700
        %v2861 = vadd.f32 %v2308, %v2702
        %v2862 = vadd.f32 %v2309, %v2704
        %v2863 = vadd.f32 %v2310, %v2707
        %v2864 = vadd.f32 %v2311, %v2710
        %v2865 = vadd.f32 %v2312, %v2712
        %v2866 = vadd.f32 %v2313, %v2714
        %v2867 = vadd.f32 %v2314, %v2717
        %v2868 = vadd.f32 %v2315, %v2720
        %v2869 = vadd.f32 %v2316, %v2722
        %v2870 = vadd.f32 %v2317, %v2724
        %v2871 = vadd.f32 %v2318, %v2727
        %v2872 = vadd.f32 %v2319, %v2730
        %v2873 = vadd.f32 %v2320, %v2732
        %v2874 = vadd.f32 %v2321, %v2734
        %v2875 = vadd.f32 %v2322, %v2737
        %v2876 = vadd.f32 %v2323, %v2740
        %v2877 = vadd.f32 %v2324, %v2742
        %v2878 = vadd.f32 %v2325, %v2744
        %v2879 = vadd.f32 %v2326, %v2747
        %v2880 = vadd.f32 %v2327, %v2750
        %v2881 = vadd.f32 %v2328, %v2752
        %v2882 = vadd.f32 %v2329, %v2754
        %v2883 = vld [vmem:[%s1476] sm:$0xff]
        %v2884 = vld [vmem:[%s1476 + $0x8] sm:$0xff]
        %v2885 = vld [vmem:[%s1476 + $0x10] sm:$0xff]
        %v2886 = vld [vmem:[%s1476 + $0x18] sm:$0xff]
        %v2887 = vld [vmem:[%s1476 + $0x30] sm:$0xff]
        %v2888 = vld [vmem:[%s1476 + $0x38] sm:$0xff]
        %v2889 = vld [vmem:[%s1476 + $0x40] sm:$0xff]
        %v2890 = vld [vmem:[%s1476 + $0x48] sm:$0xff]
        %v2891 = vld [vmem:[%s1476 + $0x60] sm:$0xff]
        %v2892 = vld [vmem:[%s1476 + $0x68] sm:$0xff]
        %v2893 = vld [vmem:[%s1476 + $0x70] sm:$0xff]
        %v2894 = vld [vmem:[%s1476 + $0x78] sm:$0xff]
        %v2895 = vld [vmem:[%s1476 + $0x90] sm:$0xff]
        %v2896 = vld [vmem:[%s1476 + $0x98] sm:$0xff]
        %v2897 = vld [vmem:[%s1476 + $0xa0] sm:$0xff]
        %v2898 = vld [vmem:[%s1476 + $0xa8] sm:$0xff]
        %v2899 = vld [vmem:[%s1476 + $0xc0] sm:$0xff]
        %v2900 = vld [vmem:[%s1476 + $0xc8] sm:$0xff]
        %v2901 = vld [vmem:[%s1476 + $0xd0] sm:$0xff]
        %v2902 = vld [vmem:[%s1476 + $0xd8] sm:$0xff]
        %v2903 = vld [vmem:[%s1476 + $0xf0] sm:$0xff]
        %v2904 = vld [vmem:[%s1476 + $0xf8] sm:$0xff]
        %v2905 = vld [vmem:[%s1476 + $0x100] sm:$0xff]
        %v2906 = vld [vmem:[%s1476 + $0x108] sm:$0xff]
        %v2907 = vld [vmem:[%s1476 + $0x120] sm:$0xff]
        %v2908 = vld [vmem:[%s1476 + $0x128] sm:$0xff]
        %v2909 = vld [vmem:[%s1476 + $0x130] sm:$0xff]
        %v2910 = vld [vmem:[%s1476 + $0x138] sm:$0xff]
        %v2911 = vld [vmem:[%s1476 + $0x150] sm:$0xff]
        %v2912 = vld [vmem:[%s1476 + $0x158] sm:$0xff]
        %v2913 = vld [vmem:[%s1476 + $0x160] sm:$0xff]
        %v2914 = vld [vmem:[%s1476 + $0x168] sm:$0xff]
        %v2915 = vld [vmem:[%s1476 + $0x180] sm:$0xff]
        %v2916 = vld [vmem:[%s1476 + $0x188] sm:$0xff]
        %v2917 = vld [vmem:[%s1476 + $0x190] sm:$0xff]
        %v2918 = vld [vmem:[%s1476 + $0x198] sm:$0xff]
        %v2919 = vld [vmem:[%s1476 + $0x1b0] sm:$0xff]
        %v2920 = vld [vmem:[%s1476 + $0x1b8] sm:$0xff]
        %v2921 = vld [vmem:[%s1476 + $0x1c0] sm:$0xff]
        %v2922 = vld [vmem:[%s1476 + $0x1c8] sm:$0xff]
        %v2923 = vld [vmem:[%s1476 + $0x1e0] sm:$0xff]
        %v2924 = vld [vmem:[%s1476 + $0x1e8] sm:$0xff]
        %v2925 = vld [vmem:[%s1476 + $0x1f0] sm:$0xff]
        %v2926 = vld [vmem:[%s1476 + $0x1f8] sm:$0xff]
        %v2927 = vld [vmem:[%s1476 + $0x210] sm:$0xff]
        %v2928 = vld [vmem:[%s1476 + $0x218] sm:$0xff]
        %v2929 = vld [vmem:[%s1476 + $0x220] sm:$0xff]
        %v2930 = vld [vmem:[%s1476 + $0x228] sm:$0xff]
        %v2931 = vld [vmem:[%s1476 + $0x240] sm:$0xff]
        %v2932 = vld [vmem:[%s1476 + $0x248] sm:$0xff]
        %v2933 = vld [vmem:[%s1476 + $0x250] sm:$0xff]
        %v2934 = vld [vmem:[%s1476 + $0x258] sm:$0xff]
        %v2935 = vld [vmem:[%s1476 + $0x270] sm:$0xff]
        %v2936 = vld [vmem:[%s1476 + $0x278] sm:$0xff]
        %v2937 = vld [vmem:[%s1476 + $0x280] sm:$0xff]
        %v2938 = vld [vmem:[%s1476 + $0x288] sm:$0xff]
        %v2939 = vld [vmem:[%s1476 + $0x2a0] sm:$0xff]
        %v2940 = vld [vmem:[%s1476 + $0x2a8] sm:$0xff]
        %v2941 = vld [vmem:[%s1476 + $0x2b0] sm:$0xff]
        %v2942 = vld [vmem:[%s1476 + $0x2b8] sm:$0xff]
        %v2943 = vld [vmem:[%s1476 + $0x2d0] sm:$0xff]
        %v2944 = vld [vmem:[%s1476 + $0x2d8] sm:$0xff]
        %v2945 = vld [vmem:[%s1476 + $0x2e0] sm:$0xff]
        %v2946 = vld [vmem:[%s1476 + $0x2e8] sm:$0xff]
        %v2947 = vlaneseq
        %v2948 = vshrl.u32 %v2947, 7
        %v2949 = vsub.s32 3, %v2948
        %v2950 = vrot.slane %v1573, %v2949
        %v2951 = vlaneseq
        %v2952 = vshrl.u32 %v2951, 7
        %v2953 = vsub.s32 3, %v2952
        %v2954 = vrot.slane %v1574, %v2953
        %v2955 = vmul.f32 %v2883, %v2950
        %v2956 = vmul.f32 %v2884, %v2954
        %v2957 = vmul.f32 %v2885, %v2950
        %v2958 = vmul.f32 %v2886, %v2954
        %v2959 = vmul.f32 %v2887, %v2950
        %v2960 = vmul.f32 %v2888, %v2954
        %v2961 = vmul.f32 %v2889, %v2950
        %v2962 = vmul.f32 %v2890, %v2954
        %v2963 = vmul.f32 %v2891, %v2950
        %v2964 = vmul.f32 %v2892, %v2954
        %v2965 = vmul.f32 %v2893, %v2950
        %v2966 = vmul.f32 %v2894, %v2954
        %v2967 = vmul.f32 %v2895, %v2950
        %v2968 = vmul.f32 %v2896, %v2954
        %v2969 = vmul.f32 %v2897, %v2950
        %v2970 = vmul.f32 %v2898, %v2954
        %v2971 = vmul.f32 %v2899, %v2950
        %v2972 = vmul.f32 %v2900, %v2954
        %v2973 = vmul.f32 %v2901, %v2950
        %v2974 = vmul.f32 %v2902, %v2954
        %v2975 = vmul.f32 %v2903, %v2950
        %v2976 = vmul.f32 %v2904, %v2954
        %v2977 = vmul.f32 %v2905, %v2950
        %v2978 = vmul.f32 %v2906, %v2954
        %v2979 = vmul.f32 %v2907, %v2950
        %v2980 = vmul.f32 %v2908, %v2954
        %v2981 = vmul.f32 %v2909, %v2950
        %v2982 = vmul.f32 %v2910, %v2954
        %v2983 = vmul.f32 %v2911, %v2950
        %v2984 = vmul.f32 %v2912, %v2954
        %v2985 = vmul.f32 %v2913, %v2950
        %v2986 = vmul.f32 %v2914, %v2954
        %v2987 = vmul.f32 %v2915, %v2950
        %v2988 = vmul.f32 %v2916, %v2954
        %v2989 = vmul.f32 %v2917, %v2950
        %v2990 = vmul.f32 %v2918, %v2954
        %v2991 = vmul.f32 %v2919, %v2950
        %v2992 = vmul.f32 %v2920, %v2954
        %v2993 = vmul.f32 %v2921, %v2950
        %v2994 = vmul.f32 %v2922, %v2954
        %v2995 = vmul.f32 %v2923, %v2950
        %v2996 = vmul.f32 %v2924, %v2954
        %v2997 = vmul.f32 %v2925, %v2950
        %v2998 = vmul.f32 %v2926, %v2954
        %v2999 = vmul.f32 %v2927, %v2950
        %v3000 = vmul.f32 %v2928, %v2954
        %v3001 = vmul.f32 %v2929, %v2950
        %v3002 = vmul.f32 %v2930, %v2954
        %v3003 = vmul.f32 %v2931, %v2950
        %v3004 = vmul.f32 %v2932, %v2954
        %v3005 = vmul.f32 %v2933, %v2950
        %v3006 = vmul.f32 %v2934, %v2954
        %v3007 = vmul.f32 %v2935, %v2950
        %v3008 = vmul.f32 %v2936, %v2954
        %v3009 = vmul.f32 %v2937, %v2950
        %v3010 = vmul.f32 %v2938, %v2954
        %v3011 = vmul.f32 %v2939, %v2950
        %v3012 = vmul.f32 %v2940, %v2954
        %v3013 = vmul.f32 %v2941, %v2950
        %v3014 = vmul.f32 %v2942, %v2954
        %v3015 = vmul.f32 %v2943, %v2950
        %v3016 = vmul.f32 %v2944, %v2954
        %v3017 = vmul.f32 %v2945, %v2950
        %v3018 = vmul.f32 %v2946, %v2954
        %v3019 = vadd.f32 %v2819, %v2955
        %v3020 = vadd.f32 %v2820, %v2956
        %v3021 = vadd.f32 %v2821, %v2957
        %v3022 = vadd.f32 %v2822, %v2958
        %v3023 = vadd.f32 %v2823, %v2959
        %v3024 = vadd.f32 %v2824, %v2960
        %v3025 = vadd.f32 %v2825, %v2961
        %v3026 = vadd.f32 %v2826, %v2962
        %v3027 = vadd.f32 %v2827, %v2963
        %v3028 = vadd.f32 %v2828, %v2964
        %v3029 = vadd.f32 %v2829, %v2965
        %v3030 = vadd.f32 %v2830, %v2966
        %v3031 = vadd.f32 %v2831, %v2967
        %v3032 = vadd.f32 %v2832, %v2968
        %v3033 = vadd.f32 %v2833, %v2969
        %v3034 = vadd.f32 %v2834, %v2970
        %v3035 = vadd.f32 %v2835, %v2971
        %v3036 = vadd.f32 %v2836, %v2972
        %v3037 = vadd.f32 %v2837, %v2973
        %v3038 = vadd.f32 %v2838, %v2974
        %v3039 = vadd.f32 %v2839, %v2975
        %v3040 = vadd.f32 %v2840, %v2976
        %v3041 = vadd.f32 %v2841, %v2977
        %v3042 = vadd.f32 %v2842, %v2978
        %v3043 = vadd.f32 %v2843, %v2979
        %v3044 = vadd.f32 %v2844, %v2980
        %v3045 = vadd.f32 %v2845, %v2981
        %v3046 = vadd.f32 %v2846, %v2982
        %v3047 = vadd.f32 %v2847, %v2983
        %v3048 = vadd.f32 %v2848, %v2984
        %v3049 = vadd.f32 %v2849, %v2985
        %v3050 = vadd.f32 %v2850, %v2986
        %v3051 = vadd.f32 %v2851, %v2987
        %v3052 = vadd.f32 %v2852, %v2988
        %v3053 = vadd.f32 %v2853, %v2989
        %v3054 = vadd.f32 %v2854, %v2990
        %v3055 = vadd.f32 %v2855, %v2991
        %v3056 = vadd.f32 %v2856, %v2992
        %v3057 = vadd.f32 %v2857, %v2993
        %v3058 = vadd.f32 %v2858, %v2994
        %v3059 = vadd.f32 %v2859, %v2995
        %v3060 = vadd.f32 %v2860, %v2996
        %v3061 = vadd.f32 %v2861, %v2997
        %v3062 = vadd.f32 %v2862, %v2998
        %v3063 = vadd.f32 %v2863, %v2999
        %v3064 = vadd.f32 %v2864, %v3000
        %v3065 = vadd.f32 %v2865, %v3001
        %v3066 = vadd.f32 %v2866, %v3002
        %v3067 = vadd.f32 %v2867, %v3003
        %v3068 = vadd.f32 %v2868, %v3004
        %v3069 = vadd.f32 %v2869, %v3005
        %v3070 = vadd.f32 %v2870, %v3006
        %v3071 = vadd.f32 %v2871, %v3007
        %v3072 = vadd.f32 %v2872, %v3008
        %v3073 = vadd.f32 %v2873, %v3009
        %v3074 = vadd.f32 %v2874, %v3010
        %v3075 = vadd.f32 %v2875, %v3011
        %v3076 = vadd.f32 %v2876, %v3012
        %v3077 = vadd.f32 %v2877, %v3013
        %v3078 = vadd.f32 %v2878, %v3014
        %v3079 = vadd.f32 %v2879, %v3015
        %v3080 = vadd.f32 %v2880, %v3016
        %v3081 = vadd.f32 %v2881, %v3017
        %v3082 = vadd.f32 %v2882, %v3018
        %v3083 = vld [vmem:[%s1476] sm:$0xfe]
        %v3084 = vld [vmem:[%s1476 + $0x8] sm:$0xfe]
        %v3085 = vld [vmem:[%s1476 + $0x20] sm:$0x1]
        %v3086 = vld [vmem:[%s1476 + $0x28] sm:$0x1]
        %v3087 = vld [vmem:[%s1476 + $0x30] sm:$0xfe]
        %v3088 = vld [vmem:[%s1476 + $0x38] sm:$0xfe]
        %v3089 = vld [vmem:[%s1476 + $0x50] sm:$0x1]
        %v3090 = vld [vmem:[%s1476 + $0x58] sm:$0x1]
        %v3091 = vld [vmem:[%s1476 + $0x60] sm:$0xfe]
        %v3092 = vld [vmem:[%s1476 + $0x68] sm:$0xfe]
        %v3093 = vld [vmem:[%s1476 + $0x80] sm:$0x1]
        %v3094 = vld [vmem:[%s1476 + $0x88] sm:$0x1]
        %v3095 = vld [vmem:[%s1476 + $0x90] sm:$0xfe]
        %v3096 = vld [vmem:[%s1476 + $0x98] sm:$0xfe]
        %v3097 = vld [vmem:[%s1476 + $0xb0] sm:$0x1]
        %v3098 = vld [vmem:[%s1476 + $0xb8] sm:$0x1]
        %v3099 = vld [vmem:[%s1476 + $0xc0] sm:$0xfe]
        %v3100 = vld [vmem:[%s1476 + $0xc8] sm:$0xfe]
        %v3101 = vld [vmem:[%s1476 + $0xe0] sm:$0x1]
        %v3102 = vld [vmem:[%s1476 + $0xe8] sm:$0x1]
        %v3103 = vld [vmem:[%s1476 + $0xf0] sm:$0xfe]
        %v3104 = vld [vmem:[%s1476 + $0xf8] sm:$0xfe]
        %v3105 = vld [vmem:[%s1476 + $0x110] sm:$0x1]
        %v3106 = vld [vmem:[%s1476 + $0x118] sm:$0x1]
        %v3107 = vld [vmem:[%s1476 + $0x120] sm:$0xfe]
        %v3108 = vld [vmem:[%s1476 + $0x128] sm:$0xfe]
        %v3109 = vld [vmem:[%s1476 + $0x140] sm:$0x1]
        %v3110 = vld [vmem:[%s1476 + $0x148] sm:$0x1]
        %v3111 = vld [vmem:[%s1476 + $0x150] sm:$0xfe]
        %v3112 = vld [vmem:[%s1476 + $0x158] sm:$0xfe]
        %v3113 = vld [vmem:[%s1476 + $0x170] sm:$0x1]
        %v3114 = vld [vmem:[%s1476 + $0x178] sm:$0x1]
        %v3115 = vld [vmem:[%s1476 + $0x180] sm:$0xfe]
        %v3116 = vld [vmem:[%s1476 + $0x188] sm:$0xfe]
        %v3117 = vld [vmem:[%s1476 + $0x1a0] sm:$0x1]
        %v3118 = vld [vmem:[%s1476 + $0x1a8] sm:$0x1]
        %v3119 = vld [vmem:[%s1476 + $0x1b0] sm:$0xfe]
        %v3120 = vld [vmem:[%s1476 + $0x1b8] sm:$0xfe]
        %v3121 = vld [vmem:[%s1476 + $0x1d0] sm:$0x1]
        %v3122 = vld [vmem:[%s1476 + $0x1d8] sm:$0x1]
        %v3123 = vld [vmem:[%s1476 + $0x1e0] sm:$0xfe]
        %v3124 = vld [vmem:[%s1476 + $0x1e8] sm:$0xfe]
        %v3125 = vld [vmem:[%s1476 + $0x200] sm:$0x1]
        %v3126 = vld [vmem:[%s1476 + $0x208] sm:$0x1]
        %v3127 = vld [vmem:[%s1476 + $0x210] sm:$0xfe]
        %v3128 = vld [vmem:[%s1476 + $0x218] sm:$0xfe]
        %v3129 = vld [vmem:[%s1476 + $0x230] sm:$0x1]
        %v3130 = vld [vmem:[%s1476 + $0x238] sm:$0x1]
        %v3131 = vld [vmem:[%s1476 + $0x240] sm:$0xfe]
        %v3132 = vld [vmem:[%s1476 + $0x248] sm:$0xfe]
        %v3133 = vld [vmem:[%s1476 + $0x260] sm:$0x1]
        %v3134 = vld [vmem:[%s1476 + $0x268] sm:$0x1]
        %v3135 = vld [vmem:[%s1476 + $0x270] sm:$0xfe]
        %v3136 = vld [vmem:[%s1476 + $0x278] sm:$0xfe]
        %v3137 = vld [vmem:[%s1476 + $0x290] sm:$0x1]
        %v3138 = vld [vmem:[%s1476 + $0x298] sm:$0x1]
        %v3139 = vld [vmem:[%s1476 + $0x2a0] sm:$0xfe]
        %v3140 = vld [vmem:[%s1476 + $0x2a8] sm:$0xfe]
        %v3141 = vld [vmem:[%s1476 + $0x2c0] sm:$0x1]
        %v3142 = vld [vmem:[%s1476 + $0x2c8] sm:$0x1]
        %v3143 = vld [vmem:[%s1476 + $0x2d0] sm:$0xfe]
        %v3144 = vld [vmem:[%s1476 + $0x2d8] sm:$0xfe]
        %v3145 = vld [vmem:[%s1476 + $0x2f0] sm:$0x1]
        %v3146 = vld [vmem:[%s1476 + $0x2f8] sm:$0x1]
        %v3147 = vlaneseq
        %v3148 = vshrl.u32 %v3147, 7
        %v3149 = vsub.s32 4, %v3148
        %v3150 = vrot.slane %v1573, %v3149
        %v3151 = vlaneseq
        %v3152 = vshrl.u32 %v3151, 7
        %v3153 = vsub.s32 4, %v3152
        %v3154 = vrot.slane %v1574, %v3153
        %v3155 = vmul.f32 %v3083, %v3150
        %v3156 = vmul.f32 %v3084, %v3154
        %v3157 = vmul.f32 %v2885, %v3150
        %v3158 = vmul.f32 %v2886, %v3154
        %v3159 = vmul.f32 %v3085, %v3150
        %v3160 = vmul.f32 %v3086, %v3154
        %v3161 = vmul.f32 %v3087, %v3150
        %v3162 = vmul.f32 %v3088, %v3154
        %v3163 = vmul.f32 %v2889, %v3150
        %v3164 = vmul.f32 %v2890, %v3154
        %v3165 = vmul.f32 %v3089, %v3150
        %v3166 = vmul.f32 %v3090, %v3154
        %v3167 = vmul.f32 %v3091, %v3150
        %v3168 = vmul.f32 %v3092, %v3154
        %v3169 = vmul.f32 %v2893, %v3150
        %v3170 = vmul.f32 %v2894, %v3154
        %v3171 = vmul.f32 %v3093, %v3150
        %v3172 = vmul.f32 %v3094, %v3154
        %v3173 = vmul.f32 %v3095, %v3150
        %v3174 = vmul.f32 %v3096, %v3154
        %v3175 = vmul.f32 %v2897, %v3150
        %v3176 = vmul.f32 %v2898, %v3154
        %v3177 = vmul.f32 %v3097, %v3150
        %v3178 = vmul.f32 %v3098, %v3154
        %v3179 = vmul.f32 %v3099, %v3150
        %v3180 = vmul.f32 %v3100, %v3154
        %v3181 = vmul.f32 %v2901, %v3150
        %v3182 = vmul.f32 %v2902, %v3154
        %v3183 = vmul.f32 %v3101, %v3150
        %v3184 = vmul.f32 %v3102, %v3154
        %v3185 = vmul.f32 %v3103, %v3150
        %v3186 = vmul.f32 %v3104, %v3154
        %v3187 = vmul.f32 %v2905, %v3150
        %v3188 = vmul.f32 %v2906, %v3154
        %v3189 = vmul.f32 %v3105, %v3150
        %v3190 = vmul.f32 %v3106, %v3154
        %v3191 = vmul.f32 %v3107, %v3150
        %v3192 = vmul.f32 %v3108, %v3154
        %v3193 = vmul.f32 %v2909, %v3150
        %v3194 = vmul.f32 %v2910, %v3154
        %v3195 = vmul.f32 %v3109, %v3150
        %v3196 = vmul.f32 %v3110, %v3154
        %v3197 = vmul.f32 %v3111, %v3150
        %v3198 = vmul.f32 %v3112, %v3154
        %v3199 = vmul.f32 %v2913, %v3150
        %v3200 = vmul.f32 %v2914, %v3154
        %v3201 = vmul.f32 %v3113, %v3150
        %v3202 = vmul.f32 %v3114, %v3154
        %v3203 = vmul.f32 %v3115, %v3150
        %v3204 = vmul.f32 %v3116, %v3154
        %v3205 = vmul.f32 %v2917, %v3150
        %v3206 = vmul.f32 %v2918, %v3154
        %v3207 = vmul.f32 %v3117, %v3150
        %v3208 = vmul.f32 %v3118, %v3154
        %v3209 = vmul.f32 %v3119, %v3150
        %v3210 = vmul.f32 %v3120, %v3154
        %v3211 = vmul.f32 %v2921, %v3150
        %v3212 = vmul.f32 %v2922, %v3154
        %v3213 = vmul.f32 %v3121, %v3150
        %v3214 = vmul.f32 %v3122, %v3154
        %v3215 = vmul.f32 %v3123, %v3150
        %v3216 = vmul.f32 %v3124, %v3154
        %v3217 = vmul.f32 %v2925, %v3150
        %v3218 = vmul.f32 %v2926, %v3154
        %v3219 = vmul.f32 %v3125, %v3150
        %v3220 = vmul.f32 %v3126, %v3154
        %v3221 = vmul.f32 %v3127, %v3150
        %v3222 = vmul.f32 %v3128, %v3154
        %v3223 = vmul.f32 %v2929, %v3150
        %v3224 = vmul.f32 %v2930, %v3154
        %v3225 = vmul.f32 %v3129, %v3150
        %v3226 = vmul.f32 %v3130, %v3154
        %v3227 = vmul.f32 %v3131, %v3150
        %v3228 = vmul.f32 %v3132, %v3154
        %v3229 = vmul.f32 %v2933, %v3150
        %v3230 = vmul.f32 %v2934, %v3154
        %v3231 = vmul.f32 %v3133, %v3150
        %v3232 = vmul.f32 %v3134, %v3154
        %v3233 = vmul.f32 %v3135, %v3150
        %v3234 = vmul.f32 %v3136, %v3154
        %v3235 = vmul.f32 %v2937, %v3150
        %v3236 = vmul.f32 %v2938, %v3154
        %v3237 = vmul.f32 %v3137, %v3150
        %v3238 = vmul.f32 %v3138, %v3154
        %v3239 = vmul.f32 %v3139, %v3150
        %v3240 = vmul.f32 %v3140, %v3154
        %v3241 = vmul.f32 %v2941, %v3150
        %v3242 = vmul.f32 %v2942, %v3154
        %v3243 = vmul.f32 %v3141, %v3150
        %v3244 = vmul.f32 %v3142, %v3154
        %v3245 = vmul.f32 %v3143, %v3150
        %v3246 = vmul.f32 %v3144, %v3154
        %v3247 = vmul.f32 %v2945, %v3150
        %v3248 = vmul.f32 %v2946, %v3154
        %v3249 = vmul.f32 %v3145, %v3150
        %v3250 = vmul.f32 %v3146, %v3154
        %v3347 = vrot.slane %v3155, 1
        %v3348 = vrot.slane %v3157, 1
        %v3349 = vsel %vm2041, %v3347, %v3348
        %v3350 = vrot.slane %v3156, 1
        %v3351 = vrot.slane %v3158, 1
        %v3352 = vsel %vm2041, %v3350, %v3351
        %v3353 = vrot.slane %v3159, 1
        %v3354 = vsel %vm2041, %v3348, %v3353
        %v3355 = vrot.slane %v3160, 1
        %v3356 = vsel %vm2041, %v3351, %v3355
        %v3357 = vrot.slane %v3161, 1
        %v3358 = vrot.slane %v3163, 1
        %v3359 = vsel %vm2041, %v3357, %v3358
        %v3360 = vrot.slane %v3162, 1
        %v3361 = vrot.slane %v3164, 1
        %v3362 = vsel %vm2041, %v3360, %v3361
        %v3363 = vrot.slane %v3165, 1
        %v3364 = vsel %vm2041, %v3358, %v3363
        %v3365 = vrot.slane %v3166, 1
        %v3366 = vsel %vm2041, %v3361, %v3365
        %v3367 = vrot.slane %v3167, 1
        %v3368 = vrot.slane %v3169, 1
        %v3369 = vsel %vm2041, %v3367, %v3368
        %v3370 = vrot.slane %v3168, 1
        %v3371 = vrot.slane %v3170, 1
        %v3372 = vsel %vm2041, %v3370, %v3371
        %v3373 = vrot.slane %v3171, 1
        %v3374 = vsel %vm2041, %v3368, %v3373
        %v3375 = vrot.slane %v3172, 1
        %v3376 = vsel %vm2041, %v3371, %v3375
        %v3377 = vrot.slane %v3173, 1
        %v3378 = vrot.slane %v3175, 1
        %v3379 = vsel %vm2041, %v3377, %v3378
        %v3380 = vrot.slane %v3174, 1
        %v3381 = vrot.slane %v3176, 1
        %v3382 = vsel %vm2041, %v3380, %v3381
        %v3383 = vrot.slane %v3177, 1
        %v3384 = vsel %vm2041, %v3378, %v3383
        %v3385 = vrot.slane %v3178, 1
        %v3386 = vsel %vm2041, %v3381, %v3385
        %v3387 = vrot.slane %v3179, 1
        %v3388 = vrot.slane %v3181, 1
        %v3389 = vsel %vm2041, %v3387, %v3388
        %v3390 = vrot.slane %v3180, 1
        %v3391 = vrot.slane %v3182, 1
        %v3392 = vsel %vm2041, %v3390, %v3391
        %v3393 = vrot.slane %v3183, 1
        %v3394 = vsel %vm2041, %v3388, %v3393
        %v3395 = vrot.slane %v3184, 1
        %v3396 = vsel %vm2041, %v3391, %v3395
        %v3397 = vrot.slane %v3185, 1
        %v3398 = vrot.slane %v3187, 1
        %v3399 = vsel %vm2041, %v3397, %v3398
        %v3400 = vrot.slane %v3186, 1
        %v3401 = vrot.slane %v3188, 1
        %v3402 = vsel %vm2041, %v3400, %v3401
        %v3403 = vrot.slane %v3189, 1
        %v3404 = vsel %vm2041, %v3398, %v3403
        %v3405 = vrot.slane %v3190, 1
        %v3406 = vsel %vm2041, %v3401, %v3405
        %v3407 = vrot.slane %v3191, 1
        %v3408 = vrot.slane %v3193, 1
        %v3409 = vsel %vm2041, %v3407, %v3408
        %v3410 = vrot.slane %v3192, 1
        %v3411 = vrot.slane %v3194, 1
        %v3412 = vsel %vm2041, %v3410, %v3411
        %v3413 = vrot.slane %v3195, 1
        %v3414 = vsel %vm2041, %v3408, %v3413
        %v3415 = vrot.slane %v3196, 1
        %v3416 = vsel %vm2041, %v3411, %v3415
        %v3417 = vrot.slane %v3197, 1
        %v3418 = vrot.slane %v3199, 1
        %v3419 = vsel %vm2041, %v3417, %v3418
        %v3420 = vrot.slane %v3198, 1
        %v3421 = vrot.slane %v3200, 1
        %v3422 = vsel %vm2041, %v3420, %v3421
        %v3423 = vrot.slane %v3201, 1
        %v3424 = vsel %vm2041, %v3418, %v3423
        %v3425 = vrot.slane %v3202, 1
        %v3426 = vsel %vm2041, %v3421, %v3425
        %v3427 = vrot.slane %v3203, 1
        %v3428 = vrot.slane %v3205, 1
        %v3429 = vsel %vm2041, %v3427, %v3428
        %v3430 = vrot.slane %v3204, 1
        %v3431 = vrot.slane %v3206, 1
        %v3432 = vsel %vm2041, %v3430, %v3431
        %v3433 = vrot.slane %v3207, 1
        %v3434 = vsel %vm2041, %v3428, %v3433
        %v3435 = vrot.slane %v3208, 1
        %v3436 = vsel %vm2041, %v3431, %v3435
        %v3437 = vrot.slane %v3209, 1
        %v3438 = vrot.slane %v3211, 1
        %v3439 = vsel %vm2041, %v3437, %v3438
        %v3440 = vrot.slane %v3210, 1
        %v3441 = vrot.slane %v3212, 1
        %v3442 = vsel %vm2041, %v3440, %v3441
        %v3443 = vrot.slane %v3213, 1
        %v3444 = vsel %vm2041, %v3438, %v3443
        %v3445 = vrot.slane %v3214, 1
        %v3446 = vsel %vm2041, %v3441, %v3445
        %v3447 = vrot.slane %v3215, 1
        %v3448 = vrot.slane %v3217, 1
        %v3449 = vsel %vm2041, %v3447, %v3448
        %v3450 = vrot.slane %v3216, 1
        %v3451 = vrot.slane %v3218, 1
        %v3452 = vsel %vm2041, %v3450, %v3451
        %v3453 = vrot.slane %v3219, 1
        %v3454 = vsel %vm2041, %v3448, %v3453
        %v3455 = vrot.slane %v3220, 1
        %v3456 = vsel %vm2041, %v3451, %v3455
        %v3457 = vrot.slane %v3221, 1
        %v3458 = vrot.slane %v3223, 1
        %v3459 = vsel %vm2041, %v3457, %v3458
        %v3460 = vrot.slane %v3222, 1
        %v3461 = vrot.slane %v3224, 1
        %v3462 = vsel %vm2041, %v3460, %v3461
        %v3463 = vrot.slane %v3225, 1
        %v3464 = vsel %vm2041, %v3458, %v3463
        %v3465 = vrot.slane %v3226, 1
        %v3466 = vsel %vm2041, %v3461, %v3465
        %v3467 = vrot.slane %v3227, 1
        %v3468 = vrot.slane %v3229, 1
        %v3469 = vsel %vm2041, %v3467, %v3468
        %v3470 = vrot.slane %v3228, 1
        %v3471 = vrot.slane %v3230, 1
        %v3472 = vsel %vm2041, %v3470, %v3471
        %v3473 = vrot.slane %v3231, 1
        %v3474 = vsel %vm2041, %v3468, %v3473
        %v3475 = vrot.slane %v3232, 1
        %v3476 = vsel %vm2041, %v3471, %v3475
        %v3477 = vrot.slane %v3233, 1
        %v3478 = vrot.slane %v3235, 1
        %v3479 = vsel %vm2041, %v3477, %v3478
        %v3480 = vrot.slane %v3234, 1
        %v3481 = vrot.slane %v3236, 1
        %v3482 = vsel %vm2041, %v3480, %v3481
        %v3483 = vrot.slane %v3237, 1
        %v3484 = vsel %vm2041, %v3478, %v3483
        %v3485 = vrot.slane %v3238, 1
        %v3486 = vsel %vm2041, %v3481, %v3485
        %v3487 = vrot.slane %v3239, 1
        %v3488 = vrot.slane %v3241, 1
        %v3489 = vsel %vm2041, %v3487, %v3488
        %v3490 = vrot.slane %v3240, 1
        %v3491 = vrot.slane %v3242, 1
        %v3492 = vsel %vm2041, %v3490, %v3491
        %v3493 = vrot.slane %v3243, 1
        %v3494 = vsel %vm2041, %v3488, %v3493
        %v3495 = vrot.slane %v3244, 1
        %v3496 = vsel %vm2041, %v3491, %v3495
        %v3497 = vrot.slane %v3245, 1
        %v3498 = vrot.slane %v3247, 1
        %v3499 = vsel %vm2041, %v3497, %v3498
        %v3500 = vrot.slane %v3246, 1
        %v3501 = vrot.slane %v3248, 1
        %v3502 = vsel %vm2041, %v3500, %v3501
        %v3503 = vrot.slane %v3249, 1
        %v3504 = vsel %vm2041, %v3498, %v3503
        %v3505 = vrot.slane %v3250, 1
        %v3506 = vsel %vm2041, %v3501, %v3505
        %v3571 = vadd.f32 %v3019, %v3349
        %v3572 = vadd.f32 %v3020, %v3352
        %v3573 = vadd.f32 %v3021, %v3354
        %v3574 = vadd.f32 %v3022, %v3356
        %v3575 = vadd.f32 %v3023, %v3359
        %v3576 = vadd.f32 %v3024, %v3362
        %v3577 = vadd.f32 %v3025, %v3364
        %v3578 = vadd.f32 %v3026, %v3366
        %v3579 = vadd.f32 %v3027, %v3369
        %v3580 = vadd.f32 %v3028, %v3372
        %v3581 = vadd.f32 %v3029, %v3374
        %v3582 = vadd.f32 %v3030, %v3376
        %v3583 = vadd.f32 %v3031, %v3379
        %v3584 = vadd.f32 %v3032, %v3382
        %v3585 = vadd.f32 %v3033, %v3384
        %v3586 = vadd.f32 %v3034, %v3386
        %v3587 = vadd.f32 %v3035, %v3389
        %v3588 = vadd.f32 %v3036, %v3392
        %v3589 = vadd.f32 %v3037, %v3394
        %v3590 = vadd.f32 %v3038, %v3396
        %v3591 = vadd.f32 %v3039, %v3399
        %v3592 = vadd.f32 %v3040, %v3402
        %v3593 = vadd.f32 %v3041, %v3404
        %v3594 = vadd.f32 %v3042, %v3406
        %v3595 = vadd.f32 %v3043, %v3409
        %v3596 = vadd.f32 %v3044, %v3412
        %v3597 = vadd.f32 %v3045, %v3414
        %v3598 = vadd.f32 %v3046, %v3416
        %v3599 = vadd.f32 %v3047, %v3419
        %v3600 = vadd.f32 %v3048, %v3422
        %v3601 = vadd.f32 %v3049, %v3424
        %v3602 = vadd.f32 %v3050, %v3426
        %v3603 = vadd.f32 %v3051, %v3429
        %v3604 = vadd.f32 %v3052, %v3432
        %v3605 = vadd.f32 %v3053, %v3434
        %v3606 = vadd.f32 %v3054, %v3436
        %v3607 = vadd.f32 %v3055, %v3439
        %v3608 = vadd.f32 %v3056, %v3442
        %v3609 = vadd.f32 %v3057, %v3444
        %v3610 = vadd.f32 %v3058, %v3446
        %v3611 = vadd.f32 %v3059, %v3449
        %v3612 = vadd.f32 %v3060, %v3452
        %v3613 = vadd.f32 %v3061, %v3454
        %v3614 = vadd.f32 %v3062, %v3456
        %v3615 = vadd.f32 %v3063, %v3459
        %v3616 = vadd.f32 %v3064, %v3462
        %v3617 = vadd.f32 %v3065, %v3464
        %v3618 = vadd.f32 %v3066, %v3466
        %v3619 = vadd.f32 %v3067, %v3469
        %v3620 = vadd.f32 %v3068, %v3472
        %v3621 = vadd.f32 %v3069, %v3474
        %v3622 = vadd.f32 %v3070, %v3476
        %v3623 = vadd.f32 %v3071, %v3479
        %v3624 = vadd.f32 %v3072, %v3482
        %v3625 = vadd.f32 %v3073, %v3484
        %v3626 = vadd.f32 %v3074, %v3486
        %v3627 = vadd.f32 %v3075, %v3489
        %v3628 = vadd.f32 %v3076, %v3492
        %v3629 = vadd.f32 %v3077, %v3494
        %v3630 = vadd.f32 %v3078, %v3496
        %v3631 = vadd.f32 %v3079, %v3499
        %v3632 = vadd.f32 %v3080, %v3502
        %v3633 = vadd.f32 %v3081, %v3504
        %v3634 = vadd.f32 %v3082, %v3506
        %v3635 = vld [vmem:[%s1476] sm:$0xfc]
        %v3636 = vld [vmem:[%s1476 + $0x8] sm:$0xfc]
        %v3637 = vld [vmem:[%s1476 + $0x20] sm:$0x3]
        %v3638 = vld [vmem:[%s1476 + $0x28] sm:$0x3]
        %v3639 = vld [vmem:[%s1476 + $0x30] sm:$0xfc]
        %v3640 = vld [vmem:[%s1476 + $0x38] sm:$0xfc]
        %v3641 = vld [vmem:[%s1476 + $0x50] sm:$0x3]
        %v3642 = vld [vmem:[%s1476 + $0x58] sm:$0x3]
        %v3643 = vld [vmem:[%s1476 + $0x60] sm:$0xfc]
        %v3644 = vld [vmem:[%s1476 + $0x68] sm:$0xfc]
        %v3645 = vld [vmem:[%s1476 + $0x80] sm:$0x3]
        %v3646 = vld [vmem:[%s1476 + $0x88] sm:$0x3]
        %v3647 = vld [vmem:[%s1476 + $0x90] sm:$0xfc]
        %v3648 = vld [vmem:[%s1476 + $0x98] sm:$0xfc]
        %v3649 = vld [vmem:[%s1476 + $0xb0] sm:$0x3]
        %v3650 = vld [vmem:[%s1476 + $0xb8] sm:$0x3]
        %v3651 = vld [vmem:[%s1476 + $0xc0] sm:$0xfc]
        %v3652 = vld [vmem:[%s1476 + $0xc8] sm:$0xfc]
        %v3653 = vld [vmem:[%s1476 + $0xe0] sm:$0x3]
        %v3654 = vld [vmem:[%s1476 + $0xe8] sm:$0x3]
        %v3655 = vld [vmem:[%s1476 + $0xf0] sm:$0xfc]
        %v3656 = vld [vmem:[%s1476 + $0xf8] sm:$0xfc]
        %v3657 = vld [vmem:[%s1476 + $0x110] sm:$0x3]
        %v3658 = vld [vmem:[%s1476 + $0x118] sm:$0x3]
        %v3659 = vld [vmem:[%s1476 + $0x120] sm:$0xfc]
        %v3660 = vld [vmem:[%s1476 + $0x128] sm:$0xfc]
        %v3661 = vld [vmem:[%s1476 + $0x140] sm:$0x3]
        %v3662 = vld [vmem:[%s1476 + $0x148] sm:$0x3]
        %v3663 = vld [vmem:[%s1476 + $0x150] sm:$0xfc]
        %v3664 = vld [vmem:[%s1476 + $0x158] sm:$0xfc]
        %v3665 = vld [vmem:[%s1476 + $0x170] sm:$0x3]
        %v3666 = vld [vmem:[%s1476 + $0x178] sm:$0x3]
        %v3667 = vld [vmem:[%s1476 + $0x180] sm:$0xfc]
        %v3668 = vld [vmem:[%s1476 + $0x188] sm:$0xfc]
        %v3669 = vld [vmem:[%s1476 + $0x1a0] sm:$0x3]
        %v3670 = vld [vmem:[%s1476 + $0x1a8] sm:$0x3]
        %v3671 = vld [vmem:[%s1476 + $0x1b0] sm:$0xfc]
        %v3672 = vld [vmem:[%s1476 + $0x1b8] sm:$0xfc]
        %v3673 = vld [vmem:[%s1476 + $0x1d0] sm:$0x3]
        %v3674 = vld [vmem:[%s1476 + $0x1d8] sm:$0x3]
        %v3675 = vld [vmem:[%s1476 + $0x1e0] sm:$0xfc]
        %v3676 = vld [vmem:[%s1476 + $0x1e8] sm:$0xfc]
        %v3677 = vld [vmem:[%s1476 + $0x200] sm:$0x3]
        %v3678 = vld [vmem:[%s1476 + $0x208] sm:$0x3]
        %v3679 = vld [vmem:[%s1476 + $0x210] sm:$0xfc]
        %v3680 = vld [vmem:[%s1476 + $0x218] sm:$0xfc]
        %v3681 = vld [vmem:[%s1476 + $0x230] sm:$0x3]
        %v3682 = vld [vmem:[%s1476 + $0x238] sm:$0x3]
        %v3683 = vld [vmem:[%s1476 + $0x240] sm:$0xfc]
        %v3684 = vld [vmem:[%s1476 + $0x248] sm:$0xfc]
        %v3685 = vld [vmem:[%s1476 + $0x260] sm:$0x3]
        %v3686 = vld [vmem:[%s1476 + $0x268] sm:$0x3]
        %v3687 = vld [vmem:[%s1476 + $0x270] sm:$0xfc]
        %v3688 = vld [vmem:[%s1476 + $0x278] sm:$0xfc]
        %v3689 = vld [vmem:[%s1476 + $0x290] sm:$0x3]
        %v3690 = vld [vmem:[%s1476 + $0x298] sm:$0x3]
        %v3691 = vld [vmem:[%s1476 + $0x2a0] sm:$0xfc]
        %v3692 = vld [vmem:[%s1476 + $0x2a8] sm:$0xfc]
        %v3693 = vld [vmem:[%s1476 + $0x2c0] sm:$0x3]
        %v3694 = vld [vmem:[%s1476 + $0x2c8] sm:$0x3]
        %v3695 = vld [vmem:[%s1476 + $0x2d0] sm:$0xfc]
        %v3696 = vld [vmem:[%s1476 + $0x2d8] sm:$0xfc]
        %v3697 = vld [vmem:[%s1476 + $0x2f0] sm:$0x3]
        %v3698 = vld [vmem:[%s1476 + $0x2f8] sm:$0x3]
        %v3699 = vlaneseq
        %v3700 = vshrl.u32 %v3699, 7
        %v3701 = vsub.s32 5, %v3700
        %v3702 = vrot.slane %v1573, %v3701
        %v3703 = vlaneseq
        %v3704 = vshrl.u32 %v3703, 7
        %v3705 = vsub.s32 5, %v3704
        %v3706 = vrot.slane %v1574, %v3705
        %v3707 = vmul.f32 %v3635, %v3702
        %v3708 = vmul.f32 %v3636, %v3706
        %v3709 = vmul.f32 %v2885, %v3702
        %v3710 = vmul.f32 %v2886, %v3706
        %v3711 = vmul.f32 %v3637, %v3702
        %v3712 = vmul.f32 %v3638, %v3706
        %v3713 = vmul.f32 %v3639, %v3702
        %v3714 = vmul.f32 %v3640, %v3706
        %v3715 = vmul.f32 %v2889, %v3702
        %v3716 = vmul.f32 %v2890, %v3706
        %v3717 = vmul.f32 %v3641, %v3702
        %v3718 = vmul.f32 %v3642, %v3706
        %v3719 = vmul.f32 %v3643, %v3702
        %v3720 = vmul.f32 %v3644, %v3706
        %v3721 = vmul.f32 %v2893, %v3702
        %v3722 = vmul.f32 %v2894, %v3706
        %v3723 = vmul.f32 %v3645, %v3702
        %v3724 = vmul.f32 %v3646, %v3706
        %v3725 = vmul.f32 %v3647, %v3702
        %v3726 = vmul.f32 %v3648, %v3706
        %v3727 = vmul.f32 %v2897, %v3702
        %v3728 = vmul.f32 %v2898, %v3706
        %v3729 = vmul.f32 %v3649, %v3702
        %v3730 = vmul.f32 %v3650, %v3706
        %v3731 = vmul.f32 %v3651, %v3702
        %v3732 = vmul.f32 %v3652, %v3706
        %v3733 = vmul.f32 %v2901, %v3702
        %v3734 = vmul.f32 %v2902, %v3706
        %v3735 = vmul.f32 %v3653, %v3702
        %v3736 = vmul.f32 %v3654, %v3706
        %v3737 = vmul.f32 %v3655, %v3702
        %v3738 = vmul.f32 %v3656, %v3706
        %v3739 = vmul.f32 %v2905, %v3702
        %v3740 = vmul.f32 %v2906, %v3706
        %v3741 = vmul.f32 %v3657, %v3702
        %v3742 = vmul.f32 %v3658, %v3706
        %v3743 = vmul.f32 %v3659, %v3702
        %v3744 = vmul.f32 %v3660, %v3706
        %v3745 = vmul.f32 %v2909, %v3702
        %v3746 = vmul.f32 %v2910, %v3706
        %v3747 = vmul.f32 %v3661, %v3702
        %v3748 = vmul.f32 %v3662, %v3706
        %v3749 = vmul.f32 %v3663, %v3702
        %v3750 = vmul.f32 %v3664, %v3706
        %v3751 = vmul.f32 %v2913, %v3702
        %v3752 = vmul.f32 %v2914, %v3706
        %v3753 = vmul.f32 %v3665, %v3702
        %v3754 = vmul.f32 %v3666, %v3706
        %v3755 = vmul.f32 %v3667, %v3702
        %v3756 = vmul.f32 %v3668, %v3706
        %v3757 = vmul.f32 %v2917, %v3702
        %v3758 = vmul.f32 %v2918, %v3706
        %v3759 = vmul.f32 %v3669, %v3702
        %v3760 = vmul.f32 %v3670, %v3706
        %v3761 = vmul.f32 %v3671, %v3702
        %v3762 = vmul.f32 %v3672, %v3706
        %v3763 = vmul.f32 %v2921, %v3702
        %v3764 = vmul.f32 %v2922, %v3706
        %v3765 = vmul.f32 %v3673, %v3702
        %v3766 = vmul.f32 %v3674, %v3706
        %v3767 = vmul.f32 %v3675, %v3702
        %v3768 = vmul.f32 %v3676, %v3706
        %v3769 = vmul.f32 %v2925, %v3702
        %v3770 = vmul.f32 %v2926, %v3706
        %v3771 = vmul.f32 %v3677, %v3702
        %v3772 = vmul.f32 %v3678, %v3706
        %v3773 = vmul.f32 %v3679, %v3702
        %v3774 = vmul.f32 %v3680, %v3706
        %v3775 = vmul.f32 %v2929, %v3702
        %v3776 = vmul.f32 %v2930, %v3706
        %v3777 = vmul.f32 %v3681, %v3702
        %v3778 = vmul.f32 %v3682, %v3706
        %v3779 = vmul.f32 %v3683, %v3702
        %v3780 = vmul.f32 %v3684, %v3706
        %v3781 = vmul.f32 %v2933, %v3702
        %v3782 = vmul.f32 %v2934, %v3706
        %v3783 = vmul.f32 %v3685, %v3702
        %v3784 = vmul.f32 %v3686, %v3706
        %v3785 = vmul.f32 %v3687, %v3702
        %v3786 = vmul.f32 %v3688, %v3706
        %v3787 = vmul.f32 %v2937, %v3702
        %v3788 = vmul.f32 %v2938, %v3706
        %v3789 = vmul.f32 %v3689, %v3702
        %v3790 = vmul.f32 %v3690, %v3706
        %v3791 = vmul.f32 %v3691, %v3702
        %v3792 = vmul.f32 %v3692, %v3706
        %v3793 = vmul.f32 %v2941, %v3702
        %v3794 = vmul.f32 %v2942, %v3706
        %v3795 = vmul.f32 %v3693, %v3702
        %v3796 = vmul.f32 %v3694, %v3706
        %v3797 = vmul.f32 %v3695, %v3702
        %v3798 = vmul.f32 %v3696, %v3706
        %v3799 = vmul.f32 %v2945, %v3702
        %v3800 = vmul.f32 %v2946, %v3706
        %v3801 = vmul.f32 %v3697, %v3702
        %v3802 = vmul.f32 %v3698, %v3706
        %v3899 = vrot.slane %v3707, 2
        %v3900 = vrot.slane %v3709, 2
        %v3901 = vsel %vm2594, %v3899, %v3900
        %v3902 = vrot.slane %v3708, 2
        %v3903 = vrot.slane %v3710, 2
        %v3904 = vsel %vm2594, %v3902, %v3903
        %v3905 = vrot.slane %v3711, 2
        %v3906 = vsel %vm2594, %v3900, %v3905
        %v3907 = vrot.slane %v3712, 2
        %v3908 = vsel %vm2594, %v3903, %v3907
        %v3909 = vrot.slane %v3713, 2
        %v3910 = vrot.slane %v3715, 2
        %v3911 = vsel %vm2594, %v3909, %v3910
        %v3912 = vrot.slane %v3714, 2
        %v3913 = vrot.slane %v3716, 2
        %v3914 = vsel %vm2594, %v3912, %v3913
        %v3915 = vrot.slane %v3717, 2
        %v3916 = vsel %vm2594, %v3910, %v3915
        %v3917 = vrot.slane %v3718, 2
        %v3918 = vsel %vm2594, %v3913, %v3917
        %v3919 = vrot.slane %v3719, 2
        %v3920 = vrot.slane %v3721, 2
        %v3921 = vsel %vm2594, %v3919, %v3920
        %v3922 = vrot.slane %v3720, 2
        %v3923 = vrot.slane %v3722, 2
        %v3924 = vsel %vm2594, %v3922, %v3923
        %v3925 = vrot.slane %v3723, 2
        %v3926 = vsel %vm2594, %v3920, %v3925
        %v3927 = vrot.slane %v3724, 2
        %v3928 = vsel %vm2594, %v3923, %v3927
        %v3929 = vrot.slane %v3725, 2
        %v3930 = vrot.slane %v3727, 2
        %v3931 = vsel %vm2594, %v3929, %v3930
        %v3932 = vrot.slane %v3726, 2
        %v3933 = vrot.slane %v3728, 2
        %v3934 = vsel %vm2594, %v3932, %v3933
        %v3935 = vrot.slane %v3729, 2
        %v3936 = vsel %vm2594, %v3930, %v3935
        %v3937 = vrot.slane %v3730, 2
        %v3938 = vsel %vm2594, %v3933, %v3937
        %v3939 = vrot.slane %v3731, 2
        %v3940 = vrot.slane %v3733, 2
        %v3941 = vsel %vm2594, %v3939, %v3940
        %v3942 = vrot.slane %v3732, 2
        %v3943 = vrot.slane %v3734, 2
        %v3944 = vsel %vm2594, %v3942, %v3943
        %v3945 = vrot.slane %v3735, 2
        %v3946 = vsel %vm2594, %v3940, %v3945
        %v3947 = vrot.slane %v3736, 2
        %v3948 = vsel %vm2594, %v3943, %v3947
        %v3949 = vrot.slane %v3737, 2
        %v3950 = vrot.slane %v3739, 2
        %v3951 = vsel %vm2594, %v3949, %v3950
        %v3952 = vrot.slane %v3738, 2
        %v3953 = vrot.slane %v3740, 2
        %v3954 = vsel %vm2594, %v3952, %v3953
        %v3955 = vrot.slane %v3741, 2
        %v3956 = vsel %vm2594, %v3950, %v3955
        %v3957 = vrot.slane %v3742, 2
        %v3958 = vsel %vm2594, %v3953, %v3957
        %v3959 = vrot.slane %v3743, 2
        %v3960 = vrot.slane %v3745, 2
        %v3961 = vsel %vm2594, %v3959, %v3960
        %v3962 = vrot.slane %v3744, 2
        %v3963 = vrot.slane %v3746, 2
        %v3964 = vsel %vm2594, %v3962, %v3963
        %v3965 = vrot.slane %v3747, 2
        %v3966 = vsel %vm2594, %v3960, %v3965
        %v3967 = vrot.slane %v3748, 2
        %v3968 = vsel %vm2594, %v3963, %v3967
        %v3969 = vrot.slane %v3749, 2
        %v3970 = vrot.slane %v3751, 2
        %v3971 = vsel %vm2594, %v3969, %v3970
        %v3972 = vrot.slane %v3750, 2
        %v3973 = vrot.slane %v3752, 2
        %v3974 = vsel %vm2594, %v3972, %v3973
        %v3975 = vrot.slane %v3753, 2
        %v3976 = vsel %vm2594, %v3970, %v3975
        %v3977 = vrot.slane %v3754, 2
        %v3978 = vsel %vm2594, %v3973, %v3977
        %v3979 = vrot.slane %v3755, 2
        %v3980 = vrot.slane %v3757, 2
        %v3981 = vsel %vm2594, %v3979, %v3980
        %v3982 = vrot.slane %v3756, 2
        %v3983 = vrot.slane %v3758, 2
        %v3984 = vsel %vm2594, %v3982, %v3983
        %v3985 = vrot.slane %v3759, 2
        %v3986 = vsel %vm2594, %v3980, %v3985
        %v3987 = vrot.slane %v3760, 2
        %v3988 = vsel %vm2594, %v3983, %v3987
        %v3989 = vrot.slane %v3761, 2
        %v3990 = vrot.slane %v3763, 2
        %v3991 = vsel %vm2594, %v3989, %v3990
        %v3992 = vrot.slane %v3762, 2
        %v3993 = vrot.slane %v3764, 2
        %v3994 = vsel %vm2594, %v3992, %v3993
        %v3995 = vrot.slane %v3765, 2
        %v3996 = vsel %vm2594, %v3990, %v3995
        %v3997 = vrot.slane %v3766, 2
        %v3998 = vsel %vm2594, %v3993, %v3997
        %v3999 = vrot.slane %v3767, 2
        %v4000 = vrot.slane %v3769, 2
        %v4001 = vsel %vm2594, %v3999, %v4000
        %v4002 = vrot.slane %v3768, 2
        %v4003 = vrot.slane %v3770, 2
        %v4004 = vsel %vm2594, %v4002, %v4003
        %v4005 = vrot.slane %v3771, 2
        %v4006 = vsel %vm2594, %v4000, %v4005
        %v4007 = vrot.slane %v3772, 2
        %v4008 = vsel %vm2594, %v4003, %v4007
        %v4009 = vrot.slane %v3773, 2
        %v4010 = vrot.slane %v3775, 2
        %v4011 = vsel %vm2594, %v4009, %v4010
        %v4012 = vrot.slane %v3774, 2
        %v4013 = vrot.slane %v3776, 2
        %v4014 = vsel %vm2594, %v4012, %v4013
        %v4015 = vrot.slane %v3777, 2
        %v4016 = vsel %vm2594, %v4010, %v4015
        %v4017 = vrot.slane %v3778, 2
        %v4018 = vsel %vm2594, %v4013, %v4017
        %v4019 = vrot.slane %v3779, 2
        %v4020 = vrot.slane %v3781, 2
        %v4021 = vsel %vm2594, %v4019, %v4020
        %v4022 = vrot.slane %v3780, 2
        %v4023 = vrot.slane %v3782, 2
        %v4024 = vsel %vm2594, %v4022, %v4023
        %v4025 = vrot.slane %v3783, 2
        %v4026 = vsel %vm2594, %v4020, %v4025
        %v4027 = vrot.slane %v3784, 2
        %v4028 = vsel %vm2594, %v4023, %v4027
        %v4029 = vrot.slane %v3785, 2
        %v4030 = vrot.slane %v3787, 2
        %v4031 = vsel %vm2594, %v4029, %v4030
        %v4032 = vrot.slane %v3786, 2
        %v4033 = vrot.slane %v3788, 2
        %v4034 = vsel %vm2594, %v4032, %v4033
        %v4035 = vrot.slane %v3789, 2
        %v4036 = vsel %vm2594, %v4030, %v4035
        %v4037 = vrot.slane %v3790, 2
        %v4038 = vsel %vm2594, %v4033, %v4037
        %v4039 = vrot.slane %v3791, 2
        %v4040 = vrot.slane %v3793, 2
        %v4041 = vsel %vm2594, %v4039, %v4040
        %v4042 = vrot.slane %v3792, 2
        %v4043 = vrot.slane %v3794, 2
        %v4044 = vsel %vm2594, %v4042, %v4043
        %v4045 = vrot.slane %v3795, 2
        %v4046 = vsel %vm2594, %v4040, %v4045
        %v4047 = vrot.slane %v3796, 2
        %v4048 = vsel %vm2594, %v4043, %v4047
        %v4049 = vrot.slane %v3797, 2
        %v4050 = vrot.slane %v3799, 2
        %v4051 = vsel %vm2594, %v4049, %v4050
        %v4052 = vrot.slane %v3798, 2
        %v4053 = vrot.slane %v3800, 2
        %v4054 = vsel %vm2594, %v4052, %v4053
        %v4055 = vrot.slane %v3801, 2
        %v4056 = vsel %vm2594, %v4050, %v4055
        %v4057 = vrot.slane %v3802, 2
        %v4058 = vsel %vm2594, %v4053, %v4057
        %v4123 = vadd.f32 %v3571, %v3901
        %v4124 = vadd.f32 %v3572, %v3904
        %v4125 = vadd.f32 %v3573, %v3906
        %v4126 = vadd.f32 %v3574, %v3908
        %v4127 = vadd.f32 %v3575, %v3911
        %v4128 = vadd.f32 %v3576, %v3914
        %v4129 = vadd.f32 %v3577, %v3916
        %v4130 = vadd.f32 %v3578, %v3918
        %v4131 = vadd.f32 %v3579, %v3921
        %v4132 = vadd.f32 %v3580, %v3924
        %v4133 = vadd.f32 %v3581, %v3926
        %v4134 = vadd.f32 %v3582, %v3928
        %v4135 = vadd.f32 %v3583, %v3931
        %v4136 = vadd.f32 %v3584, %v3934
        %v4137 = vadd.f32 %v3585, %v3936
        %v4138 = vadd.f32 %v3586, %v3938
        %v4139 = vadd.f32 %v3587, %v3941
        %v4140 = vadd.f32 %v3588, %v3944
        %v4141 = vadd.f32 %v3589, %v3946
        %v4142 = vadd.f32 %v3590, %v3948
        %v4143 = vadd.f32 %v3591, %v3951
        %v4144 = vadd.f32 %v3592, %v3954
        %v4145 = vadd.f32 %v3593, %v3956
        %v4146 = vadd.f32 %v3594, %v3958
        %v4147 = vadd.f32 %v3595, %v3961
        %v4148 = vadd.f32 %v3596, %v3964
        %v4149 = vadd.f32 %v3597, %v3966
        %v4150 = vadd.f32 %v3598, %v3968
        %v4151 = vadd.f32 %v3599, %v3971
        %v4152 = vadd.f32 %v3600, %v3974
        %v4153 = vadd.f32 %v3601, %v3976
        %v4154 = vadd.f32 %v3602, %v3978
        %v4155 = vadd.f32 %v3603, %v3981
        %v4156 = vadd.f32 %v3604, %v3984
        %v4157 = vadd.f32 %v3605, %v3986
        %v4158 = vadd.f32 %v3606, %v3988
        %v4159 = vadd.f32 %v3607, %v3991
        %v4160 = vadd.f32 %v3608, %v3994
        %v4161 = vadd.f32 %v3609, %v3996
        %v4162 = vadd.f32 %v3610, %v3998
        %v4163 = vadd.f32 %v3611, %v4001
        %v4164 = vadd.f32 %v3612, %v4004
        %v4165 = vadd.f32 %v3613, %v4006
        %v4166 = vadd.f32 %v3614, %v4008
        %v4167 = vadd.f32 %v3615, %v4011
        %v4168 = vadd.f32 %v3616, %v4014
        %v4169 = vadd.f32 %v3617, %v4016
        %v4170 = vadd.f32 %v3618, %v4018
        %v4171 = vadd.f32 %v3619, %v4021
        %v4172 = vadd.f32 %v3620, %v4024
        %v4173 = vadd.f32 %v3621, %v4026
        %v4174 = vadd.f32 %v3622, %v4028
        %v4175 = vadd.f32 %v3623, %v4031
        %v4176 = vadd.f32 %v3624, %v4034
        %v4177 = vadd.f32 %v3625, %v4036
        %v4178 = vadd.f32 %v3626, %v4038
        %v4179 = vadd.f32 %v3627, %v4041
        %v4180 = vadd.f32 %v3628, %v4044
        %v4181 = vadd.f32 %v3629, %v4046
        %v4182 = vadd.f32 %v3630, %v4048
        %v4183 = vadd.f32 %v3631, %v4051
        %v4184 = vadd.f32 %v3632, %v4054
        %v4185 = vadd.f32 %v3633, %v4056
        %v4186 = vadd.f32 %v3634, %v4058
        %s4187 = scalar_lea.vmem [#allocation2], 96
        %v4188 = vld [vmem:[%s4187] sm:$0xff]
        %v4189 = vld [vmem:[%s4187 + $0x8] sm:$0xff]
        %v4190 = vld [vmem:[%s4187 + $0x10] sm:$0xff]
        %v4191 = vld [vmem:[%s4187 + $0x18] sm:$0xff]
        %v4192 = vld [vmem:[%s4187 + $0x30] sm:$0xff]
        %v4193 = vld [vmem:[%s4187 + $0x38] sm:$0xff]
        %v4194 = vld [vmem:[%s4187 + $0x40] sm:$0xff]
        %v4195 = vld [vmem:[%s4187 + $0x48] sm:$0xff]
        %v4196 = vld [vmem:[%s4187 + $0x60] sm:$0xff]
        %v4197 = vld [vmem:[%s4187 + $0x68] sm:$0xff]
        %v4198 = vld [vmem:[%s4187 + $0x70] sm:$0xff]
        %v4199 = vld [vmem:[%s4187 + $0x78] sm:$0xff]
        %v4200 = vld [vmem:[%s4187 + $0x90] sm:$0xff]
        %v4201 = vld [vmem:[%s4187 + $0x98] sm:$0xff]
        %v4202 = vld [vmem:[%s4187 + $0xa0] sm:$0xff]
        %v4203 = vld [vmem:[%s4187 + $0xa8] sm:$0xff]
        %v4204 = vld [vmem:[%s4187 + $0xc0] sm:$0xff]
        %v4205 = vld [vmem:[%s4187 + $0xc8] sm:$0xff]
        %v4206 = vld [vmem:[%s4187 + $0xd0] sm:$0xff]
        %v4207 = vld [vmem:[%s4187 + $0xd8] sm:$0xff]
        %v4208 = vld [vmem:[%s4187 + $0xf0] sm:$0xff]
        %v4209 = vld [vmem:[%s4187 + $0xf8] sm:$0xff]
        %v4210 = vld [vmem:[%s4187 + $0x100] sm:$0xff]
        %v4211 = vld [vmem:[%s4187 + $0x108] sm:$0xff]
        %v4212 = vld [vmem:[%s4187 + $0x120] sm:$0xff]
        %v4213 = vld [vmem:[%s4187 + $0x128] sm:$0xff]
        %v4214 = vld [vmem:[%s4187 + $0x130] sm:$0xff]
        %v4215 = vld [vmem:[%s4187 + $0x138] sm:$0xff]
        %v4216 = vld [vmem:[%s4187 + $0x150] sm:$0xff]
        %v4217 = vld [vmem:[%s4187 + $0x158] sm:$0xff]
        %v4218 = vld [vmem:[%s4187 + $0x160] sm:$0xff]
        %v4219 = vld [vmem:[%s4187 + $0x168] sm:$0xff]
        %v4220 = vld [vmem:[%s4187 + $0x180] sm:$0xff]
        %v4221 = vld [vmem:[%s4187 + $0x188] sm:$0xff]
        %v4222 = vld [vmem:[%s4187 + $0x190] sm:$0xff]
        %v4223 = vld [vmem:[%s4187 + $0x198] sm:$0xff]
        %v4224 = vld [vmem:[%s4187 + $0x1b0] sm:$0xff]
        %v4225 = vld [vmem:[%s4187 + $0x1b8] sm:$0xff]
        %v4226 = vld [vmem:[%s4187 + $0x1c0] sm:$0xff]
        %v4227 = vld [vmem:[%s4187 + $0x1c8] sm:$0xff]
        %v4228 = vld [vmem:[%s4187 + $0x1e0] sm:$0xff]
        %v4229 = vld [vmem:[%s4187 + $0x1e8] sm:$0xff]
        %v4230 = vld [vmem:[%s4187 + $0x1f0] sm:$0xff]
        %v4231 = vld [vmem:[%s4187 + $0x1f8] sm:$0xff]
        %v4232 = vld [vmem:[%s4187 + $0x210] sm:$0xff]
        %v4233 = vld [vmem:[%s4187 + $0x218] sm:$0xff]
        %v4234 = vld [vmem:[%s4187 + $0x220] sm:$0xff]
        %v4235 = vld [vmem:[%s4187 + $0x228] sm:$0xff]
        %v4236 = vld [vmem:[%s4187 + $0x240] sm:$0xff]
        %v4237 = vld [vmem:[%s4187 + $0x248] sm:$0xff]
        %v4238 = vld [vmem:[%s4187 + $0x250] sm:$0xff]
        %v4239 = vld [vmem:[%s4187 + $0x258] sm:$0xff]
        %v4240 = vld [vmem:[%s4187 + $0x270] sm:$0xff]
        %v4241 = vld [vmem:[%s4187 + $0x278] sm:$0xff]
        %v4242 = vld [vmem:[%s4187 + $0x280] sm:$0xff]
        %v4243 = vld [vmem:[%s4187 + $0x288] sm:$0xff]
        %v4244 = vld [vmem:[%s4187 + $0x2a0] sm:$0xff]
        %v4245 = vld [vmem:[%s4187 + $0x2a8] sm:$0xff]
        %v4246 = vld [vmem:[%s4187 + $0x2b0] sm:$0xff]
        %v4247 = vld [vmem:[%s4187 + $0x2b8] sm:$0xff]
        %v4248 = vld [vmem:[%s4187 + $0x2d0] sm:$0xff]
        %v4249 = vld [vmem:[%s4187 + $0x2d8] sm:$0xff]
        %v4250 = vld [vmem:[%s4187 + $0x2e0] sm:$0xff]
        %v4251 = vld [vmem:[%s4187 + $0x2e8] sm:$0xff]
        %v4252 = vlaneseq
        %v4253 = vshrl.u32 %v4252, 7
        %v4254 = vsub.s32 6, %v4253
        %v4255 = vrot.slane %v1573, %v4254
        %v4256 = vlaneseq
        %v4257 = vshrl.u32 %v4256, 7
        %v4258 = vsub.s32 6, %v4257
        %v4259 = vrot.slane %v1574, %v4258
        %v4260 = vmul.f32 %v4188, %v4255
        %v4261 = vmul.f32 %v4189, %v4259
        %v4262 = vmul.f32 %v4190, %v4255
        %v4263 = vmul.f32 %v4191, %v4259
        %v4264 = vmul.f32 %v4192, %v4255
        %v4265 = vmul.f32 %v4193, %v4259
        %v4266 = vmul.f32 %v4194, %v4255
        %v4267 = vmul.f32 %v4195, %v4259
        %v4268 = vmul.f32 %v4196, %v4255
        %v4269 = vmul.f32 %v4197, %v4259
        %v4270 = vmul.f32 %v4198, %v4255
        %v4271 = vmul.f32 %v4199, %v4259
        %v4272 = vmul.f32 %v4200, %v4255
        %v4273 = vmul.f32 %v4201, %v4259
        %v4274 = vmul.f32 %v4202, %v4255
        %v4275 = vmul.f32 %v4203, %v4259
        %v4276 = vmul.f32 %v4204, %v4255
        %v4277 = vmul.f32 %v4205, %v4259
        %v4278 = vmul.f32 %v4206, %v4255
        %v4279 = vmul.f32 %v4207, %v4259
        %v4280 = vmul.f32 %v4208, %v4255
        %v4281 = vmul.f32 %v4209, %v4259
        %v4282 = vmul.f32 %v4210, %v4255
        %v4283 = vmul.f32 %v4211, %v4259
        %v4284 = vmul.f32 %v4212, %v4255
        %v4285 = vmul.f32 %v4213, %v4259
        %v4286 = vmul.f32 %v4214, %v4255
        %v4287 = vmul.f32 %v4215, %v4259
        %v4288 = vmul.f32 %v4216, %v4255
        %v4289 = vmul.f32 %v4217, %v4259
        %v4290 = vmul.f32 %v4218, %v4255
        %v4291 = vmul.f32 %v4219, %v4259
        %v4292 = vmul.f32 %v4220, %v4255
        %v4293 = vmul.f32 %v4221, %v4259
        %v4294 = vmul.f32 %v4222, %v4255
        %v4295 = vmul.f32 %v4223, %v4259
        %v4296 = vmul.f32 %v4224, %v4255
        %v4297 = vmul.f32 %v4225, %v4259
        %v4298 = vmul.f32 %v4226, %v4255
        %v4299 = vmul.f32 %v4227, %v4259
        %v4300 = vmul.f32 %v4228, %v4255
        %v4301 = vmul.f32 %v4229, %v4259
        %v4302 = vmul.f32 %v4230, %v4255
        %v4303 = vmul.f32 %v4231, %v4259
        %v4304 = vmul.f32 %v4232, %v4255
        %v4305 = vmul.f32 %v4233, %v4259
        %v4306 = vmul.f32 %v4234, %v4255
        %v4307 = vmul.f32 %v4235, %v4259
        %v4308 = vmul.f32 %v4236, %v4255
        %v4309 = vmul.f32 %v4237, %v4259
        %v4310 = vmul.f32 %v4238, %v4255
        %v4311 = vmul.f32 %v4239, %v4259
        %v4312 = vmul.f32 %v4240, %v4255
        %v4313 = vmul.f32 %v4241, %v4259
        %v4314 = vmul.f32 %v4242, %v4255
        %v4315 = vmul.f32 %v4243, %v4259
        %v4316 = vmul.f32 %v4244, %v4255
        %v4317 = vmul.f32 %v4245, %v4259
        %v4318 = vmul.f32 %v4246, %v4255
        %v4319 = vmul.f32 %v4247, %v4259
        %v4320 = vmul.f32 %v4248, %v4255
        %v4321 = vmul.f32 %v4249, %v4259
        %v4322 = vmul.f32 %v4250, %v4255
        %v4323 = vmul.f32 %v4251, %v4259
        %v4324 = vadd.f32 %v4123, %v4260
        %v4325 = vadd.f32 %v4124, %v4261
        %v4326 = vadd.f32 %v4125, %v4262
        %v4327 = vadd.f32 %v4126, %v4263
        %v4328 = vadd.f32 %v4127, %v4264
        %v4329 = vadd.f32 %v4128, %v4265
        %v4330 = vadd.f32 %v4129, %v4266
        %v4331 = vadd.f32 %v4130, %v4267
        %v4332 = vadd.f32 %v4131, %v4268
        %v4333 = vadd.f32 %v4132, %v4269
        %v4334 = vadd.f32 %v4133, %v4270
        %v4335 = vadd.f32 %v4134, %v4271
        %v4336 = vadd.f32 %v4135, %v4272
        %v4337 = vadd.f32 %v4136, %v4273
        %v4338 = vadd.f32 %v4137, %v4274
        %v4339 = vadd.f32 %v4138, %v4275
        %v4340 = vadd.f32 %v4139, %v4276
        %v4341 = vadd.f32 %v4140, %v4277
        %v4342 = vadd.f32 %v4141, %v4278
        %v4343 = vadd.f32 %v4142, %v4279
        %v4344 = vadd.f32 %v4143, %v4280
        %v4345 = vadd.f32 %v4144, %v4281
        %v4346 = vadd.f32 %v4145, %v4282
        %v4347 = vadd.f32 %v4146, %v4283
        %v4348 = vadd.f32 %v4147, %v4284
        %v4349 = vadd.f32 %v4148, %v4285
        %v4350 = vadd.f32 %v4149, %v4286
        %v4351 = vadd.f32 %v4150, %v4287
        %v4352 = vadd.f32 %v4151, %v4288
        %v4353 = vadd.f32 %v4152, %v4289
        %v4354 = vadd.f32 %v4153, %v4290
        %v4355 = vadd.f32 %v4154, %v4291
        %v4356 = vadd.f32 %v4155, %v4292
        %v4357 = vadd.f32 %v4156, %v4293
        %v4358 = vadd.f32 %v4157, %v4294
        %v4359 = vadd.f32 %v4158, %v4295
        %v4360 = vadd.f32 %v4159, %v4296
        %v4361 = vadd.f32 %v4160, %v4297
        %v4362 = vadd.f32 %v4161, %v4298
        %v4363 = vadd.f32 %v4162, %v4299
        %v4364 = vadd.f32 %v4163, %v4300
        %v4365 = vadd.f32 %v4164, %v4301
        %v4366 = vadd.f32 %v4165, %v4302
        %v4367 = vadd.f32 %v4166, %v4303
        %v4368 = vadd.f32 %v4167, %v4304
        %v4369 = vadd.f32 %v4168, %v4305
        %v4370 = vadd.f32 %v4169, %v4306
        %v4371 = vadd.f32 %v4170, %v4307
        %v4372 = vadd.f32 %v4171, %v4308
        %v4373 = vadd.f32 %v4172, %v4309
        %v4374 = vadd.f32 %v4173, %v4310
        %v4375 = vadd.f32 %v4174, %v4311
        %v4376 = vadd.f32 %v4175, %v4312
        %v4377 = vadd.f32 %v4176, %v4313
        %v4378 = vadd.f32 %v4177, %v4314
        %v4379 = vadd.f32 %v4178, %v4315
        %v4380 = vadd.f32 %v4179, %v4316
        %v4381 = vadd.f32 %v4180, %v4317
        %v4382 = vadd.f32 %v4181, %v4318
        %v4383 = vadd.f32 %v4182, %v4319
        %v4384 = vadd.f32 %v4183, %v4320
        %v4385 = vadd.f32 %v4184, %v4321
        %v4386 = vadd.f32 %v4185, %v4322
        %v4387 = vadd.f32 %v4186, %v4323
        %v4388 = vld [vmem:[%s4187] sm:$0xfe]
        %v4389 = vld [vmem:[%s4187 + $0x8] sm:$0xfe]
        %v4390 = vld [vmem:[%s4187 + $0x20] sm:$0x1]
        %v4391 = vld [vmem:[%s4187 + $0x28] sm:$0x1]
        %v4392 = vld [vmem:[%s4187 + $0x30] sm:$0xfe]
        %v4393 = vld [vmem:[%s4187 + $0x38] sm:$0xfe]
        %v4394 = vld [vmem:[%s4187 + $0x50] sm:$0x1]
        %v4395 = vld [vmem:[%s4187 + $0x58] sm:$0x1]
        %v4396 = vld [vmem:[%s4187 + $0x60] sm:$0xfe]
        %v4397 = vld [vmem:[%s4187 + $0x68] sm:$0xfe]
        %v4398 = vld [vmem:[%s4187 + $0x80] sm:$0x1]
        %v4399 = vld [vmem:[%s4187 + $0x88] sm:$0x1]
        %v4400 = vld [vmem:[%s4187 + $0x90] sm:$0xfe]
        %v4401 = vld [vmem:[%s4187 + $0x98] sm:$0xfe]
        %v4402 = vld [vmem:[%s4187 + $0xb0] sm:$0x1]
        %v4403 = vld [vmem:[%s4187 + $0xb8] sm:$0x1]
        %v4404 = vld [vmem:[%s4187 + $0xc0] sm:$0xfe]
        %v4405 = vld [vmem:[%s4187 + $0xc8] sm:$0xfe]
        %v4406 = vld [vmem:[%s4187 + $0xe0] sm:$0x1]
        %v4407 = vld [vmem:[%s4187 + $0xe8] sm:$0x1]
        %v4408 = vld [vmem:[%s4187 + $0xf0] sm:$0xfe]
        %v4409 = vld [vmem:[%s4187 + $0xf8] sm:$0xfe]
        %v4410 = vld [vmem:[%s4187 + $0x110] sm:$0x1]
        %v4411 = vld [vmem:[%s4187 + $0x118] sm:$0x1]
        %v4412 = vld [vmem:[%s4187 + $0x120] sm:$0xfe]
        %v4413 = vld [vmem:[%s4187 + $0x128] sm:$0xfe]
        %v4414 = vld [vmem:[%s4187 + $0x140] sm:$0x1]
        %v4415 = vld [vmem:[%s4187 + $0x148] sm:$0x1]
        %v4416 = vld [vmem:[%s4187 + $0x150] sm:$0xfe]
        %v4417 = vld [vmem:[%s4187 + $0x158] sm:$0xfe]
        %v4418 = vld [vmem:[%s4187 + $0x170] sm:$0x1]
        %v4419 = vld [vmem:[%s4187 + $0x178] sm:$0x1]
        %v4420 = vld [vmem:[%s4187 + $0x180] sm:$0xfe]
        %v4421 = vld [vmem:[%s4187 + $0x188] sm:$0xfe]
        %v4422 = vld [vmem:[%s4187 + $0x1a0] sm:$0x1]
        %v4423 = vld [vmem:[%s4187 + $0x1a8] sm:$0x1]
        %v4424 = vld [vmem:[%s4187 + $0x1b0] sm:$0xfe]
        %v4425 = vld [vmem:[%s4187 + $0x1b8] sm:$0xfe]
        %v4426 = vld [vmem:[%s4187 + $0x1d0] sm:$0x1]
        %v4427 = vld [vmem:[%s4187 + $0x1d8] sm:$0x1]
        %v4428 = vld [vmem:[%s4187 + $0x1e0] sm:$0xfe]
        %v4429 = vld [vmem:[%s4187 + $0x1e8] sm:$0xfe]
        %v4430 = vld [vmem:[%s4187 + $0x200] sm:$0x1]
        %v4431 = vld [vmem:[%s4187 + $0x208] sm:$0x1]
        %v4432 = vld [vmem:[%s4187 + $0x210] sm:$0xfe]
        %v4433 = vld [vmem:[%s4187 + $0x218] sm:$0xfe]
        %v4434 = vld [vmem:[%s4187 + $0x230] sm:$0x1]
        %v4435 = vld [vmem:[%s4187 + $0x238] sm:$0x1]
        %v4436 = vld [vmem:[%s4187 + $0x240] sm:$0xfe]
        %v4437 = vld [vmem:[%s4187 + $0x248] sm:$0xfe]
        %v4438 = vld [vmem:[%s4187 + $0x260] sm:$0x1]
        %v4439 = vld [vmem:[%s4187 + $0x268] sm:$0x1]
        %v4440 = vld [vmem:[%s4187 + $0x270] sm:$0xfe]
        %v4441 = vld [vmem:[%s4187 + $0x278] sm:$0xfe]
        %v4442 = vld [vmem:[%s4187 + $0x290] sm:$0x1]
        %v4443 = vld [vmem:[%s4187 + $0x298] sm:$0x1]
        %v4444 = vld [vmem:[%s4187 + $0x2a0] sm:$0xfe]
        %v4445 = vld [vmem:[%s4187 + $0x2a8] sm:$0xfe]
        %v4446 = vld [vmem:[%s4187 + $0x2c0] sm:$0x1]
        %v4447 = vld [vmem:[%s4187 + $0x2c8] sm:$0x1]
        %v4448 = vld [vmem:[%s4187 + $0x2d0] sm:$0xfe]
        %v4449 = vld [vmem:[%s4187 + $0x2d8] sm:$0xfe]
        %v4450 = vld [vmem:[%s4187 + $0x2f0] sm:$0x1]
        %v4451 = vld [vmem:[%s4187 + $0x2f8] sm:$0x1]
        %v4452 = vlaneseq
        %v4453 = vshrl.u32 %v4452, 7
        %v4454 = vsub.s32 7, %v4453
        %v4455 = vrot.slane %v1573, %v4454
        %v4456 = vlaneseq
        %v4457 = vshrl.u32 %v4456, 7
        %v4458 = vsub.s32 7, %v4457
        %v4459 = vrot.slane %v1574, %v4458
        %v4460 = vmul.f32 %v4388, %v4455
        %v4461 = vmul.f32 %v4389, %v4459
        %v4462 = vmul.f32 %v4190, %v4455
        %v4463 = vmul.f32 %v4191, %v4459
        %v4464 = vmul.f32 %v4390, %v4455
        %v4465 = vmul.f32 %v4391, %v4459
        %v4466 = vmul.f32 %v4392, %v4455
        %v4467 = vmul.f32 %v4393, %v4459
        %v4468 = vmul.f32 %v4194, %v4455
        %v4469 = vmul.f32 %v4195, %v4459
        %v4470 = vmul.f32 %v4394, %v4455
        %v4471 = vmul.f32 %v4395, %v4459
        %v4472 = vmul.f32 %v4396, %v4455
        %v4473 = vmul.f32 %v4397, %v4459
        %v4474 = vmul.f32 %v4198, %v4455
        %v4475 = vmul.f32 %v4199, %v4459
        %v4476 = vmul.f32 %v4398, %v4455
        %v4477 = vmul.f32 %v4399, %v4459
        %v4478 = vmul.f32 %v4400, %v4455
        %v4479 = vmul.f32 %v4401, %v4459
        %v4480 = vmul.f32 %v4202, %v4455
        %v4481 = vmul.f32 %v4203, %v4459
        %v4482 = vmul.f32 %v4402, %v4455
        %v4483 = vmul.f32 %v4403, %v4459
        %v4484 = vmul.f32 %v4404, %v4455
        %v4485 = vmul.f32 %v4405, %v4459
        %v4486 = vmul.f32 %v4206, %v4455
        %v4487 = vmul.f32 %v4207, %v4459
        %v4488 = vmul.f32 %v4406, %v4455
        %v4489 = vmul.f32 %v4407, %v4459
        %v4490 = vmul.f32 %v4408, %v4455
        %v4491 = vmul.f32 %v4409, %v4459
        %v4492 = vmul.f32 %v4210, %v4455
        %v4493 = vmul.f32 %v4211, %v4459
        %v4494 = vmul.f32 %v4410, %v4455
        %v4495 = vmul.f32 %v4411, %v4459
        %v4496 = vmul.f32 %v4412, %v4455
        %v4497 = vmul.f32 %v4413, %v4459
        %v4498 = vmul.f32 %v4214, %v4455
        %v4499 = vmul.f32 %v4215, %v4459
        %v4500 = vmul.f32 %v4414, %v4455
        %v4501 = vmul.f32 %v4415, %v4459
        %v4502 = vmul.f32 %v4416, %v4455
        %v4503 = vmul.f32 %v4417, %v4459
        %v4504 = vmul.f32 %v4218, %v4455
        %v4505 = vmul.f32 %v4219, %v4459
        %v4506 = vmul.f32 %v4418, %v4455
        %v4507 = vmul.f32 %v4419, %v4459
        %v4508 = vmul.f32 %v4420, %v4455
        %v4509 = vmul.f32 %v4421, %v4459
        %v4510 = vmul.f32 %v4222, %v4455
        %v4511 = vmul.f32 %v4223, %v4459
        %v4512 = vmul.f32 %v4422, %v4455
        %v4513 = vmul.f32 %v4423, %v4459
        %v4514 = vmul.f32 %v4424, %v4455
        %v4515 = vmul.f32 %v4425, %v4459
        %v4516 = vmul.f32 %v4226, %v4455
        %v4517 = vmul.f32 %v4227, %v4459
        %v4518 = vmul.f32 %v4426, %v4455
        %v4519 = vmul.f32 %v4427, %v4459
        %v4520 = vmul.f32 %v4428, %v4455
        %v4521 = vmul.f32 %v4429, %v4459
        %v4522 = vmul.f32 %v4230, %v4455
        %v4523 = vmul.f32 %v4231, %v4459
        %v4524 = vmul.f32 %v4430, %v4455
        %v4525 = vmul.f32 %v4431, %v4459
        %v4526 = vmul.f32 %v4432, %v4455
        %v4527 = vmul.f32 %v4433, %v4459
        %v4528 = vmul.f32 %v4234, %v4455
        %v4529 = vmul.f32 %v4235, %v4459
        %v4530 = vmul.f32 %v4434, %v4455
        %v4531 = vmul.f32 %v4435, %v4459
        %v4532 = vmul.f32 %v4436, %v4455
        %v4533 = vmul.f32 %v4437, %v4459
        %v4534 = vmul.f32 %v4238, %v4455
        %v4535 = vmul.f32 %v4239, %v4459
        %v4536 = vmul.f32 %v4438, %v4455
        %v4537 = vmul.f32 %v4439, %v4459
        %v4538 = vmul.f32 %v4440, %v4455
        %v4539 = vmul.f32 %v4441, %v4459
        %v4540 = vmul.f32 %v4242, %v4455
        %v4541 = vmul.f32 %v4243, %v4459
        %v4542 = vmul.f32 %v4442, %v4455
        %v4543 = vmul.f32 %v4443, %v4459
        %v4544 = vmul.f32 %v4444, %v4455
        %v4545 = vmul.f32 %v4445, %v4459
        %v4546 = vmul.f32 %v4246, %v4455
        %v4547 = vmul.f32 %v4247, %v4459
        %v4548 = vmul.f32 %v4446, %v4455
        %v4549 = vmul.f32 %v4447, %v4459
        %v4550 = vmul.f32 %v4448, %v4455
        %v4551 = vmul.f32 %v4449, %v4459
        %v4552 = vmul.f32 %v4250, %v4455
        %v4553 = vmul.f32 %v4251, %v4459
        %v4554 = vmul.f32 %v4450, %v4455
        %v4555 = vmul.f32 %v4451, %v4459
        %v4652 = vrot.slane %v4460, 1
        %v4653 = vrot.slane %v4462, 1
        %v4654 = vsel %vm2041, %v4652, %v4653
        %v4655 = vrot.slane %v4461, 1
        %v4656 = vrot.slane %v4463, 1
        %v4657 = vsel %vm2041, %v4655, %v4656
        %v4658 = vrot.slane %v4464, 1
        %v4659 = vsel %vm2041, %v4653, %v4658
        %v4660 = vrot.slane %v4465, 1
        %v4661 = vsel %vm2041, %v4656, %v4660
        %v4662 = vrot.slane %v4466, 1
        %v4663 = vrot.slane %v4468, 1
        %v4664 = vsel %vm2041, %v4662, %v4663
        %v4665 = vrot.slane %v4467, 1
        %v4666 = vrot.slane %v4469, 1
        %v4667 = vsel %vm2041, %v4665, %v4666
        %v4668 = vrot.slane %v4470, 1
        %v4669 = vsel %vm2041, %v4663, %v4668
        %v4670 = vrot.slane %v4471, 1
        %v4671 = vsel %vm2041, %v4666, %v4670
        %v4672 = vrot.slane %v4472, 1
        %v4673 = vrot.slane %v4474, 1
        %v4674 = vsel %vm2041, %v4672, %v4673
        %v4675 = vrot.slane %v4473, 1
        %v4676 = vrot.slane %v4475, 1
        %v4677 = vsel %vm2041, %v4675, %v4676
        %v4678 = vrot.slane %v4476, 1
        %v4679 = vsel %vm2041, %v4673, %v4678
        %v4680 = vrot.slane %v4477, 1
        %v4681 = vsel %vm2041, %v4676, %v4680
        %v4682 = vrot.slane %v4478, 1
        %v4683 = vrot.slane %v4480, 1
        %v4684 = vsel %vm2041, %v4682, %v4683
        %v4685 = vrot.slane %v4479, 1
        %v4686 = vrot.slane %v4481, 1
        %v4687 = vsel %vm2041, %v4685, %v4686
        %v4688 = vrot.slane %v4482, 1
        %v4689 = vsel %vm2041, %v4683, %v4688
        %v4690 = vrot.slane %v4483, 1
        %v4691 = vsel %vm2041, %v4686, %v4690
        %v4692 = vrot.slane %v4484, 1
        %v4693 = vrot.slane %v4486, 1
        %v4694 = vsel %vm2041, %v4692, %v4693
        %v4695 = vrot.slane %v4485, 1
        %v4696 = vrot.slane %v4487, 1
        %v4697 = vsel %vm2041, %v4695, %v4696
        %v4698 = vrot.slane %v4488, 1
        %v4699 = vsel %vm2041, %v4693, %v4698
        %v4700 = vrot.slane %v4489, 1
        %v4701 = vsel %vm2041, %v4696, %v4700
        %v4702 = vrot.slane %v4490, 1
        %v4703 = vrot.slane %v4492, 1
        %v4704 = vsel %vm2041, %v4702, %v4703
        %v4705 = vrot.slane %v4491, 1
        %v4706 = vrot.slane %v4493, 1
        %v4707 = vsel %vm2041, %v4705, %v4706
        %v4708 = vrot.slane %v4494, 1
        %v4709 = vsel %vm2041, %v4703, %v4708
        %v4710 = vrot.slane %v4495, 1
        %v4711 = vsel %vm2041, %v4706, %v4710
        %v4712 = vrot.slane %v4496, 1
        %v4713 = vrot.slane %v4498, 1
        %v4714 = vsel %vm2041, %v4712, %v4713
        %v4715 = vrot.slane %v4497, 1
        %v4716 = vrot.slane %v4499, 1
        %v4717 = vsel %vm2041, %v4715, %v4716
        %v4718 = vrot.slane %v4500, 1
        %v4719 = vsel %vm2041, %v4713, %v4718
        %v4720 = vrot.slane %v4501, 1
        %v4721 = vsel %vm2041, %v4716, %v4720
        %v4722 = vrot.slane %v4502, 1
        %v4723 = vrot.slane %v4504, 1
        %v4724 = vsel %vm2041, %v4722, %v4723
        %v4725 = vrot.slane %v4503, 1
        %v4726 = vrot.slane %v4505, 1
        %v4727 = vsel %vm2041, %v4725, %v4726
        %v4728 = vrot.slane %v4506, 1
        %v4729 = vsel %vm2041, %v4723, %v4728
        %v4730 = vrot.slane %v4507, 1
        %v4731 = vsel %vm2041, %v4726, %v4730
        %v4732 = vrot.slane %v4508, 1
        %v4733 = vrot.slane %v4510, 1
        %v4734 = vsel %vm2041, %v4732, %v4733
        %v4735 = vrot.slane %v4509, 1
        %v4736 = vrot.slane %v4511, 1
        %v4737 = vsel %vm2041, %v4735, %v4736
        %v4738 = vrot.slane %v4512, 1
        %v4739 = vsel %vm2041, %v4733, %v4738
        %v4740 = vrot.slane %v4513, 1
        %v4741 = vsel %vm2041, %v4736, %v4740
        %v4742 = vrot.slane %v4514, 1
        %v4743 = vrot.slane %v4516, 1
        %v4744 = vsel %vm2041, %v4742, %v4743
        %v4745 = vrot.slane %v4515, 1
        %v4746 = vrot.slane %v4517, 1
        %v4747 = vsel %vm2041, %v4745, %v4746
        %v4748 = vrot.slane %v4518, 1
        %v4749 = vsel %vm2041, %v4743, %v4748
        %v4750 = vrot.slane %v4519, 1
        %v4751 = vsel %vm2041, %v4746, %v4750
        %v4752 = vrot.slane %v4520, 1
        %v4753 = vrot.slane %v4522, 1
        %v4754 = vsel %vm2041, %v4752, %v4753
        %v4755 = vrot.slane %v4521, 1
        %v4756 = vrot.slane %v4523, 1
        %v4757 = vsel %vm2041, %v4755, %v4756
        %v4758 = vrot.slane %v4524, 1
        %v4759 = vsel %vm2041, %v4753, %v4758
        %v4760 = vrot.slane %v4525, 1
        %v4761 = vsel %vm2041, %v4756, %v4760
        %v4762 = vrot.slane %v4526, 1
        %v4763 = vrot.slane %v4528, 1
        %v4764 = vsel %vm2041, %v4762, %v4763
        %v4765 = vrot.slane %v4527, 1
        %v4766 = vrot.slane %v4529, 1
        %v4767 = vsel %vm2041, %v4765, %v4766
        %v4768 = vrot.slane %v4530, 1
        %v4769 = vsel %vm2041, %v4763, %v4768
        %v4770 = vrot.slane %v4531, 1
        %v4771 = vsel %vm2041, %v4766, %v4770
        %v4772 = vrot.slane %v4532, 1
        %v4773 = vrot.slane %v4534, 1
        %v4774 = vsel %vm2041, %v4772, %v4773
        %v4775 = vrot.slane %v4533, 1
        %v4776 = vrot.slane %v4535, 1
        %v4777 = vsel %vm2041, %v4775, %v4776
        %v4778 = vrot.slane %v4536, 1
        %v4779 = vsel %vm2041, %v4773, %v4778
        %v4780 = vrot.slane %v4537, 1
        %v4781 = vsel %vm2041, %v4776, %v4780
        %v4782 = vrot.slane %v4538, 1
        %v4783 = vrot.slane %v4540, 1
        %v4784 = vsel %vm2041, %v4782, %v4783
        %v4785 = vrot.slane %v4539, 1
        %v4786 = vrot.slane %v4541, 1
        %v4787 = vsel %vm2041, %v4785, %v4786
        %v4788 = vrot.slane %v4542, 1
        %v4789 = vsel %vm2041, %v4783, %v4788
        %v4790 = vrot.slane %v4543, 1
        %v4791 = vsel %vm2041, %v4786, %v4790
        %v4792 = vrot.slane %v4544, 1
        %v4793 = vrot.slane %v4546, 1
        %v4794 = vsel %vm2041, %v4792, %v4793
        %v4795 = vrot.slane %v4545, 1
        %v4796 = vrot.slane %v4547, 1
        %v4797 = vsel %vm2041, %v4795, %v4796
        %v4798 = vrot.slane %v4548, 1
        %v4799 = vsel %vm2041, %v4793, %v4798
        %v4800 = vrot.slane %v4549, 1
        %v4801 = vsel %vm2041, %v4796, %v4800
        %v4802 = vrot.slane %v4550, 1
        %v4803 = vrot.slane %v4552, 1
        %v4804 = vsel %vm2041, %v4802, %v4803
        %v4805 = vrot.slane %v4551, 1
        %v4806 = vrot.slane %v4553, 1
        %v4807 = vsel %vm2041, %v4805, %v4806
        %v4808 = vrot.slane %v4554, 1
        %v4809 = vsel %vm2041, %v4803, %v4808
        %v4810 = vrot.slane %v4555, 1
        %v4811 = vsel %vm2041, %v4806, %v4810
        %v4876 = vadd.f32 %v4324, %v4654
        %v4877 = vadd.f32 %v4325, %v4657
        %v4878 = vadd.f32 %v4326, %v4659
        %v4879 = vadd.f32 %v4327, %v4661
        %v4880 = vadd.f32 %v4328, %v4664
        %v4881 = vadd.f32 %v4329, %v4667
        %v4882 = vadd.f32 %v4330, %v4669
        %v4883 = vadd.f32 %v4331, %v4671
        %v4884 = vadd.f32 %v4332, %v4674
        %v4885 = vadd.f32 %v4333, %v4677
        %v4886 = vadd.f32 %v4334, %v4679
        %v4887 = vadd.f32 %v4335, %v4681
        %v4888 = vadd.f32 %v4336, %v4684
        %v4889 = vadd.f32 %v4337, %v4687
        %v4890 = vadd.f32 %v4338, %v4689
        %v4891 = vadd.f32 %v4339, %v4691
        %v4892 = vadd.f32 %v4340, %v4694
        %v4893 = vadd.f32 %v4341, %v4697
        %v4894 = vadd.f32 %v4342, %v4699
        %v4895 = vadd.f32 %v4343, %v4701
        %v4896 = vadd.f32 %v4344, %v4704
        %v4897 = vadd.f32 %v4345, %v4707
        %v4898 = vadd.f32 %v4346, %v4709
        %v4899 = vadd.f32 %v4347, %v4711
        %v4900 = vadd.f32 %v4348, %v4714
        %v4901 = vadd.f32 %v4349, %v4717
        %v4902 = vadd.f32 %v4350, %v4719
        %v4903 = vadd.f32 %v4351, %v4721
        %v4904 = vadd.f32 %v4352, %v4724
        %v4905 = vadd.f32 %v4353, %v4727
        %v4906 = vadd.f32 %v4354, %v4729
        %v4907 = vadd.f32 %v4355, %v4731
        %v4908 = vadd.f32 %v4356, %v4734
        %v4909 = vadd.f32 %v4357, %v4737
        %v4910 = vadd.f32 %v4358, %v4739
        %v4911 = vadd.f32 %v4359, %v4741
        %v4912 = vadd.f32 %v4360, %v4744
        %v4913 = vadd.f32 %v4361, %v4747
        %v4914 = vadd.f32 %v4362, %v4749
        %v4915 = vadd.f32 %v4363, %v4751
        %v4916 = vadd.f32 %v4364, %v4754
        %v4917 = vadd.f32 %v4365, %v4757
        %v4918 = vadd.f32 %v4366, %v4759
        %v4919 = vadd.f32 %v4367, %v4761
        %v4920 = vadd.f32 %v4368, %v4764
        %v4921 = vadd.f32 %v4369, %v4767
        %v4922 = vadd.f32 %v4370, %v4769
        %v4923 = vadd.f32 %v4371, %v4771
        %v4924 = vadd.f32 %v4372, %v4774
        %v4925 = vadd.f32 %v4373, %v4777
        %v4926 = vadd.f32 %v4374, %v4779
        %v4927 = vadd.f32 %v4375, %v4781
        %v4928 = vadd.f32 %v4376, %v4784
        %v4929 = vadd.f32 %v4377, %v4787
        %v4930 = vadd.f32 %v4378, %v4789
        %v4931 = vadd.f32 %v4379, %v4791
        %v4932 = vadd.f32 %v4380, %v4794
        %v4933 = vadd.f32 %v4381, %v4797
        %v4934 = vadd.f32 %v4382, %v4799
        %v4935 = vadd.f32 %v4383, %v4801
        %v4936 = vadd.f32 %v4384, %v4804
        %v4937 = vadd.f32 %v4385, %v4807
        %v4938 = vadd.f32 %v4386, %v4809
        %v4939 = vadd.f32 %v4387, %v4811
        %v4940 = vld [vmem:[%s4187] sm:$0xfc]
        %v4941 = vld [vmem:[%s4187 + $0x8] sm:$0xfc]
        %v4942 = vld [vmem:[%s4187 + $0x20] sm:$0x3]
        %v4943 = vld [vmem:[%s4187 + $0x28] sm:$0x3]
        %v4944 = vld [vmem:[%s4187 + $0x30] sm:$0xfc]
        %v4945 = vld [vmem:[%s4187 + $0x38] sm:$0xfc]
        %v4946 = vld [vmem:[%s4187 + $0x50] sm:$0x3]
        %v4947 = vld [vmem:[%s4187 + $0x58] sm:$0x3]
        %v4948 = vld [vmem:[%s4187 + $0x60] sm:$0xfc]
        %v4949 = vld [vmem:[%s4187 + $0x68] sm:$0xfc]
        %v4950 = vld [vmem:[%s4187 + $0x80] sm:$0x3]
        %v4951 = vld [vmem:[%s4187 + $0x88] sm:$0x3]
        %v4952 = vld [vmem:[%s4187 + $0x90] sm:$0xfc]
        %v4953 = vld [vmem:[%s4187 + $0x98] sm:$0xfc]
        %v4954 = vld [vmem:[%s4187 + $0xb0] sm:$0x3]
        %v4955 = vld [vmem:[%s4187 + $0xb8] sm:$0x3]
        %v4956 = vld [vmem:[%s4187 + $0xc0] sm:$0xfc]
        %v4957 = vld [vmem:[%s4187 + $0xc8] sm:$0xfc]
        %v4958 = vld [vmem:[%s4187 + $0xe0] sm:$0x3]
        %v4959 = vld [vmem:[%s4187 + $0xe8] sm:$0x3]
        %v4960 = vld [vmem:[%s4187 + $0xf0] sm:$0xfc]
        %v4961 = vld [vmem:[%s4187 + $0xf8] sm:$0xfc]
        %v4962 = vld [vmem:[%s4187 + $0x110] sm:$0x3]
        %v4963 = vld [vmem:[%s4187 + $0x118] sm:$0x3]
        %v4964 = vld [vmem:[%s4187 + $0x120] sm:$0xfc]
        %v4965 = vld [vmem:[%s4187 + $0x128] sm:$0xfc]
        %v4966 = vld [vmem:[%s4187 + $0x140] sm:$0x3]
        %v4967 = vld [vmem:[%s4187 + $0x148] sm:$0x3]
        %v4968 = vld [vmem:[%s4187 + $0x150] sm:$0xfc]
        %v4969 = vld [vmem:[%s4187 + $0x158] sm:$0xfc]
        %v4970 = vld [vmem:[%s4187 + $0x170] sm:$0x3]
        %v4971 = vld [vmem:[%s4187 + $0x178] sm:$0x3]
        %v4972 = vld [vmem:[%s4187 + $0x180] sm:$0xfc]
        %v4973 = vld [vmem:[%s4187 + $0x188] sm:$0xfc]
        %v4974 = vld [vmem:[%s4187 + $0x1a0] sm:$0x3]
        %v4975 = vld [vmem:[%s4187 + $0x1a8] sm:$0x3]
        %v4976 = vld [vmem:[%s4187 + $0x1b0] sm:$0xfc]
        %v4977 = vld [vmem:[%s4187 + $0x1b8] sm:$0xfc]
        %v4978 = vld [vmem:[%s4187 + $0x1d0] sm:$0x3]
        %v4979 = vld [vmem:[%s4187 + $0x1d8] sm:$0x3]
        %v4980 = vld [vmem:[%s4187 + $0x1e0] sm:$0xfc]
        %v4981 = vld [vmem:[%s4187 + $0x1e8] sm:$0xfc]
        %v4982 = vld [vmem:[%s4187 + $0x200] sm:$0x3]
        %v4983 = vld [vmem:[%s4187 + $0x208] sm:$0x3]
        %v4984 = vld [vmem:[%s4187 + $0x210] sm:$0xfc]
        %v4985 = vld [vmem:[%s4187 + $0x218] sm:$0xfc]
        %v4986 = vld [vmem:[%s4187 + $0x230] sm:$0x3]
        %v4987 = vld [vmem:[%s4187 + $0x238] sm:$0x3]
        %v4988 = vld [vmem:[%s4187 + $0x240] sm:$0xfc]
        %v4989 = vld [vmem:[%s4187 + $0x248] sm:$0xfc]
        %v4990 = vld [vmem:[%s4187 + $0x260] sm:$0x3]
        %v4991 = vld [vmem:[%s4187 + $0x268] sm:$0x3]
        %v4992 = vld [vmem:[%s4187 + $0x270] sm:$0xfc]
        %v4993 = vld [vmem:[%s4187 + $0x278] sm:$0xfc]
        %v4994 = vld [vmem:[%s4187 + $0x290] sm:$0x3]
        %v4995 = vld [vmem:[%s4187 + $0x298] sm:$0x3]
        %v4996 = vld [vmem:[%s4187 + $0x2a0] sm:$0xfc]
        %v4997 = vld [vmem:[%s4187 + $0x2a8] sm:$0xfc]
        %v4998 = vld [vmem:[%s4187 + $0x2c0] sm:$0x3]
        %v4999 = vld [vmem:[%s4187 + $0x2c8] sm:$0x3]
        %v5000 = vld [vmem:[%s4187 + $0x2d0] sm:$0xfc]
        %v5001 = vld [vmem:[%s4187 + $0x2d8] sm:$0xfc]
        %v5002 = vld [vmem:[%s4187 + $0x2f0] sm:$0x3]
        %v5003 = vld [vmem:[%s4187 + $0x2f8] sm:$0x3]
        %v5004 = vlaneseq
        %v5005 = vshrl.u32 %v5004, 7
        %v5006 = vsub.s32 0, %v5005
        %v5007 = vrot.slane %v1575, %v5006
        %v5008 = vlaneseq
        %v5009 = vshrl.u32 %v5008, 7
        %v5010 = vsub.s32 0, %v5009
        %v5011 = vrot.slane %v1576, %v5010
        %v5012 = vmul.f32 %v4940, %v5007
        %v5013 = vmul.f32 %v4941, %v5011
        %v5014 = vmul.f32 %v4190, %v5007
        %v5015 = vmul.f32 %v4191, %v5011
        %v5016 = vmul.f32 %v4942, %v5007
        %v5017 = vmul.f32 %v4943, %v5011
        %v5018 = vmul.f32 %v4944, %v5007
        %v5019 = vmul.f32 %v4945, %v5011
        %v5020 = vmul.f32 %v4194, %v5007
        %v5021 = vmul.f32 %v4195, %v5011
        %v5022 = vmul.f32 %v4946, %v5007
        %v5023 = vmul.f32 %v4947, %v5011
        %v5024 = vmul.f32 %v4948, %v5007
        %v5025 = vmul.f32 %v4949, %v5011
        %v5026 = vmul.f32 %v4198, %v5007
        %v5027 = vmul.f32 %v4199, %v5011
        %v5028 = vmul.f32 %v4950, %v5007
        %v5029 = vmul.f32 %v4951, %v5011
        %v5030 = vmul.f32 %v4952, %v5007
        %v5031 = vmul.f32 %v4953, %v5011
        %v5032 = vmul.f32 %v4202, %v5007
        %v5033 = vmul.f32 %v4203, %v5011
        %v5034 = vmul.f32 %v4954, %v5007
        %v5035 = vmul.f32 %v4955, %v5011
        %v5036 = vmul.f32 %v4956, %v5007
        %v5037 = vmul.f32 %v4957, %v5011
        %v5038 = vmul.f32 %v4206, %v5007
        %v5039 = vmul.f32 %v4207, %v5011
        %v5040 = vmul.f32 %v4958, %v5007
        %v5041 = vmul.f32 %v4959, %v5011
        %v5042 = vmul.f32 %v4960, %v5007
        %v5043 = vmul.f32 %v4961, %v5011
        %v5044 = vmul.f32 %v4210, %v5007
        %v5045 = vmul.f32 %v4211, %v5011
        %v5046 = vmul.f32 %v4962, %v5007
        %v5047 = vmul.f32 %v4963, %v5011
        %v5048 = vmul.f32 %v4964, %v5007
        %v5049 = vmul.f32 %v4965, %v5011
        %v5050 = vmul.f32 %v4214, %v5007
        %v5051 = vmul.f32 %v4215, %v5011
        %v5052 = vmul.f32 %v4966, %v5007
        %v5053 = vmul.f32 %v4967, %v5011
        %v5054 = vmul.f32 %v4968, %v5007
        %v5055 = vmul.f32 %v4969, %v5011
        %v5056 = vmul.f32 %v4218, %v5007
        %v5057 = vmul.f32 %v4219, %v5011
        %v5058 = vmul.f32 %v4970, %v5007
        %v5059 = vmul.f32 %v4971, %v5011
        %v5060 = vmul.f32 %v4972, %v5007
        %v5061 = vmul.f32 %v4973, %v5011
        %v5062 = vmul.f32 %v4222, %v5007
        %v5063 = vmul.f32 %v4223, %v5011
        %v5064 = vmul.f32 %v4974, %v5007
        %v5065 = vmul.f32 %v4975, %v5011
        %v5066 = vmul.f32 %v4976, %v5007
        %v5067 = vmul.f32 %v4977, %v5011
        %v5068 = vmul.f32 %v4226, %v5007
        %v5069 = vmul.f32 %v4227, %v5011
        %v5070 = vmul.f32 %v4978, %v5007
        %v5071 = vmul.f32 %v4979, %v5011
        %v5072 = vmul.f32 %v4980, %v5007
        %v5073 = vmul.f32 %v4981, %v5011
        %v5074 = vmul.f32 %v4230, %v5007
        %v5075 = vmul.f32 %v4231, %v5011
        %v5076 = vmul.f32 %v4982, %v5007
        %v5077 = vmul.f32 %v4983, %v5011
        %v5078 = vmul.f32 %v4984, %v5007
        %v5079 = vmul.f32 %v4985, %v5011
        %v5080 = vmul.f32 %v4234, %v5007
        %v5081 = vmul.f32 %v4235, %v5011
        %v5082 = vmul.f32 %v4986, %v5007
        %v5083 = vmul.f32 %v4987, %v5011
        %v5084 = vmul.f32 %v4988, %v5007
        %v5085 = vmul.f32 %v4989, %v5011
        %v5086 = vmul.f32 %v4238, %v5007
        %v5087 = vmul.f32 %v4239, %v5011
        %v5088 = vmul.f32 %v4990, %v5007
        %v5089 = vmul.f32 %v4991, %v5011
        %v5090 = vmul.f32 %v4992, %v5007
        %v5091 = vmul.f32 %v4993, %v5011
        %v5092 = vmul.f32 %v4242, %v5007
        %v5093 = vmul.f32 %v4243, %v5011
        %v5094 = vmul.f32 %v4994, %v5007
        %v5095 = vmul.f32 %v4995, %v5011
        %v5096 = vmul.f32 %v4996, %v5007
        %v5097 = vmul.f32 %v4997, %v5011
        %v5098 = vmul.f32 %v4246, %v5007
        %v5099 = vmul.f32 %v4247, %v5011
        %v5100 = vmul.f32 %v4998, %v5007
        %v5101 = vmul.f32 %v4999, %v5011
        %v5102 = vmul.f32 %v5000, %v5007
        %v5103 = vmul.f32 %v5001, %v5011
        %v5104 = vmul.f32 %v4250, %v5007
        %v5105 = vmul.f32 %v4251, %v5011
        %v5106 = vmul.f32 %v5002, %v5007
        %v5107 = vmul.f32 %v5003, %v5011
        %v5204 = vrot.slane %v5012, 2
        %v5205 = vrot.slane %v5014, 2
        %v5206 = vsel %vm2594, %v5204, %v5205
        %v5207 = vrot.slane %v5013, 2
        %v5208 = vrot.slane %v5015, 2
        %v5209 = vsel %vm2594, %v5207, %v5208
        %v5210 = vrot.slane %v5016, 2
        %v5211 = vsel %vm2594, %v5205, %v5210
        %v5212 = vrot.slane %v5017, 2
        %v5213 = vsel %vm2594, %v5208, %v5212
        %v5214 = vrot.slane %v5018, 2
        %v5215 = vrot.slane %v5020, 2
        %v5216 = vsel %vm2594, %v5214, %v5215
        %v5217 = vrot.slane %v5019, 2
        %v5218 = vrot.slane %v5021, 2
        %v5219 = vsel %vm2594, %v5217, %v5218
        %v5220 = vrot.slane %v5022, 2
        %v5221 = vsel %vm2594, %v5215, %v5220
        %v5222 = vrot.slane %v5023, 2
        %v5223 = vsel %vm2594, %v5218, %v5222
        %v5224 = vrot.slane %v5024, 2
        %v5225 = vrot.slane %v5026, 2
        %v5226 = vsel %vm2594, %v5224, %v5225
        %v5227 = vrot.slane %v5025, 2
        %v5228 = vrot.slane %v5027, 2
        %v5229 = vsel %vm2594, %v5227, %v5228
        %v5230 = vrot.slane %v5028, 2
        %v5231 = vsel %vm2594, %v5225, %v5230
        %v5232 = vrot.slane %v5029, 2
        %v5233 = vsel %vm2594, %v5228, %v5232
        %v5234 = vrot.slane %v5030, 2
        %v5235 = vrot.slane %v5032, 2
        %v5236 = vsel %vm2594, %v5234, %v5235
        %v5237 = vrot.slane %v5031, 2
        %v5238 = vrot.slane %v5033, 2
        %v5239 = vsel %vm2594, %v5237, %v5238
        %v5240 = vrot.slane %v5034, 2
        %v5241 = vsel %vm2594, %v5235, %v5240
        %v5242 = vrot.slane %v5035, 2
        %v5243 = vsel %vm2594, %v5238, %v5242
        %v5244 = vrot.slane %v5036, 2
        %v5245 = vrot.slane %v5038, 2
        %v5246 = vsel %vm2594, %v5244, %v5245
        %v5247 = vrot.slane %v5037, 2
        %v5248 = vrot.slane %v5039, 2
        %v5249 = vsel %vm2594, %v5247, %v5248
        %v5250 = vrot.slane %v5040, 2
        %v5251 = vsel %vm2594, %v5245, %v5250
        %v5252 = vrot.slane %v5041, 2
        %v5253 = vsel %vm2594, %v5248, %v5252
        %v5254 = vrot.slane %v5042, 2
        %v5255 = vrot.slane %v5044, 2
        %v5256 = vsel %vm2594, %v5254, %v5255
        %v5257 = vrot.slane %v5043, 2
        %v5258 = vrot.slane %v5045, 2
        %v5259 = vsel %vm2594, %v5257, %v5258
        %v5260 = vrot.slane %v5046, 2
        %v5261 = vsel %vm2594, %v5255, %v5260
        %v5262 = vrot.slane %v5047, 2
        %v5263 = vsel %vm2594, %v5258, %v5262
        %v5264 = vrot.slane %v5048, 2
        %v5265 = vrot.slane %v5050, 2
        %v5266 = vsel %vm2594, %v5264, %v5265
        %v5267 = vrot.slane %v5049, 2
        %v5268 = vrot.slane %v5051, 2
        %v5269 = vsel %vm2594, %v5267, %v5268
        %v5270 = vrot.slane %v5052, 2
        %v5271 = vsel %vm2594, %v5265, %v5270
        %v5272 = vrot.slane %v5053, 2
        %v5273 = vsel %vm2594, %v5268, %v5272
        %v5274 = vrot.slane %v5054, 2
        %v5275 = vrot.slane %v5056, 2
        %v5276 = vsel %vm2594, %v5274, %v5275
        %v5277 = vrot.slane %v5055, 2
        %v5278 = vrot.slane %v5057, 2
        %v5279 = vsel %vm2594, %v5277, %v5278
        %v5280 = vrot.slane %v5058, 2
        %v5281 = vsel %vm2594, %v5275, %v5280
        %v5282 = vrot.slane %v5059, 2
        %v5283 = vsel %vm2594, %v5278, %v5282
        %v5284 = vrot.slane %v5060, 2
        %v5285 = vrot.slane %v5062, 2
        %v5286 = vsel %vm2594, %v5284, %v5285
        %v5287 = vrot.slane %v5061, 2
        %v5288 = vrot.slane %v5063, 2
        %v5289 = vsel %vm2594, %v5287, %v5288
        %v5290 = vrot.slane %v5064, 2
        %v5291 = vsel %vm2594, %v5285, %v5290
        %v5292 = vrot.slane %v5065, 2
        %v5293 = vsel %vm2594, %v5288, %v5292
        %v5294 = vrot.slane %v5066, 2
        %v5295 = vrot.slane %v5068, 2
        %v5296 = vsel %vm2594, %v5294, %v5295
        %v5297 = vrot.slane %v5067, 2
        %v5298 = vrot.slane %v5069, 2
        %v5299 = vsel %vm2594, %v5297, %v5298
        %v5300 = vrot.slane %v5070, 2
        %v5301 = vsel %vm2594, %v5295, %v5300
        %v5302 = vrot.slane %v5071, 2
        %v5303 = vsel %vm2594, %v5298, %v5302
        %v5304 = vrot.slane %v5072, 2
        %v5305 = vrot.slane %v5074, 2
        %v5306 = vsel %vm2594, %v5304, %v5305
        %v5307 = vrot.slane %v5073, 2
        %v5308 = vrot.slane %v5075, 2
        %v5309 = vsel %vm2594, %v5307, %v5308
        %v5310 = vrot.slane %v5076, 2
        %v5311 = vsel %vm2594, %v5305, %v5310
        %v5312 = vrot.slane %v5077, 2
        %v5313 = vsel %vm2594, %v5308, %v5312
        %v5314 = vrot.slane %v5078, 2
        %v5315 = vrot.slane %v5080, 2
        %v5316 = vsel %vm2594, %v5314, %v5315
        %v5317 = vrot.slane %v5079, 2
        %v5318 = vrot.slane %v5081, 2
        %v5319 = vsel %vm2594, %v5317, %v5318
        %v5320 = vrot.slane %v5082, 2
        %v5321 = vsel %vm2594, %v5315, %v5320
        %v5322 = vrot.slane %v5083, 2
        %v5323 = vsel %vm2594, %v5318, %v5322
        %v5324 = vrot.slane %v5084, 2
        %v5325 = vrot.slane %v5086, 2
        %v5326 = vsel %vm2594, %v5324, %v5325
        %v5327 = vrot.slane %v5085, 2
        %v5328 = vrot.slane %v5087, 2
        %v5329 = vsel %vm2594, %v5327, %v5328
        %v5330 = vrot.slane %v5088, 2
        %v5331 = vsel %vm2594, %v5325, %v5330
        %v5332 = vrot.slane %v5089, 2
        %v5333 = vsel %vm2594, %v5328, %v5332
        %v5334 = vrot.slane %v5090, 2
        %v5335 = vrot.slane %v5092, 2
        %v5336 = vsel %vm2594, %v5334, %v5335
        %v5337 = vrot.slane %v5091, 2
        %v5338 = vrot.slane %v5093, 2
        %v5339 = vsel %vm2594, %v5337, %v5338
        %v5340 = vrot.slane %v5094, 2
        %v5341 = vsel %vm2594, %v5335, %v5340
        %v5342 = vrot.slane %v5095, 2
        %v5343 = vsel %vm2594, %v5338, %v5342
        %v5344 = vrot.slane %v5096, 2
        %v5345 = vrot.slane %v5098, 2
        %v5346 = vsel %vm2594, %v5344, %v5345
        %v5347 = vrot.slane %v5097, 2
        %v5348 = vrot.slane %v5099, 2
        %v5349 = vsel %vm2594, %v5347, %v5348
        %v5350 = vrot.slane %v5100, 2
        %v5351 = vsel %vm2594, %v5345, %v5350
        %v5352 = vrot.slane %v5101, 2
        %v5353 = vsel %vm2594, %v5348, %v5352
        %v5354 = vrot.slane %v5102, 2
        %v5355 = vrot.slane %v5104, 2
        %v5356 = vsel %vm2594, %v5354, %v5355
        %v5357 = vrot.slane %v5103, 2
        %v5358 = vrot.slane %v5105, 2
        %v5359 = vsel %vm2594, %v5357, %v5358
        %v5360 = vrot.slane %v5106, 2
        %v5361 = vsel %vm2594, %v5355, %v5360
        %v5362 = vrot.slane %v5107, 2
        %v5363 = vsel %vm2594, %v5358, %v5362
        %v5428 = vadd.f32 %v4876, %v5206
        %v5429 = vadd.f32 %v4877, %v5209
        %v5430 = vadd.f32 %v4878, %v5211
        %v5431 = vadd.f32 %v4879, %v5213
        %v5432 = vadd.f32 %v4880, %v5216
        %v5433 = vadd.f32 %v4881, %v5219
        %v5434 = vadd.f32 %v4882, %v5221
        %v5435 = vadd.f32 %v4883, %v5223
        %v5436 = vadd.f32 %v4884, %v5226
        %v5437 = vadd.f32 %v4885, %v5229
        %v5438 = vadd.f32 %v4886, %v5231
        %v5439 = vadd.f32 %v4887, %v5233
        %v5440 = vadd.f32 %v4888, %v5236
        %v5441 = vadd.f32 %v4889, %v5239
        %v5442 = vadd.f32 %v4890, %v5241
        %v5443 = vadd.f32 %v4891, %v5243
        %v5444 = vadd.f32 %v4892, %v5246
        %v5445 = vadd.f32 %v4893, %v5249
        %v5446 = vadd.f32 %v4894, %v5251
        %v5447 = vadd.f32 %v4895, %v5253
        %v5448 = vadd.f32 %v4896, %v5256
        %v5449 = vadd.f32 %v4897, %v5259
        %v5450 = vadd.f32 %v4898, %v5261
        %v5451 = vadd.f32 %v4899, %v5263
        %v5452 = vadd.f32 %v4900, %v5266
        %v5453 = vadd.f32 %v4901, %v5269
        %v5454 = vadd.f32 %v4902, %v5271
        %v5455 = vadd.f32 %v4903, %v5273
        %v5456 = vadd.f32 %v4904, %v5276
        %v5457 = vadd.f32 %v4905, %v5279
        %v5458 = vadd.f32 %v4906, %v5281
        %v5459 = vadd.f32 %v4907, %v5283
        %v5460 = vadd.f32 %v4908, %v5286
        %v5461 = vadd.f32 %v4909, %v5289
        %v5462 = vadd.f32 %v4910, %v5291
        %v5463 = vadd.f32 %v4911, %v5293
        %v5464 = vadd.f32 %v4912, %v5296
        %v5465 = vadd.f32 %v4913, %v5299
        %v5466 = vadd.f32 %v4914, %v5301
        %v5467 = vadd.f32 %v4915, %v5303
        %v5468 = vadd.f32 %v4916, %v5306
        %v5469 = vadd.f32 %v4917, %v5309
        %v5470 = vadd.f32 %v4918, %v5311
        %v5471 = vadd.f32 %v4919, %v5313
        %v5472 = vadd.f32 %v4920, %v5316
        %v5473 = vadd.f32 %v4921, %v5319
        %v5474 = vadd.f32 %v4922, %v5321
        %v5475 = vadd.f32 %v4923, %v5323
        %v5476 = vadd.f32 %v4924, %v5326
        %v5477 = vadd.f32 %v4925, %v5329
        %v5478 = vadd.f32 %v4926, %v5331
        %v5479 = vadd.f32 %v4927, %v5333
        %v5480 = vadd.f32 %v4928, %v5336
        %v5481 = vadd.f32 %v4929, %v5339
        %v5482 = vadd.f32 %v4930, %v5341
        %v5483 = vadd.f32 %v4931, %v5343
        %v5484 = vadd.f32 %v4932, %v5346
        %v5485 = vadd.f32 %v4933, %v5349
        %v5486 = vadd.f32 %v4934, %v5351
        %v5487 = vadd.f32 %v4935, %v5353
        %v5488 = vadd.f32 %v4936, %v5356
        %v5489 = vadd.f32 %v4937, %v5359
        %v5490 = vadd.f32 %v4938, %v5361
        %v5491 = vadd.f32 %v4939, %v5363
        %v5492 = vsub.f32 0.0, %v5428
        %v5493 = vsub.f32 0.0, %v5429
        %v5494 = vsub.f32 0.0, %v5430
        %v5495 = vsub.f32 0.0, %v5431
        %v5496 = vsub.f32 0.0, %v5432
        %v5497 = vsub.f32 0.0, %v5433
        %v5498 = vsub.f32 0.0, %v5434
        %v5499 = vsub.f32 0.0, %v5435
        %v5500 = vsub.f32 0.0, %v5436
        %v5501 = vsub.f32 0.0, %v5437
        %v5502 = vsub.f32 0.0, %v5438
        %v5503 = vsub.f32 0.0, %v5439
        %v5504 = vsub.f32 0.0, %v5440
        %v5505 = vsub.f32 0.0, %v5441
        %v5506 = vsub.f32 0.0, %v5442
        %v5507 = vsub.f32 0.0, %v5443
        %v5508 = vsub.f32 0.0, %v5444
        %v5509 = vsub.f32 0.0, %v5445
        %v5510 = vsub.f32 0.0, %v5446
        %v5511 = vsub.f32 0.0, %v5447
        %v5512 = vsub.f32 0.0, %v5448
        %v5513 = vsub.f32 0.0, %v5449
        %v5514 = vsub.f32 0.0, %v5450
        %v5515 = vsub.f32 0.0, %v5451
        %v5516 = vsub.f32 0.0, %v5452
        %v5517 = vsub.f32 0.0, %v5453
        %v5518 = vsub.f32 0.0, %v5454
        %v5519 = vsub.f32 0.0, %v5455
        %v5520 = vsub.f32 0.0, %v5456
        %v5521 = vsub.f32 0.0, %v5457
        %v5522 = vsub.f32 0.0, %v5458
        %v5523 = vsub.f32 0.0, %v5459
        %v5524 = vsub.f32 0.0, %v5460
        %v5525 = vsub.f32 0.0, %v5461
        %v5526 = vsub.f32 0.0, %v5462
        %v5527 = vsub.f32 0.0, %v5463
        %v5528 = vsub.f32 0.0, %v5464
        %v5529 = vsub.f32 0.0, %v5465
        %v5530 = vsub.f32 0.0, %v5466
        %v5531 = vsub.f32 0.0, %v5467
        %v5532 = vsub.f32 0.0, %v5468
        %v5533 = vsub.f32 0.0, %v5469
        %v5534 = vsub.f32 0.0, %v5470
        %v5535 = vsub.f32 0.0, %v5471
        %v5536 = vsub.f32 0.0, %v5472
        %v5537 = vsub.f32 0.0, %v5473
        %v5538 = vsub.f32 0.0, %v5474
        %v5539 = vsub.f32 0.0, %v5475
        %v5540 = vsub.f32 0.0, %v5476
        %v5541 = vsub.f32 0.0, %v5477
        %v5542 = vsub.f32 0.0, %v5478
        %v5543 = vsub.f32 0.0, %v5479
        %v5544 = vsub.f32 0.0, %v5480
        %v5545 = vsub.f32 0.0, %v5481
        %v5546 = vsub.f32 0.0, %v5482
        %v5547 = vsub.f32 0.0, %v5483
        %v5548 = vsub.f32 0.0, %v5484
        %v5549 = vsub.f32 0.0, %v5485
        %v5550 = vsub.f32 0.0, %v5486
        %v5551 = vsub.f32 0.0, %v5487
        %v5552 = vsub.f32 0.0, %v5488
        %v5553 = vsub.f32 0.0, %v5489
        %v5554 = vsub.f32 0.0, %v5490
        %v5555 = vsub.f32 0.0, %v5491
        %v5556 = vmul.f32 %v5492, 1.442695
        %v5557 = vpow.pop %v5556
        %v5558 = vmul.f32 %v5493, 1.442695
        %v5559 = vpow.pop %v5558
        %v5560 = vmul.f32 %v5494, 1.442695
        %v5561 = vpow.pop %v5560
        %v5562 = vmul.f32 %v5495, 1.442695
        %v5563 = vpow.pop %v5562
        %v5564 = vmul.f32 %v5496, 1.442695
        %v5565 = vpow.pop %v5564
        %v5566 = vmul.f32 %v5497, 1.442695
        %v5567 = vpow.pop %v5566
        %v5568 = vmul.f32 %v5498, 1.442695
        %v5569 = vpow.pop %v5568
        %v5570 = vmul.f32 %v5499, 1.442695
        %v5571 = vpow.pop %v5570
        %v5572 = vmul.f32 %v5500, 1.442695
        %v5573 = vpow.pop %v5572
        %v5574 = vmul.f32 %v5501, 1.442695
        %v5575 = vpow.pop %v5574
        %v5576 = vmul.f32 %v5502, 1.442695
        %v5577 = vpow.pop %v5576
        %v5578 = vmul.f32 %v5503, 1.442695
        %v5579 = vpow.pop %v5578
        %v5580 = vmul.f32 %v5504, 1.442695
        %v5581 = vpow.pop %v5580
        %v5582 = vmul.f32 %v5505, 1.442695
        %v5583 = vpow.pop %v5582
        %v5584 = vmul.f32 %v5506, 1.442695
        %v5585 = vpow.pop %v5584
        %v5586 = vmul.f32 %v5507, 1.442695
        %v5587 = vpow.pop %v5586
        %v5588 = vmul.f32 %v5508, 1.442695
        %v5589 = vpow.pop %v5588
        %v5590 = vmul.f32 %v5509, 1.442695
        %v5591 = vpow.pop %v5590
        %v5592 = vmul.f32 %v5510, 1.442695
        %v5593 = vpow.pop %v5592
        %v5594 = vmul.f32 %v5511, 1.442695
        %v5595 = vpow.pop %v5594
        %v5596 = vmul.f32 %v5512, 1.442695
        %v5597 = vpow.pop %v5596
        %v5598 = vmul.f32 %v5513, 1.442695
        %v5599 = vpow.pop %v5598
        %v5600 = vmul.f32 %v5514, 1.442695
        %v5601 = vpow.pop %v5600
        %v5602 = vmul.f32 %v5515, 1.442695
        %v5603 = vpow.pop %v5602
        %v5604 = vmul.f32 %v5516, 1.442695
        %v5605 = vpow.pop %v5604
        %v5606 = vmul.f32 %v5517, 1.442695
        %v5607 = vpow.pop %v5606
        %v5608 = vmul.f32 %v5518, 1.442695
        %v5609 = vpow.pop %v5608
        %v5610 = vmul.f32 %v5519, 1.442695
        %v5611 = vpow.pop %v5610
        %v5612 = vmul.f32 %v5520, 1.442695
        %v5613 = vpow.pop %v5612
        %v5614 = vmul.f32 %v5521, 1.442695
        %v5615 = vpow.pop %v5614
        %v5616 = vmul.f32 %v5522, 1.442695
        %v5617 = vpow.pop %v5616
        %v5618 = vmul.f32 %v5523, 1.442695
        %v5619 = vpow.pop %v5618
        %v5620 = vmul.f32 %v5524, 1.442695
        %v5621 = vpow.pop %v5620
        %v5622 = vmul.f32 %v5525, 1.442695
        %v5623 = vpow.pop %v5622
        %v5624 = vmul.f32 %v5526, 1.442695
        %v5625 = vpow.pop %v5624
        %v5626 = vmul.f32 %v5527, 1.442695
        %v5627 = vpow.pop %v5626
        %v5628 = vmul.f32 %v5528, 1.442695
        %v5629 = vpow.pop %v5628
        %v5630 = vmul.f32 %v5529, 1.442695
        %v5631 = vpow.pop %v5630
        %v5632 = vmul.f32 %v5530, 1.442695
        %v5633 = vpow.pop %v5632
        %v5634 = vmul.f32 %v5531, 1.442695
        %v5635 = vpow.pop %v5634
        %v5636 = vmul.f32 %v5532, 1.442695
        %v5637 = vpow.pop %v5636
        %v5638 = vmul.f32 %v5533, 1.442695
        %v5639 = vpow.pop %v5638
        %v5640 = vmul.f32 %v5534, 1.442695
        %v5641 = vpow.pop %v5640
        %v5642 = vmul.f32 %v5535, 1.442695
        %v5643 = vpow.pop %v5642
        %v5644 = vmul.f32 %v5536, 1.442695
        %v5645 = vpow.pop %v5644
        %v5646 = vmul.f32 %v5537, 1.442695
        %v5647 = vpow.pop %v5646
        %v5648 = vmul.f32 %v5538, 1.442695
        %v5649 = vpow.pop %v5648
        %v5650 = vmul.f32 %v5539, 1.442695
        %v5651 = vpow.pop %v5650
        %v5652 = vmul.f32 %v5540, 1.442695
        %v5653 = vpow.pop %v5652
        %v5654 = vmul.f32 %v5541, 1.442695
        %v5655 = vpow.pop %v5654
        %v5656 = vmul.f32 %v5542, 1.442695
        %v5657 = vpow.pop %v5656
        %v5658 = vmul.f32 %v5543, 1.442695
        %v5659 = vpow.pop %v5658
        %v5660 = vmul.f32 %v5544, 1.442695
        %v5661 = vpow.pop %v5660
        %v5662 = vmul.f32 %v5545, 1.442695
        %v5663 = vpow.pop %v5662
        %v5664 = vmul.f32 %v5546, 1.442695
        %v5665 = vpow.pop %v5664
        %v5666 = vmul.f32 %v5547, 1.442695
        %v5667 = vpow.pop %v5666
        %v5668 = vmul.f32 %v5548, 1.442695
        %v5669 = vpow.pop %v5668
        %v5670 = vmul.f32 %v5549, 1.442695
        %v5671 = vpow.pop %v5670
        %v5672 = vmul.f32 %v5550, 1.442695
        %v5673 = vpow.pop %v5672
        %v5674 = vmul.f32 %v5551, 1.442695
        %v5675 = vpow.pop %v5674
        %v5676 = vmul.f32 %v5552, 1.442695
        %v5677 = vpow.pop %v5676
        %v5678 = vmul.f32 %v5553, 1.442695
        %v5679 = vpow.pop %v5678
        %v5680 = vmul.f32 %v5554, 1.442695
        %v5681 = vpow.pop %v5680
        %v5682 = vmul.f32 %v5555, 1.442695
        %v5683 = vpow.pop %v5682
        %v5684 = vadd.f32 %v5557, 1.0
        %v5685 = vadd.f32 %v5559, 1.0
        %v5686 = vadd.f32 %v5561, 1.0
        %v5687 = vadd.f32 %v5563, 1.0
        %v5688 = vadd.f32 %v5565, 1.0
        %v5689 = vadd.f32 %v5567, 1.0
        %v5690 = vadd.f32 %v5569, 1.0
        %v5691 = vadd.f32 %v5571, 1.0
        %v5692 = vadd.f32 %v5573, 1.0
        %v5693 = vadd.f32 %v5575, 1.0
        %v5694 = vadd.f32 %v5577, 1.0
        %v5695 = vadd.f32 %v5579, 1.0
        %v5696 = vadd.f32 %v5581, 1.0
        %v5697 = vadd.f32 %v5583, 1.0
        %v5698 = vadd.f32 %v5585, 1.0
        %v5699 = vadd.f32 %v5587, 1.0
        %v5700 = vadd.f32 %v5589, 1.0
        %v5701 = vadd.f32 %v5591, 1.0
        %v5702 = vadd.f32 %v5593, 1.0
        %v5703 = vadd.f32 %v5595, 1.0
        %v5704 = vadd.f32 %v5597, 1.0
        %v5705 = vadd.f32 %v5599, 1.0
        %v5706 = vadd.f32 %v5601, 1.0
        %v5707 = vadd.f32 %v5603, 1.0
        %v5708 = vadd.f32 %v5605, 1.0
        %v5709 = vadd.f32 %v5607, 1.0
        %v5710 = vadd.f32 %v5609, 1.0
        %v5711 = vadd.f32 %v5611, 1.0
        %v5712 = vadd.f32 %v5613, 1.0
        %v5713 = vadd.f32 %v5615, 1.0
        %v5714 = vadd.f32 %v5617, 1.0
        %v5715 = vadd.f32 %v5619, 1.0
        %v5716 = vadd.f32 %v5621, 1.0
        %v5717 = vadd.f32 %v5623, 1.0
        %v5718 = vadd.f32 %v5625, 1.0
        %v5719 = vadd.f32 %v5627, 1.0
        %v5720 = vadd.f32 %v5629, 1.0
        %v5721 = vadd.f32 %v5631, 1.0
        %v5722 = vadd.f32 %v5633, 1.0
        %v5723 = vadd.f32 %v5635, 1.0
        %v5724 = vadd.f32 %v5637, 1.0
        %v5725 = vadd.f32 %v5639, 1.0
        %v5726 = vadd.f32 %v5641, 1.0
        %v5727 = vadd.f32 %v5643, 1.0
        %v5728 = vadd.f32 %v5645, 1.0
        %v5729 = vadd.f32 %v5647, 1.0
        %v5730 = vadd.f32 %v5649, 1.0
        %v5731 = vadd.f32 %v5651, 1.0
        %v5732 = vadd.f32 %v5653, 1.0
        %v5733 = vadd.f32 %v5655, 1.0
        %v5734 = vadd.f32 %v5657, 1.0
        %v5735 = vadd.f32 %v5659, 1.0
        %v5736 = vadd.f32 %v5661, 1.0
        %v5737 = vadd.f32 %v5663, 1.0
        %v5738 = vadd.f32 %v5665, 1.0
        %v5739 = vadd.f32 %v5667, 1.0
        %v5740 = vadd.f32 %v5669, 1.0
        %v5741 = vadd.f32 %v5671, 1.0
        %v5742 = vadd.f32 %v5673, 1.0
        %v5743 = vadd.f32 %v5675, 1.0
        %v5744 = vadd.f32 %v5677, 1.0
        %v5745 = vadd.f32 %v5679, 1.0
        %v5746 = vadd.f32 %v5681, 1.0
        %v5747 = vadd.f32 %v5683, 1.0
        %v5748 = vrcp.pop %v5684
        %v5749 = vmul.f32 1.0, %v5748
        %v5750 = vrcp.pop %v5685
        %v5751 = vmul.f32 1.0, %v5750
        %v5752 = vrcp.pop %v5686
        %v5753 = vmul.f32 1.0, %v5752
        %v5754 = vrcp.pop %v5687
        %v5755 = vmul.f32 1.0, %v5754
        %v5756 = vrcp.pop %v5688
        %v5757 = vmul.f32 1.0, %v5756
        %v5758 = vrcp.pop %v5689
        %v5759 = vmul.f32 1.0, %v5758
        %v5760 = vrcp.pop %v5690
        %v5761 = vmul.f32 1.0, %v5760
        %v5762 = vrcp.pop %v5691
        %v5763 = vmul.f32 1.0, %v5762
        %v5764 = vrcp.pop %v5692
        %v5765 = vmul.f32 1.0, %v5764
        %v5766 = vrcp.pop %v5693
        %v5767 = vmul.f32 1.0, %v5766
        %v5768 = vrcp.pop %v5694
        %v5769 = vmul.f32 1.0, %v5768
        %v5770 = vrcp.pop %v5695
        %v5771 = vmul.f32 1.0, %v5770
        %v5772 = vrcp.pop %v5696
        %v5773 = vmul.f32 1.0, %v5772
        %v5774 = vrcp.pop %v5697
        %v5775 = vmul.f32 1.0, %v5774
        %v5776 = vrcp.pop %v5698
        %v5777 = vmul.f32 1.0, %v5776
        %v5778 = vrcp.pop %v5699
        %v5779 = vmul.f32 1.0, %v5778
        %v5780 = vrcp.pop %v5700
        %v5781 = vmul.f32 1.0, %v5780
        %v5782 = vrcp.pop %v5701
        %v5783 = vmul.f32 1.0, %v5782
        %v5784 = vrcp.pop %v5702
        %v5785 = vmul.f32 1.0, %v5784
        %v5786 = vrcp.pop %v5703
        %v5787 = vmul.f32 1.0, %v5786
        %v5788 = vrcp.pop %v5704
        %v5789 = vmul.f32 1.0, %v5788
        %v5790 = vrcp.pop %v5705
        %v5791 = vmul.f32 1.0, %v5790
        %v5792 = vrcp.pop %v5706
        %v5793 = vmul.f32 1.0, %v5792
        %v5794 = vrcp.pop %v5707
        %v5795 = vmul.f32 1.0, %v5794
        %v5796 = vrcp.pop %v5708
        %v5797 = vmul.f32 1.0, %v5796
        %v5798 = vrcp.pop %v5709
        %v5799 = vmul.f32 1.0, %v5798
        %v5800 = vrcp.pop %v5710
        %v5801 = vmul.f32 1.0, %v5800
        %v5802 = vrcp.pop %v5711
        %v5803 = vmul.f32 1.0, %v5802
        %v5804 = vrcp.pop %v5712
        %v5805 = vmul.f32 1.0, %v5804
        %v5806 = vrcp.pop %v5713
        %v5807 = vmul.f32 1.0, %v5806
        %v5808 = vrcp.pop %v5714
        %v5809 = vmul.f32 1.0, %v5808
        %v5810 = vrcp.pop %v5715
        %v5811 = vmul.f32 1.0, %v5810
        %v5812 = vrcp.pop %v5716
        %v5813 = vmul.f32 1.0, %v5812
        %v5814 = vrcp.pop %v5717
        %v5815 = vmul.f32 1.0, %v5814
        %v5816 = vrcp.pop %v5718
        %v5817 = vmul.f32 1.0, %v5816
        %v5818 = vrcp.pop %v5719
        %v5819 = vmul.f32 1.0, %v5818
        %v5820 = vrcp.pop %v5720
        %v5821 = vmul.f32 1.0, %v5820
        %v5822 = vrcp.pop %v5721
        %v5823 = vmul.f32 1.0, %v5822
        %v5824 = vrcp.pop %v5722
        %v5825 = vmul.f32 1.0, %v5824
        %v5826 = vrcp.pop %v5723
        %v5827 = vmul.f32 1.0, %v5826
        %v5828 = vrcp.pop %v5724
        %v5829 = vmul.f32 1.0, %v5828
        %v5830 = vrcp.pop %v5725
        %v5831 = vmul.f32 1.0, %v5830
        %v5832 = vrcp.pop %v5726
        %v5833 = vmul.f32 1.0, %v5832
        %v5834 = vrcp.pop %v5727
        %v5835 = vmul.f32 1.0, %v5834
        %v5836 = vrcp.pop %v5728
        %v5837 = vmul.f32 1.0, %v5836
        %v5838 = vrcp.pop %v5729
        %v5839 = vmul.f32 1.0, %v5838
        %v5840 = vrcp.pop %v5730
        %v5841 = vmul.f32 1.0, %v5840
        %v5842 = vrcp.pop %v5731
        %v5843 = vmul.f32 1.0, %v5842
        %v5844 = vrcp.pop %v5732
        %v5845 = vmul.f32 1.0, %v5844
        %v5846 = vrcp.pop %v5733
        %v5847 = vmul.f32 1.0, %v5846
        %v5848 = vrcp.pop %v5734
        %v5849 = vmul.f32 1.0, %v5848
        %v5850 = vrcp.pop %v5735
        %v5851 = vmul.f32 1.0, %v5850
        %v5852 = vrcp.pop %v5736
        %v5853 = vmul.f32 1.0, %v5852
        %v5854 = vrcp.pop %v5737
        %v5855 = vmul.f32 1.0, %v5854
        %v5856 = vrcp.pop %v5738
        %v5857 = vmul.f32 1.0, %v5856
        %v5858 = vrcp.pop %v5739
        %v5859 = vmul.f32 1.0, %v5858
        %v5860 = vrcp.pop %v5740
        %v5861 = vmul.f32 1.0, %v5860
        %v5862 = vrcp.pop %v5741
        %v5863 = vmul.f32 1.0, %v5862
        %v5864 = vrcp.pop %v5742
        %v5865 = vmul.f32 1.0, %v5864
        %v5866 = vrcp.pop %v5743
        %v5867 = vmul.f32 1.0, %v5866
        %v5868 = vrcp.pop %v5744
        %v5869 = vmul.f32 1.0, %v5868
        %v5870 = vrcp.pop %v5745
        %v5871 = vmul.f32 1.0, %v5870
        %v5872 = vrcp.pop %v5746
        %v5873 = vmul.f32 1.0, %v5872
        %v5874 = vrcp.pop %v5747
        %v5875 = vmul.f32 1.0, %v5874
        %v5876 = vmul.f32 %v5428, %v5749
        %v5877 = vmul.f32 %v5429, %v5751
        %v5878 = vmul.f32 %v5430, %v5753
        %v5879 = vmul.f32 %v5431, %v5755
        %v5880 = vmul.f32 %v5432, %v5757
        %v5881 = vmul.f32 %v5433, %v5759
        %v5882 = vmul.f32 %v5434, %v5761
        %v5883 = vmul.f32 %v5435, %v5763
        %v5884 = vmul.f32 %v5436, %v5765
        %v5885 = vmul.f32 %v5437, %v5767
        %v5886 = vmul.f32 %v5438, %v5769
        %v5887 = vmul.f32 %v5439, %v5771
        %v5888 = vmul.f32 %v5440, %v5773
        %v5889 = vmul.f32 %v5441, %v5775
        %v5890 = vmul.f32 %v5442, %v5777
        %v5891 = vmul.f32 %v5443, %v5779
        %v5892 = vmul.f32 %v5444, %v5781
        %v5893 = vmul.f32 %v5445, %v5783
        %v5894 = vmul.f32 %v5446, %v5785
        %v5895 = vmul.f32 %v5447, %v5787
        %v5896 = vmul.f32 %v5448, %v5789
        %v5897 = vmul.f32 %v5449, %v5791
        %v5898 = vmul.f32 %v5450, %v5793
        %v5899 = vmul.f32 %v5451, %v5795
        %v5900 = vmul.f32 %v5452, %v5797
        %v5901 = vmul.f32 %v5453, %v5799
        %v5902 = vmul.f32 %v5454, %v5801
        %v5903 = vmul.f32 %v5455, %v5803
        %v5904 = vmul.f32 %v5456, %v5805
        %v5905 = vmul.f32 %v5457, %v5807
        %v5906 = vmul.f32 %v5458, %v5809
        %v5907 = vmul.f32 %v5459, %v5811
        %v5908 = vmul.f32 %v5460, %v5813
        %v5909 = vmul.f32 %v5461, %v5815
        %v5910 = vmul.f32 %v5462, %v5817
        %v5911 = vmul.f32 %v5463, %v5819
        %v5912 = vmul.f32 %v5464, %v5821
        %v5913 = vmul.f32 %v5465, %v5823
        %v5914 = vmul.f32 %v5466, %v5825
        %v5915 = vmul.f32 %v5467, %v5827
        %v5916 = vmul.f32 %v5468, %v5829
        %v5917 = vmul.f32 %v5469, %v5831
        %v5918 = vmul.f32 %v5470, %v5833
        %v5919 = vmul.f32 %v5471, %v5835
        %v5920 = vmul.f32 %v5472, %v5837
        %v5921 = vmul.f32 %v5473, %v5839
        %v5922 = vmul.f32 %v5474, %v5841
        %v5923 = vmul.f32 %v5475, %v5843
        %v5924 = vmul.f32 %v5476, %v5845
        %v5925 = vmul.f32 %v5477, %v5847
        %v5926 = vmul.f32 %v5478, %v5849
        %v5927 = vmul.f32 %v5479, %v5851
        %v5928 = vmul.f32 %v5480, %v5853
        %v5929 = vmul.f32 %v5481, %v5855
        %v5930 = vmul.f32 %v5482, %v5857
        %v5931 = vmul.f32 %v5483, %v5859
        %v5932 = vmul.f32 %v5484, %v5861
        %v5933 = vmul.f32 %v5485, %v5863
        %v5934 = vmul.f32 %v5486, %v5865
        %v5935 = vmul.f32 %v5487, %v5867
        %v5936 = vmul.f32 %v5488, %v5869
        %v5937 = vmul.f32 %v5489, %v5871
        %v5938 = vmul.f32 %v5490, %v5873
        %v5939 = vmul.f32 %v5491, %v5875
        %v5940 = vadd.f32 %v5876, %v5878
        %v5941 = vadd.f32 %v5940, %v5880
        %v5942 = vadd.f32 %v5941, %v5882
        %v5943 = vadd.f32 %v5942, %v5884
        %v5944 = vadd.f32 %v5943, %v5886
        %v5945 = vadd.f32 %v5944, %v5888
        %v5946 = vadd.f32 %v5945, %v5890
        %v5947 = vadd.f32 %v5946, %v5892
        %v5948 = vadd.f32 %v5947, %v5894
        %v5949 = vadd.f32 %v5948, %v5896
        %v5950 = vadd.f32 %v5949, %v5898
        %v5951 = vadd.f32 %v5950, %v5900
        %v5952 = vadd.f32 %v5951, %v5902
        %v5953 = vadd.f32 %v5952, %v5904
        %v5954 = vadd.f32 %v5953, %v5906
        %v5955 = vadd.f32 %v5954, %v5908
        %v5956 = vadd.f32 %v5955, %v5910
        %v5957 = vadd.f32 %v5956, %v5912
        %v5958 = vadd.f32 %v5957, %v5914
        %v5959 = vadd.f32 %v5958, %v5916
        %v5960 = vadd.f32 %v5959, %v5918
        %v5961 = vadd.f32 %v5960, %v5920
        %v5962 = vadd.f32 %v5961, %v5922
        %v5963 = vadd.f32 %v5962, %v5924
        %v5964 = vadd.f32 %v5963, %v5926
        %v5965 = vadd.f32 %v5964, %v5928
        %v5966 = vadd.f32 %v5965, %v5930
        %v5967 = vadd.f32 %v5966, %v5932
        %v5968 = vadd.f32 %v5967, %v5934
        %v5969 = vadd.f32 %v5968, %v5936
        %v5970 = vadd.f32 %v5969, %v5938
        %v5971 = vrot.slane %v5970, 4
        %v5972 = vadd.f32 %v5970, %v5971
        %v5973 = vrot.slane %v5972, 2
        %v5974 = vadd.f32 %v5972, %v5973
        %v5975 = vrot.slane %v5974, 1
        %v5976 = vadd.f32 %v5974, %v5975
        %v5977 = vadd.f32 %v5877, %v5879
        %v5978 = vadd.f32 %v5977, %v5881
        %v5979 = vadd.f32 %v5978, %v5883
        %v5980 = vadd.f32 %v5979, %v5885
        %v5981 = vadd.f32 %v5980, %v5887
        %v5982 = vadd.f32 %v5981, %v5889
        %v5983 = vadd.f32 %v5982, %v5891
        %v5984 = vadd.f32 %v5983, %v5893
        %v5985 = vadd.f32 %v5984, %v5895
        %v5986 = vadd.f32 %v5985, %v5897
        %v5987 = vadd.f32 %v5986, %v5899
        %v5988 = vadd.f32 %v5987, %v5901
        %v5989 = vadd.f32 %v5988, %v5903
        %v5990 = vadd.f32 %v5989, %v5905
        %v5991 = vadd.f32 %v5990, %v5907
        %v5992 = vadd.f32 %v5991, %v5909
        %v5993 = vadd.f32 %v5992, %v5911
        %v5994 = vadd.f32 %v5993, %v5913
        %v5995 = vadd.f32 %v5994, %v5915
        %v5996 = vadd.f32 %v5995, %v5917
        %v5997 = vadd.f32 %v5996, %v5919
        %v5998 = vadd.f32 %v5997, %v5921
        %v5999 = vadd.f32 %v5998, %v5923
        %v6000 = vadd.f32 %v5999, %v5925
        %v6001 = vadd.f32 %v6000, %v5927
        %v6002 = vadd.f32 %v6001, %v5929
        %v6003 = vadd.f32 %v6002, %v5931
        %v6004 = vadd.f32 %v6003, %v5933
        %v6005 = vadd.f32 %v6004, %v5935
        %v6006 = vadd.f32 %v6005, %v5937
        %v6007 = vadd.f32 %v6006, %v5939
        %v6008 = vrot.slane %v6007, 4
        %v6009 = vadd.f32 %v6007, %v6008
        %v6010 = vrot.slane %v6009, 2
        %v6011 = vadd.f32 %v6009, %v6010
        %v6012 = vrot.slane %v6011, 1
        %v6013 = vadd.f32 %v6011, %v6012
        %v6014 = vrcp.pop 256.0
        %v6015 = vmul.f32 %v5976, %v6014
        %v6016 = vmul.f32 %v6013, %v6014
        %v6017 = vld [vmem:[%s3] sm:$0xff]
        %v6018 = vld [vmem:[%s3 + $0x8] sm:$0xff]
        %v6019 = vld [vmem:[%s3 + $0x10] sm:$0xff]
        %v6020 = vld [vmem:[%s3 + $0x18] sm:$0xff]
        %v6021 = vld [vmem:[%s3 + $0x20] sm:$0xff]
        %v6022 = vld [vmem:[%s3 + $0x28] sm:$0xff]
        %v6023 = vld [vmem:[%s3 + $0x30] sm:$0xff]
        %v6024 = vld [vmem:[%s3 + $0x38] sm:$0xff]
        %v6025 = vld [vmem:[%s3 + $0x40] sm:$0xff]
        %v6026 = vld [vmem:[%s3 + $0x48] sm:$0xff]
        %v6027 = vld [vmem:[%s3 + $0x50] sm:$0xff]
        %v6028 = vld [vmem:[%s3 + $0x58] sm:$0xff]
        %v6029 = vld [vmem:[%s3 + $0x60] sm:$0xff]
        %v6030 = vld [vmem:[%s3 + $0x68] sm:$0xff]
        %v6031 = vld [vmem:[%s3 + $0x70] sm:$0xff]
        %v6032 = vld [vmem:[%s3 + $0x78] sm:$0xff]
        %v6033 = vld [vmem:[%s3 + $0x80] sm:$0xff]
        %v6034 = vld [vmem:[%s3 + $0x88] sm:$0xff]
        %v6035 = vld [vmem:[%s3 + $0x90] sm:$0xff]
        %v6036 = vld [vmem:[%s3 + $0x98] sm:$0xff]
        %v6037 = vld [vmem:[%s3 + $0xa0] sm:$0xff]
        %v6038 = vld [vmem:[%s3 + $0xa8] sm:$0xff]
        %v6039 = vld [vmem:[%s3 + $0xb0] sm:$0xff]
        %v6040 = vld [vmem:[%s3 + $0xb8] sm:$0xff]
        %v6041 = vld [vmem:[%s3 + $0xc0] sm:$0xff]
        %v6042 = vld [vmem:[%s3 + $0xc8] sm:$0xff]
        %v6043 = vld [vmem:[%s3 + $0xd0] sm:$0xff]
        %v6044 = vld [vmem:[%s3 + $0xd8] sm:$0xff]
        %v6045 = vld [vmem:[%s3 + $0xe0] sm:$0xff]
        %v6046 = vld [vmem:[%s3 + $0xe8] sm:$0xff]
        %v6047 = vld [vmem:[%s3 + $0xf0] sm:$0xff]
        %v6048 = vld [vmem:[%s3 + $0xf8] sm:$0xff]
        %v6049 = vld [vmem:[%s4] sm:$0x1]
        %6050 = vmatprep.subr.mxu0 0.0
        %6051 = vmatpush1.msra.mxu0 %v6032
        %6052 = vmatprep.subr.mxu0 0.0
        %6053 = vmatpush1.msra.mxu0 %v6031
        %6054 = vmatprep.subr.mxu0 0.0
        %6055 = vmatpush1.msra.mxu0 %v6030
        %6056 = vmatprep.subr.mxu0 0.0
        %6057 = vmatpush1.msra.mxu0 %v6029
        %6058 = vmatprep.subr.mxu0 0.0
        %6059 = vmatpush1.msra.mxu0 %v6028
        %6060 = vmatprep.subr.mxu0 0.0
        %6061 = vmatpush1.msra.mxu0 %v6027
        %6062 = vmatprep.subr.mxu0 0.0
        %6063 = vmatpush1.msra.mxu0 %v6026
        %6064 = vmatprep.subr.mxu0 0.0
        %6065 = vmatpush1.msra.mxu0 %v6025
        %6066 = vmatprep.subr.mxu0 0.0
        %6067 = vmatpush1.msra.mxu0 %v6024
        %6068 = vmatprep.subr.mxu0 0.0
        %6069 = vmatpush1.msra.mxu0 %v6023
        %6070 = vmatprep.subr.mxu0 0.0
        %6071 = vmatpush1.msra.mxu0 %v6022
        %6072 = vmatprep.subr.mxu0 0.0
        %6073 = vmatpush1.msra.mxu0 %v6021
        %6074 = vmatprep.subr.mxu0 0.0
        %6075 = vmatpush1.msra.mxu0 %v6020
        %6076 = vmatprep.subr.mxu0 0.0
        %6077 = vmatpush1.msra.mxu0 %v6019
        %6078 = vmatprep.subr.mxu0 0.0
        %6079 = vmatpush1.msra.mxu0 %v6018
        %6080 = vmatprep.subr.mxu0 0.0
        %6081 = vmatpush1.msra.mxu0 %v6017
        %6082 = vmatprep.subr.mxu0 0.0
        %6083 = vmatpush2.msra.mxu0 %v6048
        %6084 = vmatprep.subr.mxu0 0.0
        %6085 = vmatpush2.msra.mxu0 %v6047
        %6086 = vmatprep.subr.mxu0 0.0
        %6087 = vmatpush2.msra.mxu0 %v6046
        %6088 = vmatprep.subr.mxu0 0.0
        %6089 = vmatpush2.msra.mxu0 %v6045
        %6090 = vmatprep.subr.mxu0 0.0
        %6091 = vmatpush2.msra.mxu0 %v6044
        %6092 = vmatprep.subr.mxu0 0.0
        %6093 = vmatpush2.msra.mxu0 %v6043
        %6094 = vmatprep.subr.mxu0 0.0
        %6095 = vmatpush2.msra.mxu0 %v6042
        %6096 = vmatprep.subr.mxu0 0.0
        %6097 = vmatpush2.msra.mxu0 %v6041
        %6098 = vmatprep.subr.mxu0 0.0
        %6099 = vmatpush2.msra.mxu0 %v6040
        %6100 = vmatprep.subr.mxu0 0.0
        %6101 = vmatpush2.msra.mxu0 %v6039
        %6102 = vmatprep.subr.mxu0 0.0
        %6103 = vmatpush2.msra.mxu0 %v6038
        %6104 = vmatprep.subr.mxu0 0.0
        %6105 = vmatpush2.msra.mxu0 %v6037
        %6106 = vmatprep.subr.mxu0 0.0
        %6107 = vmatpush2.msra.mxu0 %v6036
        %6108 = vmatprep.subr.mxu0 0.0
        %6109 = vmatpush2.msra.mxu0 %v6035
        %6110 = vmatprep.subr.mxu0 0.0
        %6111 = vmatpush2.msra.mxu0 %v6034
        %6112 = vmatprep.subr.mxu0 0.0
        %6113 = vmatpush2.msra.mxu0 %v6033
        %6114 = vmatprep.mubr.f32.mxu0 %v6016
        %6115 = vmatmul.mubr.f32.gmra.mxu0 %v6015
        %v6116 = vpop.f32.mrf.mxu0
        %v6117 = vadd.f32 %v6049, %v6116
        %v6118 = vpop.f32.mrf.mxu0
        %6119 = vdwg.mxu0
        %v6120 = vsub.f32 0.0, %v6117
        %v6121 = vmul.f32 %v6120, 1.442695
        %v6122 = vpow.pop %v6121
        %v6123 = vadd.f32 %v6122, 1.0
        %v6124 = vrcp.pop %v6123
        %v6125 = vmul.f32 1.0, %v6124
        %v6126 = vmul.f32 %v6117, %v6125
        %v6127 = vld [vmem:[%s5] sm:$0xff]
        %v6128 = vld [vmem:[%s5 + $0x8] sm:$0xff]
        %v6129 = vld [vmem:[%s5 + $0x10] sm:$0xff]
        %v6130 = vld [vmem:[%s5 + $0x18] sm:$0xff]
        %v6131 = vld [vmem:[%s6] sm:$0x3]
        %v6133 = vlaneseq
        %v6134 = vshrl.u32 %v6133, 7
        %v6135 = vsub.s32 0, %v6134
        %v6136 = vrot.slane %v6131, %v6135
        %v6137 = vlaneseq
        %v6138 = vshrl.u32 %v6137, 7
        %v6139 = vsub.s32 1, %v6138
        %v6140 = vrot.slane %v6131, %v6139
        %vm6143 = vcmask 130048
        %v6145 = vsel %vm6143, %v6126, 0
        %6147 = vmatprep.subr.mxu0 0.0
        %6148 = vmatpush1.msra.mxu0 0.0
        %6149 = vmatprep.subr.mxu0 0.0
        %6150 = vmatpush1.msra.mxu0 0.0
        %6151 = vmatprep.subr.mxu0 0.0
        %6152 = vmatpush1.msra.mxu0 0.0
        %6153 = vmatprep.subr.mxu0 0.0
        %6154 = vmatpush1.msra.mxu0 0.0
        %6155 = vmatprep.subr.mxu0 0.0
        %6156 = vmatpush1.msra.mxu0 0.0
        %6157 = vmatprep.subr.mxu0 0.0
        %6158 = vmatpush1.msra.mxu0 0.0
        %6159 = vmatprep.subr.mxu0 0.0
        %6160 = vmatpush1.msra.mxu0 0.0
        %6161 = vmatprep.subr.mxu0 0.0
        %6162 = vmatpush1.msra.mxu0 0.0
        %6163 = vmatprep.subr.mxu0 0.0
        %6164 = vmatpush1.msra.mxu0 0.0
        %6165 = vmatprep.subr.mxu0 0.0
        %6166 = vmatpush1.msra.mxu0 0.0
        %6167 = vmatprep.subr.mxu0 0.0
        %6168 = vmatpush1.msra.mxu0 0.0
        %6169 = vmatprep.subr.mxu0 0.0
        %6170 = vmatpush1.msra.mxu0 0.0
        %6171 = vmatprep.subr.mxu0 0.0
        %6172 = vmatpush1.msra.mxu0 0.0
        %6173 = vmatprep.subr.mxu0 0.0
        %6174 = vmatpush1.msra.mxu0 0.0
        %6175 = vmatprep.subr.mxu0 %v6130
        %6176 = vmatpush1.msra.mxu0 %v6129
        %6177 = vmatprep.subr.mxu0 %v6128
        %6178 = vmatpush1.msra.mxu0 %v6127
        %6179 = vmatprep.subr.mxu0 0.0
        %6180 = vmatpush2.msra.mxu0 0.0
        %6181 = vmatprep.subr.mxu0 0.0
        %6182 = vmatpush2.msra.mxu0 0.0
        %6183 = vmatprep.subr.mxu0 0.0
        %6184 = vmatpush2.msra.mxu0 0.0
        %6185 = vmatprep.subr.mxu0 0.0
        %6186 = vmatpush2.msra.mxu0 0.0
        %6187 = vmatprep.subr.mxu0 0.0
        %6188 = vmatpush2.msra.mxu0 0.0
        %6189 = vmatprep.subr.mxu0 0.0
        %6190 = vmatpush2.msra.mxu0 0.0
        %6191 = vmatprep.subr.mxu0 0.0
        %6192 = vmatpush2.msra.mxu0 0.0
        %6193 = vmatprep.subr.mxu0 0.0
        %6194 = vmatpush2.msra.mxu0 0.0
        %6195 = vmatprep.subr.mxu0 0.0
        %6196 = vmatpush2.msra.mxu0 0.0
        %6197 = vmatprep.subr.mxu0 0.0
        %6198 = vmatpush2.msra.mxu0 0.0
        %6199 = vmatprep.subr.mxu0 0.0
        %6200 = vmatpush2.msra.mxu0 0.0
        %6201 = vmatprep.subr.mxu0 0.0
        %6202 = vmatpush2.msra.mxu0 0.0
        %6203 = vmatprep.subr.mxu0 0.0
        %6204 = vmatpush2.msra.mxu0 0.0
        %6205 = vmatprep.subr.mxu0 0.0
        %6206 = vmatpush2.msra.mxu0 0.0
        %6207 = vmatprep.subr.mxu0 0.0
        %6208 = vmatpush2.msra.mxu0 0.0
        %6209 = vmatprep.subr.mxu0 0.0
        %6210 = vmatpush2.msra.mxu0 0.0
        %6211 = vmatprep.mubr.f32.mxu0 0.0
        %6212 = vmatmul.mubr.f32.gmra.mxu0 %v6145
        %v6213 = vpop.f32.mrf.mxu0
        %v6214 = vadd.f32 %v6136, %v6213
        %v6215 = vpop.f32.mrf.mxu0
        %v6216 = vadd.f32 %v6140, %v6215
        %6217 = vdwg.mxu0
        %v6218 = vsub.f32 0.0, %v6214
        %v6219 = vsub.f32 0.0, %v6216
        %v6220 = vmul.f32 %v6218, 1.442695
        %v6221 = vpow.pop %v6220
        %v6222 = vmul.f32 %v6219, 1.442695
        %v6223 = vpow.pop %v6222
        %v6224 = vadd.f32 %v6221, 1.0
        %v6225 = vadd.f32 %v6223, 1.0
        %v6226 = vrcp.pop %v6224
        %v6227 = vmul.f32 1.0, %v6226
        %v6228 = vrcp.pop %v6225
        %v6229 = vmul.f32 1.0, %v6228
        %v6230 = vlaneseq
        %v6231 = vshrl.u32 %v6230, 7
        %v6232 = vsub.s32 0, %v6231
        %v6233 = vrot.slane %v6227, %v6232
        %v6234 = vlaneseq
        %v6235 = vshrl.u32 %v6234, 7
        %v6236 = vsub.s32 0, %v6235
        %v6237 = vrot.slane %v6229, %v6236
        %v6238 = vmul.f32 %v5876, %v6233
        %v6239 = vmul.f32 %v5877, %v6237
        %v6240 = vmul.f32 %v5878, %v6233
        %v6241 = vmul.f32 %v5879, %v6237
        %v6242 = vmul.f32 %v5880, %v6233
        %v6243 = vmul.f32 %v5881, %v6237
        %v6244 = vmul.f32 %v5882, %v6233
        %v6245 = vmul.f32 %v5883, %v6237
        %v6246 = vmul.f32 %v5884, %v6233
        %v6247 = vmul.f32 %v5885, %v6237
        %v6248 = vmul.f32 %v5886, %v6233
        %v6249 = vmul.f32 %v5887, %v6237
        %v6250 = vmul.f32 %v5888, %v6233
        %v6251 = vmul.f32 %v5889, %v6237
        %v6252 = vmul.f32 %v5890, %v6233
        %v6253 = vmul.f32 %v5891, %v6237
        %v6254 = vmul.f32 %v5892, %v6233
        %v6255 = vmul.f32 %v5893, %v6237
        %v6256 = vmul.f32 %v5894, %v6233
        %v6257 = vmul.f32 %v5895, %v6237
        %v6258 = vmul.f32 %v5896, %v6233
        %v6259 = vmul.f32 %v5897, %v6237
        %v6260 = vmul.f32 %v5898, %v6233
        %v6261 = vmul.f32 %v5899, %v6237
        %v6262 = vmul.f32 %v5900, %v6233
        %v6263 = vmul.f32 %v5901, %v6237
        %v6264 = vmul.f32 %v5902, %v6233
        %v6265 = vmul.f32 %v5903, %v6237
        %v6266 = vmul.f32 %v5904, %v6233
        %v6267 = vmul.f32 %v5905, %v6237
        %v6268 = vmul.f32 %v5906, %v6233
        %v6269 = vmul.f32 %v5907, %v6237
        %v6270 = vmul.f32 %v5908, %v6233
        %v6271 = vmul.f32 %v5909, %v6237
        %v6272 = vmul.f32 %v5910, %v6233
        %v6273 = vmul.f32 %v5911, %v6237
        %v6274 = vmul.f32 %v5912, %v6233
        %v6275 = vmul.f32 %v5913, %v6237
        %v6276 = vmul.f32 %v5914, %v6233
        %v6277 = vmul.f32 %v5915, %v6237
        %v6278 = vmul.f32 %v5916, %v6233
        %v6279 = vmul.f32 %v5917, %v6237
        %v6280 = vmul.f32 %v5918, %v6233
        %v6281 = vmul.f32 %v5919, %v6237
        %v6282 = vmul.f32 %v5920, %v6233
        %v6283 = vmul.f32 %v5921, %v6237
        %v6284 = vmul.f32 %v5922, %v6233
        %v6285 = vmul.f32 %v5923, %v6237
        %v6286 = vmul.f32 %v5924, %v6233
        %v6287 = vmul.f32 %v5925, %v6237
        %v6288 = vmul.f32 %v5926, %v6233
        %v6289 = vmul.f32 %v5927, %v6237
        %v6290 = vmul.f32 %v5928, %v6233
        %v6291 = vmul.f32 %v5929, %v6237
        %v6292 = vmul.f32 %v5930, %v6233
        %v6293 = vmul.f32 %v5931, %v6237
        %v6294 = vmul.f32 %v5932, %v6233
        %v6295 = vmul.f32 %v5933, %v6237
        %v6296 = vmul.f32 %v5934, %v6233
        %v6297 = vmul.f32 %v5935, %v6237
        %v6298 = vmul.f32 %v5936, %v6233
        %v6299 = vmul.f32 %v5937, %v6237
        %v6300 = vmul.f32 %v5938, %v6233
        %v6301 = vmul.f32 %v5939, %v6237
        %v6302 = vpack.c.bf16 %v6240, %v6238
        %v6303 = vpack.c.bf16 %v6241, %v6239
        %v6304 = vpack.c.bf16 %v6244, %v6242
        %v6305 = vpack.c.bf16 %v6245, %v6243
        %v6306 = vpack.c.bf16 %v6248, %v6246
        %v6307 = vpack.c.bf16 %v6249, %v6247
        %v6308 = vpack.c.bf16 %v6252, %v6250
        %v6309 = vpack.c.bf16 %v6253, %v6251
        %v6310 = vpack.c.bf16 %v6256, %v6254
        %v6311 = vpack.c.bf16 %v6257, %v6255
        %v6312 = vpack.c.bf16 %v6260, %v6258
        %v6313 = vpack.c.bf16 %v6261, %v6259
        %v6314 = vpack.c.bf16 %v6264, %v6262
        %v6315 = vpack.c.bf16 %v6265, %v6263
        %v6316 = vpack.c.bf16 %v6268, %v6266
        %v6317 = vpack.c.bf16 %v6269, %v6267
        %v6318 = vpack.c.bf16 %v6272, %v6270
        %v6319 = vpack.c.bf16 %v6273, %v6271
        %v6320 = vpack.c.bf16 %v6276, %v6274
        %v6321 = vpack.c.bf16 %v6277, %v6275
        %v6322 = vpack.c.bf16 %v6280, %v6278
        %v6323 = vpack.c.bf16 %v6281, %v6279
        %v6324 = vpack.c.bf16 %v6284, %v6282
        %v6325 = vpack.c.bf16 %v6285, %v6283
        %v6326 = vpack.c.bf16 %v6288, %v6286
        %v6327 = vpack.c.bf16 %v6289, %v6287
        %v6328 = vpack.c.bf16 %v6292, %v6290
        %v6329 = vpack.c.bf16 %v6293, %v6291
        %v6330 = vpack.c.bf16 %v6296, %v6294
        %v6331 = vpack.c.bf16 %v6297, %v6295
        %v6332 = vpack.c.bf16 %v6300, %v6298
        %v6333 = vpack.c.bf16 %v6301, %v6299
        %v6334 = vld [vmem:[%s7] sm:$0xf]
        %v6335 = vld [vmem:[%s7 + $0x4] sm:$0xf]
        %v6336 = vld [vmem:[%s7 + $0x8] sm:$0xf]
        %v6337 = vld [vmem:[%s7 + $0xc] sm:$0xf]
        %v6338 = vld [vmem:[%s7 + $0x10] sm:$0xf]
        %v6339 = vld [vmem:[%s7 + $0x14] sm:$0xf]
        %v6340 = vld [vmem:[%s7 + $0x18] sm:$0xf]
        %v6341 = vld [vmem:[%s7 + $0x1c] sm:$0xf]
        %v6342 = vld [vmem:[%s7 + $0x20] sm:$0xf]
        %v6343 = vld [vmem:[%s7 + $0x24] sm:$0xf]
        %v6344 = vld [vmem:[%s7 + $0x28] sm:$0xf]
        %v6345 = vld [vmem:[%s7 + $0x2c] sm:$0xf]
        %v6346 = vld [vmem:[%s7 + $0x30] sm:$0xf]
        %v6347 = vld [vmem:[%s7 + $0x34] sm:$0xf]
        %v6348 = vld [vmem:[%s7 + $0x38] sm:$0xf]
        %v6349 = vld [vmem:[%s7 + $0x3c] sm:$0xf]
        %v6350 = vld [vmem:[%s7 + $0x40] sm:$0xf]
        %v6351 = vld [vmem:[%s7 + $0x44] sm:$0xf]
        %v6352 = vld [vmem:[%s7 + $0x48] sm:$0xf]
        %v6353 = vld [vmem:[%s7 + $0x4c] sm:$0xf]
        %v6354 = vld [vmem:[%s7 + $0x50] sm:$0xf]
        %v6355 = vld [vmem:[%s7 + $0x54] sm:$0xf]
        %v6356 = vld [vmem:[%s7 + $0x58] sm:$0xf]
        %v6357 = vld [vmem:[%s7 + $0x5c] sm:$0xf]
        %v6358 = vld [vmem:[%s7 + $0x60] sm:$0xf]
        %v6359 = vld [vmem:[%s7 + $0x64] sm:$0xf]
        %v6360 = vld [vmem:[%s7 + $0x68] sm:$0xf]
        %v6361 = vld [vmem:[%s7 + $0x6c] sm:$0xf]
        %v6362 = vld [vmem:[%s7 + $0x70] sm:$0xf]
        %v6363 = vld [vmem:[%s7 + $0x74] sm:$0xf]
        %v6364 = vld [vmem:[%s7 + $0x78] sm:$0xf]
        %v6365 = vld [vmem:[%s7 + $0x7c] sm:$0xf]
        %v6398 = vunpack.c.l.b16 %v6334
        %v6399 = vunpack.c.l.b16 %v6335
        %v6400 = vunpack.c.l.b16 %v6336
        %v6401 = vunpack.c.l.b16 %v6337
        %v6402 = vunpack.c.l.b16 %v6338
        %v6403 = vunpack.c.l.b16 %v6339
        %v6404 = vunpack.c.l.b16 %v6340
        %v6405 = vunpack.c.l.b16 %v6341
        %v6406 = vunpack.c.l.b16 %v6342
        %v6407 = vunpack.c.l.b16 %v6343
        %v6408 = vunpack.c.l.b16 %v6344
        %v6409 = vunpack.c.l.b16 %v6345
        %v6410 = vunpack.c.l.b16 %v6346
        %v6411 = vunpack.c.l.b16 %v6347
        %v6412 = vunpack.c.l.b16 %v6348
        %v6413 = vunpack.c.l.b16 %v6349
        %v6414 = vunpack.c.l.b16 %v6350
        %v6415 = vunpack.c.l.b16 %v6351
        %v6416 = vunpack.c.l.b16 %v6352
        %v6417 = vunpack.c.l.b16 %v6353
        %v6418 = vunpack.c.l.b16 %v6354
        %v6419 = vunpack.c.l.b16 %v6355
        %v6420 = vunpack.c.l.b16 %v6356
        %v6421 = vunpack.c.l.b16 %v6357
        %v6422 = vunpack.c.l.b16 %v6358
        %v6423 = vunpack.c.l.b16 %v6359
        %v6424 = vunpack.c.l.b16 %v6360
        %v6425 = vunpack.c.l.b16 %v6361
        %v6426 = vunpack.c.l.b16 %v6362
        %v6427 = vunpack.c.l.b16 %v6363
        %v6428 = vunpack.c.l.b16 %v6364
        %v6429 = vunpack.c.l.b16 %v6365
        %v6430 = vpack.c.b16 %v6399, %v6398
        %v6431 = vpack.c.b16 %v6401, %v6400
        %v6432 = vpack.c.b16 %v6403, %v6402
        %v6433 = vpack.c.b16 %v6405, %v6404
        %v6434 = vpack.c.b16 %v6407, %v6406
        %v6435 = vpack.c.b16 %v6409, %v6408
        %v6436 = vpack.c.b16 %v6411, %v6410
        %v6437 = vpack.c.b16 %v6413, %v6412
        %v6438 = vpack.c.b16 %v6415, %v6414
        %v6439 = vpack.c.b16 %v6417, %v6416
        %v6440 = vpack.c.b16 %v6419, %v6418
        %v6441 = vpack.c.b16 %v6421, %v6420
        %v6442 = vpack.c.b16 %v6423, %v6422
        %v6443 = vpack.c.b16 %v6425, %v6424
        %v6444 = vpack.c.b16 %v6427, %v6426
        %v6445 = vpack.c.b16 %v6429, %v6428
        %6462 = vmatprep.subr.bf16.mxu0 0
        %6463 = vmatpush1.bf16.msra.mxu0 %v6437
        %6464 = vmatprep.subr.bf16.mxu0 0
        %6465 = vmatpush1.bf16.msra.mxu0 %v6436
        %6466 = vmatprep.subr.bf16.mxu0 0
        %6467 = vmatpush1.bf16.msra.mxu0 %v6435
        %6468 = vmatprep.subr.bf16.mxu0 0
        %6469 = vmatpush1.bf16.msra.mxu0 %v6434
        %6470 = vmatprep.subr.bf16.mxu0 0
        %6471 = vmatpush1.bf16.msra.mxu0 %v6433
        %6472 = vmatprep.subr.bf16.mxu0 0
        %6473 = vmatpush1.bf16.msra.mxu0 %v6432
        %6474 = vmatprep.subr.bf16.mxu0 0
        %6475 = vmatpush1.bf16.msra.mxu0 %v6431
        %6476 = vmatprep.subr.bf16.mxu0 0
        %6477 = vmatpush1.bf16.msra.mxu0 %v6430
        %6478 = vmatprep.subr.bf16.mxu0 0
        %6479 = vmatpush2.bf16.msra.mxu0 %v6445
        %6480 = vmatprep.subr.bf16.mxu0 0
        %6481 = vmatpush2.bf16.msra.mxu0 %v6444
        %6482 = vmatprep.subr.bf16.mxu0 0
        %6483 = vmatpush2.bf16.msra.mxu0 %v6443
        %6484 = vmatprep.subr.bf16.mxu0 0
        %6485 = vmatpush2.bf16.msra.mxu0 %v6442
        %6486 = vmatprep.subr.bf16.mxu0 0
        %6487 = vmatpush2.bf16.msra.mxu0 %v6441
        %6488 = vmatprep.subr.bf16.mxu0 0
        %6489 = vmatpush2.bf16.msra.mxu0 %v6440
        %6490 = vmatprep.subr.bf16.mxu0 0
        %6491 = vmatpush2.bf16.msra.mxu0 %v6439
        %6492 = vmatprep.subr.bf16.mxu0 0
        %6493 = vmatpush2.bf16.msra.mxu0 %v6438
        %6494 = vmatprep.mubr.bf16.mxu0 %v6303
        %6495 = vmatmul.mubr.bf16.gmra.mxu0 %v6302
        %v6496 = vpop.f32.mrf.mxu0
        %v6497 = vadd.f32 %v325, %v6496
        %v6498 = vpop.f32.mrf.mxu0
        %v6499 = vpop.f32.mrf.mxu0
        %v6500 = vadd.f32 %v326, %v6499
        %v6501 = vpop.f32.mrf.mxu0
        %6502 = vmatprep.mubr.bf16.mxu0 %v6305
        %6503 = vmatmul.mubr.bf16.gmra.mxu0 %v6304
        %v6504 = vpop.f32.mrf.mxu0
        %v6505 = vadd.f32 %v327, %v6504
        %v6506 = vpop.f32.mrf.mxu0
        %v6507 = vpop.f32.mrf.mxu0
        %v6508 = vadd.f32 %v328, %v6507
        %v6509 = vpop.f32.mrf.mxu0
        %6510 = vmatprep.mubr.bf16.mxu0 %v6307
        %6511 = vmatmul.mubr.bf16.gmra.mxu0 %v6306
        %v6512 = vpop.f32.mrf.mxu0
        %v6513 = vadd.f32 %v329, %v6512
        %v6514 = vpop.f32.mrf.mxu0
        %v6515 = vpop.f32.mrf.mxu0
        %v6516 = vadd.f32 %v330, %v6515
        %v6517 = vpop.f32.mrf.mxu0
        %6518 = vmatprep.mubr.bf16.mxu0 %v6309
        %6519 = vmatmul.mubr.bf16.gmra.mxu0 %v6308
        %v6520 = vpop.f32.mrf.mxu0
        %v6521 = vadd.f32 %v331, %v6520
        %v6522 = vpop.f32.mrf.mxu0
        %v6523 = vpop.f32.mrf.mxu0
        %v6524 = vadd.f32 %v332, %v6523
        %v6525 = vpop.f32.mrf.mxu0
        %6526 = vmatprep.mubr.bf16.mxu0 %v6311
        %6527 = vmatmul.mubr.bf16.gmra.mxu0 %v6310
        %v6528 = vpop.f32.mrf.mxu0
        %v6529 = vadd.f32 %v333, %v6528
        %v6530 = vpop.f32.mrf.mxu0
        %v6531 = vpop.f32.mrf.mxu0
        %v6532 = vadd.f32 %v334, %v6531
        %v6533 = vpop.f32.mrf.mxu0
        %6534 = vmatprep.mubr.bf16.mxu0 %v6313
        %6535 = vmatmul.mubr.bf16.gmra.mxu0 %v6312
        %v6536 = vpop.f32.mrf.mxu0
        %v6537 = vadd.f32 %v335, %v6536
        %v6538 = vpop.f32.mrf.mxu0
        %v6539 = vpop.f32.mrf.mxu0
        %v6540 = vadd.f32 %v336, %v6539
        %v6541 = vpop.f32.mrf.mxu0
        %6542 = vmatprep.mubr.bf16.mxu0 %v6315
        %6543 = vmatmul.mubr.bf16.gmra.mxu0 %v6314
        %v6544 = vpop.f32.mrf.mxu0
        %v6545 = vadd.f32 %v337, %v6544
        %v6546 = vpop.f32.mrf.mxu0
        %v6547 = vpop.f32.mrf.mxu0
        %v6548 = vadd.f32 %v338, %v6547
        %v6549 = vpop.f32.mrf.mxu0
        %6550 = vmatprep.mubr.bf16.mxu0 %v6317
        %6551 = vmatmul.mubr.bf16.gmra.mxu0 %v6316
        %v6552 = vpop.f32.mrf.mxu0
        %v6553 = vadd.f32 %v339, %v6552
        %v6554 = vpop.f32.mrf.mxu0
        %v6555 = vpop.f32.mrf.mxu0
        %v6556 = vadd.f32 %v340, %v6555
        %v6557 = vpop.f32.mrf.mxu0
        %6558 = vmatprep.mubr.bf16.mxu0 %v6319
        %6559 = vmatmul.mubr.bf16.gmra.mxu0 %v6318
        %v6560 = vpop.f32.mrf.mxu0
        %v6561 = vadd.f32 %v341, %v6560
        %v6562 = vpop.f32.mrf.mxu0
        %v6563 = vpop.f32.mrf.mxu0
        %v6564 = vadd.f32 %v342, %v6563
        %v6565 = vpop.f32.mrf.mxu0
        %6566 = vmatprep.mubr.bf16.mxu0 %v6321
        %6567 = vmatmul.mubr.bf16.gmra.mxu0 %v6320
        %v6568 = vpop.f32.mrf.mxu0
        %v6569 = vadd.f32 %v343, %v6568
        %v6570 = vpop.f32.mrf.mxu0
        %v6571 = vpop.f32.mrf.mxu0
        %v6572 = vadd.f32 %v344, %v6571
        %v6573 = vpop.f32.mrf.mxu0
        %6574 = vmatprep.mubr.bf16.mxu0 %v6323
        %6575 = vmatmul.mubr.bf16.gmra.mxu0 %v6322
        %v6576 = vpop.f32.mrf.mxu0
        %v6577 = vadd.f32 %v345, %v6576
        %v6578 = vpop.f32.mrf.mxu0
        %v6579 = vpop.f32.mrf.mxu0
        %v6580 = vadd.f32 %v346, %v6579
        %v6581 = vpop.f32.mrf.mxu0
        %6582 = vmatprep.mubr.bf16.mxu0 %v6325
        %6583 = vmatmul.mubr.bf16.gmra.mxu0 %v6324
        %v6584 = vpop.f32.mrf.mxu0
        %v6585 = vadd.f32 %v347, %v6584
        %v6586 = vpop.f32.mrf.mxu0
        %v6587 = vpop.f32.mrf.mxu0
        %v6588 = vadd.f32 %v348, %v6587
        %v6589 = vpop.f32.mrf.mxu0
        %6590 = vmatprep.mubr.bf16.mxu0 %v6327
        %6591 = vmatmul.mubr.bf16.gmra.mxu0 %v6326
        %v6592 = vpop.f32.mrf.mxu0
        %v6593 = vadd.f32 %v349, %v6592
        %v6594 = vpop.f32.mrf.mxu0
        %v6595 = vpop.f32.mrf.mxu0
        %v6596 = vadd.f32 %v350, %v6595
        %v6597 = vpop.f32.mrf.mxu0
        %6598 = vmatprep.mubr.bf16.mxu0 %v6329
        %6599 = vmatmul.mubr.bf16.gmra.mxu0 %v6328
        %v6600 = vpop.f32.mrf.mxu0
        %v6601 = vadd.f32 %v351, %v6600
        %v6602 = vpop.f32.mrf.mxu0
        %v6603 = vpop.f32.mrf.mxu0
        %v6604 = vadd.f32 %v352, %v6603
        %v6605 = vpop.f32.mrf.mxu0
        %6606 = vmatprep.mubr.bf16.mxu0 %v6331
        %6607 = vmatmul.mubr.bf16.gmra.mxu0 %v6330
        %v6608 = vpop.f32.mrf.mxu0
        %v6609 = vadd.f32 %v353, %v6608
        %v6610 = vpop.f32.mrf.mxu0
        %v6611 = vpop.f32.mrf.mxu0
        %v6612 = vadd.f32 %v354, %v6611
        %v6613 = vpop.f32.mrf.mxu0
        %6614 = vmatprep.mubr.bf16.mxu0 %v6333
        %6615 = vmatmul.mubr.bf16.gmra.mxu0 %v6332
        %v6616 = vpop.f32.mrf.mxu0
        %v6617 = vadd.f32 %v355, %v6616
        %v6618 = vpop.f32.mrf.mxu0
        %v6619 = vpop.f32.mrf.mxu0
        %v6620 = vadd.f32 %v356, %v6619
        %v6621 = vpop.f32.mrf.mxu0
        %6622 = vdwg.mxu0
        %6623 = vst.msk [vmem:[%s323] sm:$0xff] %vm421, %v6497
        %6624 = vst.msk [vmem:[%s323 + $0x8] sm:$0xff] %vm421, %v6500
        %6625 = vst.msk [vmem:[%s323 + $0x10] sm:$0xff] %vm421, %v6505
        %6626 = vst.msk [vmem:[%s323 + $0x18] sm:$0xff] %vm421, %v6508
        %6627 = vst.msk [vmem:[%s323 + $0x20] sm:$0xff] %vm421, %v6513
        %6628 = vst.msk [vmem:[%s323 + $0x28] sm:$0xff] %vm421, %v6516
        %6629 = vst.msk [vmem:[%s323 + $0x30] sm:$0xff] %vm421, %v6521
        %6630 = vst.msk [vmem:[%s323 + $0x38] sm:$0xff] %vm421, %v6524
        %6631 = vst.msk [vmem:[%s323 + $0x40] sm:$0xff] %vm421, %v6529
        %6632 = vst.msk [vmem:[%s323 + $0x48] sm:$0xff] %vm421, %v6532
        %6633 = vst.msk [vmem:[%s323 + $0x50] sm:$0xff] %vm421, %v6537
        %6634 = vst.msk [vmem:[%s323 + $0x58] sm:$0xff] %vm421, %v6540
        %6635 = vst.msk [vmem:[%s323 + $0x60] sm:$0xff] %vm421, %v6545
        %6636 = vst.msk [vmem:[%s323 + $0x68] sm:$0xff] %vm421, %v6548
        %6637 = vst.msk [vmem:[%s323 + $0x70] sm:$0xff] %vm421, %v6553
        %6638 = vst.msk [vmem:[%s323 + $0x78] sm:$0xff] %vm421, %v6556
        %6639 = vst.msk [vmem:[%s323 + $0x80] sm:$0xff] %vm421, %v6561
        %6640 = vst.msk [vmem:[%s323 + $0x88] sm:$0xff] %vm421, %v6564
        %6641 = vst.msk [vmem:[%s323 + $0x90] sm:$0xff] %vm421, %v6569
        %6642 = vst.msk [vmem:[%s323 + $0x98] sm:$0xff] %vm421, %v6572
        %6643 = vst.msk [vmem:[%s323 + $0xa0] sm:$0xff] %vm421, %v6577
        %6644 = vst.msk [vmem:[%s323 + $0xa8] sm:$0xff] %vm421, %v6580
        %6645 = vst.msk [vmem:[%s323 + $0xb0] sm:$0xff] %vm421, %v6585
        %6646 = vst.msk [vmem:[%s323 + $0xb8] sm:$0xff] %vm421, %v6588
        %6647 = vst.msk [vmem:[%s323 + $0xc0] sm:$0xff] %vm421, %v6593
        %6648 = vst.msk [vmem:[%s323 + $0xc8] sm:$0xff] %vm421, %v6596
        %6649 = vst.msk [vmem:[%s323 + $0xd0] sm:$0xff] %vm421, %v6601
        %6650 = vst.msk [vmem:[%s323 + $0xd8] sm:$0xff] %vm421, %v6604
        %6651 = vst.msk [vmem:[%s323 + $0xe0] sm:$0xff] %vm421, %v6609
        %6652 = vst.msk [vmem:[%s323 + $0xe8] sm:$0xff] %vm421, %v6612
        %6653 = vst.msk [vmem:[%s323 + $0xf0] sm:$0xff] %vm421, %v6617
        %6654 = vst.msk [vmem:[%s323 + $0xf8] sm:$0xff] %vm421, %v6620
        %s6655 = sand.u32 %s206, 1
        %s6656 = scalar_lea.sflag [#allocation5], %s6655
        %s6657 = sand.u32 %s206, 1
        %s6658 = smul.addr %s6657, 256
        %s6659 = scalar_lea.vmem [#allocation6], %s6658
        // Predicated region
        $region57: #{tpu_custom_call.1} parent=51 // pred_check
          %p6660 = pneg %p216
        $region58: #{tpu_custom_call.1} parent=51 // pred_check_branch
          %6662 = sbr.rel (%p6660) target = $region60
        $region59: #{tpu_custom_call.1} parent=51 // pred_region
          %s6664 = ssub.s32 4096, 4096
          %6665 = vsyncadd %s6656, %s6664
          %s6666 = smul.addr %s25, 32
          %s6667 = smul.addr %s6666, 128
          %s6668 = scalar_lea.hbm %s8, %s6667
          %s6669 = sshll.u32 %s6659, 4
          %s6670 = int_to_ptr.vmem [resolvable:$true] %s6669
          %6675 = dma.vmem_to_hbm [thread:$0]  %s6670, 4096, %s6668, %s6656, 128, 128, 8
        $region60: #{tpu_custom_call.1} parent=51 // pred_fallthru
          _
      $region52: #{tpu_custom_call.1} parent=5 // pred_fallthru
        _
      %p6676 = scmp.le.s32.totalorder 2, %s20
      // Predicated region
      $region61: #{tpu_custom_call.1} parent=5 // pred_check
        %p6677 = pneg %p6676
      $region62: #{tpu_custom_call.1} parent=5 // pred_check_branch
        %6679 = sbr.rel (%p6677) target = $region64
      $region63: #{tpu_custom_call.1} parent=5 // pred_region
        %s6680 = ssub.s32 %s20, 2
        // Predicated region
        $region65: #{tpu_custom_call.1} parent=63 // pred_check
          %p6681 = pneg %p222
        $region66: #{tpu_custom_call.1} parent=63 // pred_check_branch
          %6683 = sbr.rel (%p6681) target = $region68
        $region67: #{tpu_custom_call.1} parent=63 // pred_region
          %s6684 = sand.u32 %s207, 1
          %s6685 = scalar_lea.sflag [#allocation5], %s6684
          %s6686 = sand.u32 %s207, 1
          %s6687 = smul.addr %s6686, 256
          %s6688 = scalar_lea.vmem [#allocation6], %s6687
          %6689 = dma.done %s6685, 4096
        $region68: #{tpu_custom_call.1} parent=63 // pred_fallthru
          _
      $region64: #{tpu_custom_call.1} parent=5 // pred_fallthru
        _
    $region6: #{tpu_custom_call.1} parent=1 // loop_footer
      %s24 = sadd.s32 1, %s20
    $region7: #{tpu_custom_call.1} parent=1 // loop_footer_branch
      %19 = sbr.rel target = $region3
    $region8: #{tpu_custom_call.1} parent=1 // loop_exit
      _
    %6690 = vsyncpa [#allocation4], 1
    %s6691 = scalar_lea.sflag [#allocation4], 1
    %6692 = vsyncpa %s6691, 1
    %6693 = vsyncpa [#allocation5], 1
    %s6694 = scalar_lea.sflag [#allocation5], 1
    %6695 = vsyncpa %s6694, 1

</llo_original>
